<compile_context>
chip_gen: v6e
topology: v6e:2x2x1
jax: 0.10.0
libtpu: 0.0.40
codegen_flags: <defaults>
</compile_context>

<pallas_src>
import numpy as np
import jax
import jax.numpy as jnp
from jax.experimental import pallas as pl
from jax.experimental.pallas import tpu as pltpu

# ---- model hyper-parameters (small, consistent with the module) ----
B = 2            # batch
S = 8            # sequence length
DIN = 4          # input_size
D = 64           # d_model
H = 4            # nhead
DH = D // H      # head dim = 16
F = 4 * D        # feed-forward = 256
L = 2            # num_layers
HID = 32         # output head hidden width
SCALE = 1.0 / float(np.sqrt(DH))
EPS = 1e-5

# vector-bank row layout (all rows are D=64 wide)
ROW_PE = 0                     # rows [0, S): positional encoding + input bias
ROW_LAYER = S                  # per layer: [bo, b2, g1, be1, g2, be2]
ROW_BP1 = S + 6 * L            # output-head bias (augmented, lane HID holds 1.0)
ROW_WP2 = ROW_BP1 + 1          # output-head second weight row (lane HID holds bp2)
N_ROWS = ((ROW_WP2 + 1 + 7) // 8) * 8


def transformer_kernel(x_ref, w_in_ref, vec_d_ref, w_qkv_ref, b_qkv_ref,
                       w_o_ref, w1_ref, b1_ref, w2_ref, wp1_ref, out_ref):
    f32 = jnp.float32
    bf16 = jnp.bfloat16

    def vrow(r):
        return vec_d_ref[pl.ds(r, 1), :]                     # (1, D)

    def layer_norm(v, g, b):
        mu = jnp.mean(v, axis=-1, keepdims=True)
        var = jnp.mean((v - mu) ** 2, axis=-1, keepdims=True)
        return (v - mu) * jax.lax.rsqrt(var + EPS) * g + b

    x = x_ref[0]                                             # (S, DIN)
    # input projection + (positional encoding + input bias) folded at pack time
    h = jnp.dot(x, w_in_ref[...], preferred_element_type=f32)
    h = h + vec_d_ref[pl.ds(ROW_PE, S), :]                   # (S, D)

    for l in range(L):                                       # static layer loop
        base = l * 3 * H
        rb = ROW_LAYER + 6 * l
        hb = h.astype(bf16)

        # ---- self attention (post-norm encoder layer), per-head weight slabs ----
        attn = None
        for hd in range(H):                                  # static head loop
            iq = base + hd
            ik = base + H + hd
            iv = base + 2 * H + hd
            qh = jnp.dot(hb, w_qkv_ref[iq], preferred_element_type=f32) + b_qkv_ref[iq]
            kh = jnp.dot(hb, w_qkv_ref[ik], preferred_element_type=f32) + b_qkv_ref[ik]
            vh = jnp.dot(hb, w_qkv_ref[iv], preferred_element_type=f32) + b_qkv_ref[iv]
            s = jnp.dot(qh, kh.T, preferred_element_type=f32) * SCALE   # (S, S)
            s = s - jnp.max(s, axis=-1, keepdims=True)
            p = jnp.exp(s)
            p = p * pl.reciprocal(jnp.sum(p, axis=-1, keepdims=True), approx=True)
            oh = jnp.dot(p, vh, preferred_element_type=f32)             # (S, DH)
            contrib = jnp.dot(oh.astype(bf16), w_o_ref[l * H + hd],
                              preferred_element_type=f32)               # (S, D)
            attn = contrib if attn is None else attn + contrib
        attn = attn + vrow(rb + 0)                                       # bo
        h = layer_norm(h + attn, vrow(rb + 2), vrow(rb + 3))             # g1, be1

        # ---- feed forward ----
        ff = jnp.dot(h.astype(bf16), w1_ref[l], preferred_element_type=f32) + b1_ref[l]
        ff = jnp.maximum(ff, 0.0)
        ff = jnp.dot(ff.astype(bf16), w2_ref[l], preferred_element_type=f32) + vrow(rb + 1)
        h = layer_norm(h + ff, vrow(rb + 4), vrow(rb + 5))               # g2, be2

    # ---- take last time step + output head ----
    h_last = h[S - 1:S, :]                                   # (1, D)
    z = jnp.dot(h_last, wp1_ref[...], preferred_element_type=f32) + vrow(ROW_BP1)
    z = jnp.maximum(z, 0.0)                                  # ReLU; dropout identity
    # second linear folded into a padded row: lanes [0,HID) = wp2, lane HID = bp2
    out = jnp.sum(z * vrow(ROW_WP2), axis=-1, keepdims=True)             # (1, 1)
    out_ref[...] = out.reshape(1, 1, 1)


def make_params(key):
    ks = jax.random.split(key, 16)
    f32 = jnp.float32
    scale = 0.02
    return dict(
        w_in=jax.random.normal(ks[0], (DIN, D), f32) * scale,
        b_in=jax.random.normal(ks[1], (1, D), f32) * scale,
        wqkv=jax.random.normal(ks[2], (L, D, 3 * D), f32) * scale,
        bqkv=jax.random.normal(ks[3], (L, 1, 3 * D), f32) * scale,
        wo=jax.random.normal(ks[4], (L, D, D), f32) * scale,
        bo=jax.random.normal(ks[5], (L, 1, D), f32) * scale,
        w1=jax.random.normal(ks[6], (L, D, F), f32) * scale,
        b1=jax.random.normal(ks[7], (L, 1, F), f32) * scale,
        w2=jax.random.normal(ks[8], (L, F, D), f32) * scale,
        b2=jax.random.normal(ks[9], (L, 1, D), f32) * scale,
        g1=jnp.ones((L, 1, D), f32),
        be1=jnp.zeros((L, 1, D), f32),
        g2=jnp.ones((L, 1, D), f32),
        be2=jnp.zeros((L, 1, D), f32),
        wp1=jax.random.normal(ks[10], (D, HID), f32) * scale,
        bp1=jax.random.normal(ks[11], (1, HID), f32) * scale,
        wp2=jax.random.normal(ks[12], (HID, 1), f32) * scale,
        bp2=jax.random.normal(ks[13], (1, 1), f32) * scale,
    )


def make_pe():
    pe = np.zeros((S, D), dtype=np.float32)
    position = np.arange(0, S, dtype=np.float32)[:, None]
    div_term = np.exp(np.arange(0, D, 2, dtype=np.float32) * (-np.log(10000.0) / D))
    pe[:, 0::2] = np.sin(position * div_term)
    pe[:, 1::2] = np.cos(position * div_term)
    return jnp.asarray(pe)


def pack_params(p, pe):
    """One-time packing of the 21 module parameters into 10 kernel operands."""
    f32 = jnp.float32
    bf16 = jnp.bfloat16

    # ---- vector bank (rows of width D) ----
    rows = [pe[:S] + p["b_in"]]                              # PE + input bias folded
    for l in range(L):
        rows.append(jnp.concatenate(
            [p["bo"][l], p["b2"][l], p["g1"][l], p["be1"][l], p["g2"][l], p["be2"][l]],
            axis=0))                                          # (6, D)
    bp1_aug = jnp.zeros((1, D), f32).at[0, :HID].set(p["bp1"][0]).at[0, HID].set(1.0)
    wp2_aug = (jnp.zeros((1, D), f32)
               .at[0, :HID].set(p["wp2"][:, 0])
               .at[0, HID].set(p["bp2"][0, 0]))
    rows += [bp1_aug, wp2_aug]
    vec_d = jnp.concatenate(rows, axis=0)
    pad = N_ROWS - vec_d.shape[0]
    if pad:
        vec_d = jnp.concatenate([vec_d, jnp.zeros((pad, D), f32)], axis=0)

    # ---- per-head q/k/v weight & bias slabs, head-stacked along the leading axis ----
    w_slabs, b_slabs = [], []
    for l in range(L):
        for j in range(3):                                    # q, k, v
            for hd in range(H):
                c0 = j * D + hd * DH
                w_slabs.append(p["wqkv"][l][:, c0:c0 + DH])   # (D, DH)
                b_slabs.append(p["bqkv"][l][:, c0:c0 + DH])   # (1, DH)
    w_qkv = jnp.stack(w_slabs).astype(bf16)                   # (L*3*H, D, DH)
    b_qkv = jnp.stack(b_slabs).astype(f32)                    # (L*3*H, 1, DH)

    wo_slabs = []
    for l in range(L):
        for hd in range(H):
            wo_slabs.append(p["wo"][l][hd * DH:(hd + 1) * DH, :])   # (DH, D)
    w_o = jnp.stack(wo_slabs).astype(bf16)                    # (L*H, DH, D)

    w1 = p["w1"].astype(bf16)                                 # (L, D, F)
    b1 = p["b1"].astype(f32)                                  # (L, 1, F)
    w2 = p["w2"].astype(bf16)                                 # (L, F, D)
    w_in = p["w_in"].astype(f32)                              # (DIN, D)
    wp1_pad = jnp.zeros((D, D), f32).at[:, :HID].set(p["wp1"])  # padded head weight

    return (w_in, vec_d, w_qkv, b_qkv, w_o, w1, b1, w2, wp1_pad)


def _rep_spec(shape):
    """Whole-array block, same block for every grid step (fetched once)."""
    zeros = (0,) * len(shape)
    return pl.BlockSpec(shape, lambda b, _z=zeros: _z)


@jax.jit
def time_series_transformer(x, packed):
    (w_in, vec_d, w_qkv, b_qkv, w_o, w1, b1, w2, wp1_pad) = packed
    in_specs = [
        pl.BlockSpec((1, S, DIN), lambda b: (b, 0, 0)),
        _rep_spec(w_in.shape),
        _rep_spec(vec_d.shape),
        _rep_spec(w_qkv.shape),
        _rep_spec(b_qkv.shape),
        _rep_spec(w_o.shape),
        _rep_spec(w1.shape),
        _rep_spec(b1.shape),
        _rep_spec(w2.shape),
        _rep_spec(wp1_pad.shape),
    ]
    out = pl.pallas_call(
        transformer_kernel,
        out_shape=jax.ShapeDtypeStruct((B, 1, 1), jnp.float32),
        grid=(B,),
        in_specs=in_specs,
        out_specs=pl.BlockSpec((1, 1, 1), lambda b: (b, 0, 0)),
        compiler_params=pltpu.CompilerParams(dimension_semantics=("parallel",)),
    )(x, w_in, vec_d, w_qkv, b_qkv, w_o, w1, b1, w2, wp1_pad)
    return out.reshape(B, 1)


# ---- pure-JAX f32 reference (same math as the PyTorch module) ----
def reference(x, pe, p):
    def ln(v, g, b):
        mu = jnp.mean(v, -1, keepdims=True)
        var = jnp.mean((v - mu) ** 2, -1, keepdims=True)
        return (v - mu) * jax.lax.rsqrt(var + EPS) * g + b

    outs = []
    for b in range(B):
        h = x[b] @ p["w_in"] + p["b_in"] + pe
        for l in range(L):
            qkv = h @ p["wqkv"][l] + p["bqkv"][l]
            q, k, v = qkv[:, :D], qkv[:, D:2 * D], qkv[:, 2 * D:]
            heads = []
            for hd in range(H):
                sl = slice(hd * DH, (hd + 1) * DH)
                s = (q[:, sl] @ k[:, sl].T) * SCALE
                pm = jax.nn.softmax(s, axis=-1)
                heads.append(pm @ v[:, sl])
            attn = jnp.concatenate(heads, -1) @ p["wo"][l] + p["bo"][l]
            h = ln(h + attn, p["g1"][l], p["be1"][l])
            ff = jnp.maximum(h @ p["w1"][l] + p["b1"][l], 0.0) @ p["w2"][l] + p["b2"][l]
            h = ln(h + ff, p["g2"][l], p["be2"][l])
        z = jnp.maximum(h[S - 1:S] @ p["wp1"] + p["bp1"], 0.0) @ p["wp2"] + p["bp2"]
        outs.append(z)
    return jnp.concatenate(outs, 0)


if __name__ == "__main__":
    key = jax.random.PRNGKey(0)
    kx, kp = jax.random.split(key)
    x = jax.random.normal(kx, (B, S, DIN), jnp.float32)
    params = make_params(kp)
    pe = make_pe()
    packed = pack_params(params, pe)

    out = time_series_transformer(x, packed)
    out = jax.block_until_ready(out)

    ref = reference(x, pe, params)
    assert out.shape == (B, 1), out.shape
    # Tolerance accounts for bf16 MXU weight inputs (f32 accumulation) and the
    # approximate EUP reciprocal in the softmax; reference is full f32.
    np.testing.assert_allclose(np.asarray(out), np.asarray(ref), rtol=2e-2, atol=2e-3)

    print("KERNEL_OK")
</pallas_src>

<mosaic_0001>
module attributes {stable_mosaic.version = 11 : i64} {
  func.func @transformer_kernel(%arg0: i32, %arg1: memref<1x8x4xf32, #tpu.memory_space<vmem>>, %arg2: memref<4x64xf32, #tpu.memory_space<vmem>>, %arg3: memref<24x64xf32, #tpu.memory_space<vmem>>, %arg4: memref<24x64x16xbf16, #tpu.memory_space<vmem>>, %arg5: memref<24x1x16xf32, #tpu.memory_space<vmem>>, %arg6: memref<8x16x64xbf16, #tpu.memory_space<vmem>>, %arg7: memref<2x64x256xbf16, #tpu.memory_space<vmem>>, %arg8: memref<2x1x256xf32, #tpu.memory_space<vmem>>, %arg9: memref<2x256x64xbf16, #tpu.memory_space<vmem>>, %arg10: memref<64x64xf32, #tpu.memory_space<vmem>>, %arg11: memref<1x1x1xf32, #tpu.memory_space<vmem>>) attributes {dimension_semantics = [#tpu.dimension_semantics<parallel>], iteration_bounds = array<i64: 2>, scalar_prefetch = 0 : i64, scratch_operands = 0 : i64, tpu.core_type = #tpu.core_type<tc>, window_params = [{transform_indices = @transform_0, window_bounds = array<i64: 1, 8, 4>}, {pipeline_mode = #tpu.pipeline_mode<synchronous>, transform_indices = @transform_1, window_bounds = array<i64: 4, 64>}, {pipeline_mode = #tpu.pipeline_mode<synchronous>, transform_indices = @transform_2, window_bounds = array<i64: 24, 64>}, {pipeline_mode = #tpu.pipeline_mode<synchronous>, transform_indices = @transform_3, window_bounds = array<i64: 24, 64, 16>}, {pipeline_mode = #tpu.pipeline_mode<synchronous>, transform_indices = @transform_4, window_bounds = array<i64: 24, 1, 16>}, {pipeline_mode = #tpu.pipeline_mode<synchronous>, transform_indices = @transform_5, window_bounds = array<i64: 8, 16, 64>}, {pipeline_mode = #tpu.pipeline_mode<synchronous>, transform_indices = @transform_6, window_bounds = array<i64: 2, 64, 256>}, {pipeline_mode = #tpu.pipeline_mode<synchronous>, transform_indices = @transform_7, window_bounds = array<i64: 2, 1, 256>}, {pipeline_mode = #tpu.pipeline_mode<synchronous>, transform_indices = @transform_8, window_bounds = array<i64: 2, 256, 64>}, {pipeline_mode = #tpu.pipeline_mode<synchronous>, transform_indices = @transform_9, window_bounds = array<i64: 64, 64>}, {transform_indices = @transform_10, window_bounds = array<i64: 1, 1, 1>}]} {
    %c0 = arith.constant 0 : index
    %c0_0 = arith.constant 0 : index
    %c0_1 = arith.constant 0 : index
    %0 = vector.load %arg1[%c0, %c0_0, %c0_1] : memref<1x8x4xf32, #tpu.memory_space<vmem>>, vector<1x8x4xf32>
    %1 = vector.shape_cast %0 : vector<1x8x4xf32> to vector<8x4xf32>
    %c0_2 = arith.constant 0 : index
    %c0_3 = arith.constant 0 : index
    %2 = vector.load %arg2[%c0_2, %c0_3] : memref<4x64xf32, #tpu.memory_space<vmem>>, vector<4x64xf32>
    %cst = arith.constant dense<0.000000e+00> : vector<8x64xf32>
    %3 = tpu.matmul %1, %2, %cst {dimension_numbers = #tpu.dot_dimension_numbers<[1], [0], [0], [1], [0, 0, 1, 1], [], []>} : vector<8x4xf32>, vector<4x64xf32>, vector<8x64xf32> -> vector<8x64xf32>
    %c0_4 = arith.constant 0 : index
    %c0_5 = arith.constant 0 : index
    %4 = vector.load %arg3[%c0_4, %c0_5] : memref<24x64xf32, #tpu.memory_space<vmem>>, vector<8x64xf32>
    %5 = arith.addf %3, %4 : vector<8x64xf32>
    %6 = arith.truncf %5 : vector<8x64xf32> to vector<8x64xbf16>
    %c0_6 = arith.constant 0 : index
    %c0_7 = arith.constant 0 : index
    %c0_8 = arith.constant 0 : index
    %7 = vector.load %arg4[%c0_6, %c0_7, %c0_8] : memref<24x64x16xbf16, #tpu.memory_space<vmem>>, vector<1x64x16xbf16>
    %8 = vector.shape_cast %7 : vector<1x64x16xbf16> to vector<64x16xbf16>
    %cst_9 = arith.constant dense<0.000000e+00> : vector<8x16xf32>
    %9 = tpu.matmul %6, %8, %cst_9 {dimension_numbers = #tpu.dot_dimension_numbers<[1], [0], [0], [1], [0, 0, 1, 1], [], []>} : vector<8x64xbf16>, vector<64x16xbf16>, vector<8x16xf32> -> vector<8x16xf32>
    %c0_10 = arith.constant 0 : index
    %c0_11 = arith.constant 0 : index
    %c0_12 = arith.constant 0 : index
    %10 = vector.load %arg5[%c0_10, %c0_11, %c0_12] : memref<24x1x16xf32, #tpu.memory_space<vmem>>, vector<1x1x16xf32>
    %11 = vector.shape_cast %10 : vector<1x1x16xf32> to vector<1x16xf32>
    %12 = vector.broadcast %11 : vector<1x16xf32> to vector<8x16xf32>
    %13 = arith.addf %9, %12 : vector<8x16xf32>
    %c4 = arith.constant 4 : index
    %c0_13 = arith.constant 0 : index
    %c0_14 = arith.constant 0 : index
    %14 = vector.load %arg4[%c4, %c0_13, %c0_14] : memref<24x64x16xbf16, #tpu.memory_space<vmem>>, vector<1x64x16xbf16>
    %15 = vector.shape_cast %14 : vector<1x64x16xbf16> to vector<64x16xbf16>
    %cst_15 = arith.constant dense<0.000000e+00> : vector<8x16xf32>
    %16 = tpu.matmul %6, %15, %cst_15 {dimension_numbers = #tpu.dot_dimension_numbers<[1], [0], [0], [1], [0, 0, 1, 1], [], []>} : vector<8x64xbf16>, vector<64x16xbf16>, vector<8x16xf32> -> vector<8x16xf32>
    %c4_16 = arith.constant 4 : index
    %c0_17 = arith.constant 0 : index
    %c0_18 = arith.constant 0 : index
    %17 = vector.load %arg5[%c4_16, %c0_17, %c0_18] : memref<24x1x16xf32, #tpu.memory_space<vmem>>, vector<1x1x16xf32>
    %18 = vector.shape_cast %17 : vector<1x1x16xf32> to vector<1x16xf32>
    %19 = vector.broadcast %18 : vector<1x16xf32> to vector<8x16xf32>
    %20 = arith.addf %16, %19 : vector<8x16xf32>
    %c8 = arith.constant 8 : index
    %c0_19 = arith.constant 0 : index
    %c0_20 = arith.constant 0 : index
    %21 = vector.load %arg4[%c8, %c0_19, %c0_20] : memref<24x64x16xbf16, #tpu.memory_space<vmem>>, vector<1x64x16xbf16>
    %22 = vector.shape_cast %21 : vector<1x64x16xbf16> to vector<64x16xbf16>
    %cst_21 = arith.constant dense<0.000000e+00> : vector<8x16xf32>
    %23 = tpu.matmul %6, %22, %cst_21 {dimension_numbers = #tpu.dot_dimension_numbers<[1], [0], [0], [1], [0, 0, 1, 1], [], []>} : vector<8x64xbf16>, vector<64x16xbf16>, vector<8x16xf32> -> vector<8x16xf32>
    %c8_22 = arith.constant 8 : index
    %c0_23 = arith.constant 0 : index
    %c0_24 = arith.constant 0 : index
    %24 = vector.load %arg5[%c8_22, %c0_23, %c0_24] : memref<24x1x16xf32, #tpu.memory_space<vmem>>, vector<1x1x16xf32>
    %25 = vector.shape_cast %24 : vector<1x1x16xf32> to vector<1x16xf32>
    %26 = vector.broadcast %25 : vector<1x16xf32> to vector<8x16xf32>
    %27 = arith.addf %23, %26 : vector<8x16xf32>
    %28 = tpu.transpose %20, [1, 0] : vector<8x16xf32> -> vector<16x8xf32>
    %cst_25 = arith.constant dense<0.000000e+00> : vector<8x8xf32>
    %29 = tpu.matmul %13, %28, %cst_25 {dimension_numbers = #tpu.dot_dimension_numbers<[1], [0], [0], [1], [0, 0, 1, 1], [], []>} : vector<8x16xf32>, vector<16x8xf32>, vector<8x8xf32> -> vector<8x8xf32>
    %cst_26 = arith.constant 2.500000e-01 : f32
    %30 = vector.broadcast %cst_26 : f32 to vector<8x8xf32>
    %31 = arith.mulf %29, %30 : vector<8x8xf32>
    %cst_27 = arith.constant dense<0xFF800000> : vector<8xf32>
    %32 = vector.multi_reduction <maximumf>, %31, %cst_27 [1] : vector<8x8xf32> to vector<8xf32>
    %33 = vector.shape_cast %32 : vector<8xf32> to vector<8x1xf32>
    %34 = vector.broadcast %33 : vector<8x1xf32> to vector<8x8xf32>
    %35 = arith.subf %31, %34 : vector<8x8xf32>
    %36 = math.exp %35 : vector<8x8xf32>
    %cst_28 = arith.constant dense<0.000000e+00> : vector<8xf32>
    %37 = vector.multi_reduction <add>, %36, %cst_28 [1] : vector<8x8xf32> to vector<8xf32>
    %38 = vector.shape_cast %37 : vector<8xf32> to vector<8x1xf32>
    %39 = tpu.reciprocal %38 {approx = true} : vector<8x1xf32> -> vector<8x1xf32>
    %40 = vector.broadcast %39 : vector<8x1xf32> to vector<8x8xf32>
    %41 = arith.mulf %36, %40 : vector<8x8xf32>
    %cst_29 = arith.constant dense<0.000000e+00> : vector<8x16xf32>
    %42 = tpu.matmul %41, %27, %cst_29 {dimension_numbers = #tpu.dot_dimension_numbers<[1], [0], [0], [1], [0, 0, 1, 1], [], []>} : vector<8x8xf32>, vector<8x16xf32>, vector<8x16xf32> -> vector<8x16xf32>
    %43 = arith.truncf %42 : vector<8x16xf32> to vector<8x16xbf16>
    %c0_30 = arith.constant 0 : index
    %c0_31 = arith.constant 0 : index
    %c0_32 = arith.constant 0 : index
    %44 = vector.load %arg6[%c0_30, %c0_31, %c0_32] : memref<8x16x64xbf16, #tpu.memory_space<vmem>>, vector<1x16x64xbf16>
    %45 = vector.shape_cast %44 : vector<1x16x64xbf16> to vector<16x64xbf16>
    %cst_33 = arith.constant dense<0.000000e+00> : vector<8x64xf32>
    %46 = tpu.matmul %43, %45, %cst_33 {dimension_numbers = #tpu.dot_dimension_numbers<[1], [0], [0], [1], [0, 0, 1, 1], [], []>} : vector<8x16xbf16>, vector<16x64xbf16>, vector<8x64xf32> -> vector<8x64xf32>
    %c1 = arith.constant 1 : index
    %c0_34 = arith.constant 0 : index
    %c0_35 = arith.constant 0 : index
    %47 = vector.load %arg4[%c1, %c0_34, %c0_35] : memref<24x64x16xbf16, #tpu.memory_space<vmem>>, vector<1x64x16xbf16>
    %48 = vector.shape_cast %47 : vector<1x64x16xbf16> to vector<64x16xbf16>
    %cst_36 = arith.constant dense<0.000000e+00> : vector<8x16xf32>
    %49 = tpu.matmul %6, %48, %cst_36 {dimension_numbers = #tpu.dot_dimension_numbers<[1], [0], [0], [1], [0, 0, 1, 1], [], []>} : vector<8x64xbf16>, vector<64x16xbf16>, vector<8x16xf32> -> vector<8x16xf32>
    %c1_37 = arith.constant 1 : index
    %c0_38 = arith.constant 0 : index
    %c0_39 = arith.constant 0 : index
    %50 = vector.load %arg5[%c1_37, %c0_38, %c0_39] : memref<24x1x16xf32, #tpu.memory_space<vmem>>, vector<1x1x16xf32>
    %51 = vector.shape_cast %50 : vector<1x1x16xf32> to vector<1x16xf32>
    %52 = vector.broadcast %51 : vector<1x16xf32> to vector<8x16xf32>
    %53 = arith.addf %49, %52 : vector<8x16xf32>
    %c5 = arith.constant 5 : index
    %c0_40 = arith.constant 0 : index
    %c0_41 = arith.constant 0 : index
    %54 = vector.load %arg4[%c5, %c0_40, %c0_41] : memref<24x64x16xbf16, #tpu.memory_space<vmem>>, vector<1x64x16xbf16>
    %55 = vector.shape_cast %54 : vector<1x64x16xbf16> to vector<64x16xbf16>
    %cst_42 = arith.constant dense<0.000000e+00> : vector<8x16xf32>
    %56 = tpu.matmul %6, %55, %cst_42 {dimension_numbers = #tpu.dot_dimension_numbers<[1], [0], [0], [1], [0, 0, 1, 1], [], []>} : vector<8x64xbf16>, vector<64x16xbf16>, vector<8x16xf32> -> vector<8x16xf32>
    %c5_43 = arith.constant 5 : index
    %c0_44 = arith.constant 0 : index
    %c0_45 = arith.constant 0 : index
    %57 = vector.load %arg5[%c5_43, %c0_44, %c0_45] : memref<24x1x16xf32, #tpu.memory_space<vmem>>, vector<1x1x16xf32>
    %58 = vector.shape_cast %57 : vector<1x1x16xf32> to vector<1x16xf32>
    %59 = vector.broadcast %58 : vector<1x16xf32> to vector<8x16xf32>
    %60 = arith.addf %56, %59 : vector<8x16xf32>
    %c9 = arith.constant 9 : index
    %c0_46 = arith.constant 0 : index
    %c0_47 = arith.constant 0 : index
    %61 = vector.load %arg4[%c9, %c0_46, %c0_47] : memref<24x64x16xbf16, #tpu.memory_space<vmem>>, vector<1x64x16xbf16>
    %62 = vector.shape_cast %61 : vector<1x64x16xbf16> to vector<64x16xbf16>
    %cst_48 = arith.constant dense<0.000000e+00> : vector<8x16xf32>
    %63 = tpu.matmul %6, %62, %cst_48 {dimension_numbers = #tpu.dot_dimension_numbers<[1], [0], [0], [1], [0, 0, 1, 1], [], []>} : vector<8x64xbf16>, vector<64x16xbf16>, vector<8x16xf32> -> vector<8x16xf32>
    %c9_49 = arith.constant 9 : index
    %c0_50 = arith.constant 0 : index
    %c0_51 = arith.constant 0 : index
    %64 = vector.load %arg5[%c9_49, %c0_50, %c0_51] : memref<24x1x16xf32, #tpu.memory_space<vmem>>, vector<1x1x16xf32>
    %65 = vector.shape_cast %64 : vector<1x1x16xf32> to vector<1x16xf32>
    %66 = vector.broadcast %65 : vector<1x16xf32> to vector<8x16xf32>
    %67 = arith.addf %63, %66 : vector<8x16xf32>
    %68 = tpu.transpose %60, [1, 0] : vector<8x16xf32> -> vector<16x8xf32>
    %cst_52 = arith.constant dense<0.000000e+00> : vector<8x8xf32>
    %69 = tpu.matmul %53, %68, %cst_52 {dimension_numbers = #tpu.dot_dimension_numbers<[1], [0], [0], [1], [0, 0, 1, 1], [], []>} : vector<8x16xf32>, vector<16x8xf32>, vector<8x8xf32> -> vector<8x8xf32>
    %cst_53 = arith.constant 2.500000e-01 : f32
    %70 = vector.broadcast %cst_53 : f32 to vector<8x8xf32>
    %71 = arith.mulf %69, %70 : vector<8x8xf32>
    %cst_54 = arith.constant dense<0xFF800000> : vector<8xf32>
    %72 = vector.multi_reduction <maximumf>, %71, %cst_54 [1] : vector<8x8xf32> to vector<8xf32>
    %73 = vector.shape_cast %72 : vector<8xf32> to vector<8x1xf32>
    %74 = vector.broadcast %73 : vector<8x1xf32> to vector<8x8xf32>
    %75 = arith.subf %71, %74 : vector<8x8xf32>
    %76 = math.exp %75 : vector<8x8xf32>
    %cst_55 = arith.constant dense<0.000000e+00> : vector<8xf32>
    %77 = vector.multi_reduction <add>, %76, %cst_55 [1] : vector<8x8xf32> to vector<8xf32>
    %78 = vector.shape_cast %77 : vector<8xf32> to vector<8x1xf32>
    %79 = tpu.reciprocal %78 {approx = true} : vector<8x1xf32> -> vector<8x1xf32>
    %80 = vector.broadcast %79 : vector<8x1xf32> to vector<8x8xf32>
    %81 = arith.mulf %76, %80 : vector<8x8xf32>
    %cst_56 = arith.constant dense<0.000000e+00> : vector<8x16xf32>
    %82 = tpu.matmul %81, %67, %cst_56 {dimension_numbers = #tpu.dot_dimension_numbers<[1], [0], [0], [1], [0, 0, 1, 1], [], []>} : vector<8x8xf32>, vector<8x16xf32>, vector<8x16xf32> -> vector<8x16xf32>
    %83 = arith.truncf %82 : vector<8x16xf32> to vector<8x16xbf16>
    %c1_57 = arith.constant 1 : index
    %c0_58 = arith.constant 0 : index
    %c0_59 = arith.constant 0 : index
    %84 = vector.load %arg6[%c1_57, %c0_58, %c0_59] : memref<8x16x64xbf16, #tpu.memory_space<vmem>>, vector<1x16x64xbf16>
    %85 = vector.shape_cast %84 : vector<1x16x64xbf16> to vector<16x64xbf16>
    %cst_60 = arith.constant dense<0.000000e+00> : vector<8x64xf32>
    %86 = tpu.matmul %83, %85, %cst_60 {dimension_numbers = #tpu.dot_dimension_numbers<[1], [0], [0], [1], [0, 0, 1, 1], [], []>} : vector<8x16xbf16>, vector<16x64xbf16>, vector<8x64xf32> -> vector<8x64xf32>
    %87 = arith.addf %46, %86 : vector<8x64xf32>
    %c2 = arith.constant 2 : index
    %c0_61 = arith.constant 0 : index
    %c0_62 = arith.constant 0 : index
    %88 = vector.load %arg4[%c2, %c0_61, %c0_62] : memref<24x64x16xbf16, #tpu.memory_space<vmem>>, vector<1x64x16xbf16>
    %89 = vector.shape_cast %88 : vector<1x64x16xbf16> to vector<64x16xbf16>
    %cst_63 = arith.constant dense<0.000000e+00> : vector<8x16xf32>
    %90 = tpu.matmul %6, %89, %cst_63 {dimension_numbers = #tpu.dot_dimension_numbers<[1], [0], [0], [1], [0, 0, 1, 1], [], []>} : vector<8x64xbf16>, vector<64x16xbf16>, vector<8x16xf32> -> vector<8x16xf32>
    %c2_64 = arith.constant 2 : index
    %c0_65 = arith.constant 0 : index
    %c0_66 = arith.constant 0 : index
    %91 = vector.load %arg5[%c2_64, %c0_65, %c0_66] : memref<24x1x16xf32, #tpu.memory_space<vmem>>, vector<1x1x16xf32>
    %92 = vector.shape_cast %91 : vector<1x1x16xf32> to vector<1x16xf32>
    %93 = vector.broadcast %92 : vector<1x16xf32> to vector<8x16xf32>
    %94 = arith.addf %90, %93 : vector<8x16xf32>
    %c6 = arith.constant 6 : index
    %c0_67 = arith.constant 0 : index
    %c0_68 = arith.constant 0 : index
    %95 = vector.load %arg4[%c6, %c0_67, %c0_68] : memref<24x64x16xbf16, #tpu.memory_space<vmem>>, vector<1x64x16xbf16>
    %96 = vector.shape_cast %95 : vector<1x64x16xbf16> to vector<64x16xbf16>
    %cst_69 = arith.constant dense<0.000000e+00> : vector<8x16xf32>
    %97 = tpu.matmul %6, %96, %cst_69 {dimension_numbers = #tpu.dot_dimension_numbers<[1], [0], [0], [1], [0, 0, 1, 1], [], []>} : vector<8x64xbf16>, vector<64x16xbf16>, vector<8x16xf32> -> vector<8x16xf32>
    %c6_70 = arith.constant 6 : index
    %c0_71 = arith.constant 0 : index
    %c0_72 = arith.constant 0 : index
    %98 = vector.load %arg5[%c6_70, %c0_71, %c0_72] : memref<24x1x16xf32, #tpu.memory_space<vmem>>, vector<1x1x16xf32>
    %99 = vector.shape_cast %98 : vector<1x1x16xf32> to vector<1x16xf32>
    %100 = vector.broadcast %99 : vector<1x16xf32> to vector<8x16xf32>
    %101 = arith.addf %97, %100 : vector<8x16xf32>
    %c10 = arith.constant 10 : index
    %c0_73 = arith.constant 0 : index
    %c0_74 = arith.constant 0 : index
    %102 = vector.load %arg4[%c10, %c0_73, %c0_74] : memref<24x64x16xbf16, #tpu.memory_space<vmem>>, vector<1x64x16xbf16>
    %103 = vector.shape_cast %102 : vector<1x64x16xbf16> to vector<64x16xbf16>
    %cst_75 = arith.constant dense<0.000000e+00> : vector<8x16xf32>
    %104 = tpu.matmul %6, %103, %cst_75 {dimension_numbers = #tpu.dot_dimension_numbers<[1], [0], [0], [1], [0, 0, 1, 1], [], []>} : vector<8x64xbf16>, vector<64x16xbf16>, vector<8x16xf32> -> vector<8x16xf32>
    %c10_76 = arith.constant 10 : index
    %c0_77 = arith.constant 0 : index
    %c0_78 = arith.constant 0 : index
    %105 = vector.load %arg5[%c10_76, %c0_77, %c0_78] : memref<24x1x16xf32, #tpu.memory_space<vmem>>, vector<1x1x16xf32>
    %106 = vector.shape_cast %105 : vector<1x1x16xf32> to vector<1x16xf32>
    %107 = vector.broadcast %106 : vector<1x16xf32> to vector<8x16xf32>
    %108 = arith.addf %104, %107 : vector<8x16xf32>
    %109 = tpu.transpose %101, [1, 0] : vector<8x16xf32> -> vector<16x8xf32>
    %cst_79 = arith.constant dense<0.000000e+00> : vector<8x8xf32>
    %110 = tpu.matmul %94, %109, %cst_79 {dimension_numbers = #tpu.dot_dimension_numbers<[1], [0], [0], [1], [0, 0, 1, 1], [], []>} : vector<8x16xf32>, vector<16x8xf32>, vector<8x8xf32> -> vector<8x8xf32>
    %cst_80 = arith.constant 2.500000e-01 : f32
    %111 = vector.broadcast %cst_80 : f32 to vector<8x8xf32>
    %112 = arith.mulf %110, %111 : vector<8x8xf32>
    %cst_81 = arith.constant dense<0xFF800000> : vector<8xf32>
    %113 = vector.multi_reduction <maximumf>, %112, %cst_81 [1] : vector<8x8xf32> to vector<8xf32>
    %114 = vector.shape_cast %113 : vector<8xf32> to vector<8x1xf32>
    %115 = vector.broadcast %114 : vector<8x1xf32> to vector<8x8xf32>
    %116 = arith.subf %112, %115 : vector<8x8xf32>
    %117 = math.exp %116 : vector<8x8xf32>
    %cst_82 = arith.constant dense<0.000000e+00> : vector<8xf32>
    %118 = vector.multi_reduction <add>, %117, %cst_82 [1] : vector<8x8xf32> to vector<8xf32>
    %119 = vector.shape_cast %118 : vector<8xf32> to vector<8x1xf32>
    %120 = tpu.reciprocal %119 {approx = true} : vector<8x1xf32> -> vector<8x1xf32>
    %121 = vector.broadcast %120 : vector<8x1xf32> to vector<8x8xf32>
    %122 = arith.mulf %117, %121 : vector<8x8xf32>
    %cst_83 = arith.constant dense<0.000000e+00> : vector<8x16xf32>
    %123 = tpu.matmul %122, %108, %cst_83 {dimension_numbers = #tpu.dot_dimension_numbers<[1], [0], [0], [1], [0, 0, 1, 1], [], []>} : vector<8x8xf32>, vector<8x16xf32>, vector<8x16xf32> -> vector<8x16xf32>
    %124 = arith.truncf %123 : vector<8x16xf32> to vector<8x16xbf16>
    %c2_84 = arith.constant 2 : index
    %c0_85 = arith.constant 0 : index
    %c0_86 = arith.constant 0 : index
    %125 = vector.load %arg6[%c2_84, %c0_85, %c0_86] : memref<8x16x64xbf16, #tpu.memory_space<vmem>>, vector<1x16x64xbf16>
    %126 = vector.shape_cast %125 : vector<1x16x64xbf16> to vector<16x64xbf16>
    %cst_87 = arith.constant dense<0.000000e+00> : vector<8x64xf32>
    %127 = tpu.matmul %124, %126, %cst_87 {dimension_numbers = #tpu.dot_dimension_numbers<[1], [0], [0], [1], [0, 0, 1, 1], [], []>} : vector<8x16xbf16>, vector<16x64xbf16>, vector<8x64xf32> -> vector<8x64xf32>
    %128 = arith.addf %87, %127 : vector<8x64xf32>
    %c3 = arith.constant 3 : index
    %c0_88 = arith.constant 0 : index
    %c0_89 = arith.constant 0 : index
    %129 = vector.load %arg4[%c3, %c0_88, %c0_89] : memref<24x64x16xbf16, #tpu.memory_space<vmem>>, vector<1x64x16xbf16>
    %130 = vector.shape_cast %129 : vector<1x64x16xbf16> to vector<64x16xbf16>
    %cst_90 = arith.constant dense<0.000000e+00> : vector<8x16xf32>
    %131 = tpu.matmul %6, %130, %cst_90 {dimension_numbers = #tpu.dot_dimension_numbers<[1], [0], [0], [1], [0, 0, 1, 1], [], []>} : vector<8x64xbf16>, vector<64x16xbf16>, vector<8x16xf32> -> vector<8x16xf32>
    %c3_91 = arith.constant 3 : index
    %c0_92 = arith.constant 0 : index
    %c0_93 = arith.constant 0 : index
    %132 = vector.load %arg5[%c3_91, %c0_92, %c0_93] : memref<24x1x16xf32, #tpu.memory_space<vmem>>, vector<1x1x16xf32>
    %133 = vector.shape_cast %132 : vector<1x1x16xf32> to vector<1x16xf32>
    %134 = vector.broadcast %133 : vector<1x16xf32> to vector<8x16xf32>
    %135 = arith.addf %131, %134 : vector<8x16xf32>
    %c7 = arith.constant 7 : index
    %c0_94 = arith.constant 0 : index
    %c0_95 = arith.constant 0 : index
    %136 = vector.load %arg4[%c7, %c0_94, %c0_95] : memref<24x64x16xbf16, #tpu.memory_space<vmem>>, vector<1x64x16xbf16>
    %137 = vector.shape_cast %136 : vector<1x64x16xbf16> to vector<64x16xbf16>
    %cst_96 = arith.constant dense<0.000000e+00> : vector<8x16xf32>
    %138 = tpu.matmul %6, %137, %cst_96 {dimension_numbers = #tpu.dot_dimension_numbers<[1], [0], [0], [1], [0, 0, 1, 1], [], []>} : vector<8x64xbf16>, vector<64x16xbf16>, vector<8x16xf32> -> vector<8x16xf32>
    %c7_97 = arith.constant 7 : index
    %c0_98 = arith.constant 0 : index
    %c0_99 = arith.constant 0 : index
    %139 = vector.load %arg5[%c7_97, %c0_98, %c0_99] : memref<24x1x16xf32, #tpu.memory_space<vmem>>, vector<1x1x16xf32>
    %140 = vector.shape_cast %139 : vector<1x1x16xf32> to vector<1x16xf32>
    %141 = vector.broadcast %140 : vector<1x16xf32> to vector<8x16xf32>
    %142 = arith.addf %138, %141 : vector<8x16xf32>
    %c11 = arith.constant 11 : index
    %c0_100 = arith.constant 0 : index
    %c0_101 = arith.constant 0 : index
    %143 = vector.load %arg4[%c11, %c0_100, %c0_101] : memref<24x64x16xbf16, #tpu.memory_space<vmem>>, vector<1x64x16xbf16>
    %144 = vector.shape_cast %143 : vector<1x64x16xbf16> to vector<64x16xbf16>
    %cst_102 = arith.constant dense<0.000000e+00> : vector<8x16xf32>
    %145 = tpu.matmul %6, %144, %cst_102 {dimension_numbers = #tpu.dot_dimension_numbers<[1], [0], [0], [1], [0, 0, 1, 1], [], []>} : vector<8x64xbf16>, vector<64x16xbf16>, vector<8x16xf32> -> vector<8x16xf32>
    %c11_103 = arith.constant 11 : index
    %c0_104 = arith.constant 0 : index
    %c0_105 = arith.constant 0 : index
    %146 = vector.load %arg5[%c11_103, %c0_104, %c0_105] : memref<24x1x16xf32, #tpu.memory_space<vmem>>, vector<1x1x16xf32>
    %147 = vector.shape_cast %146 : vector<1x1x16xf32> to vector<1x16xf32>
    %148 = vector.broadcast %147 : vector<1x16xf32> to vector<8x16xf32>
    %149 = arith.addf %145, %148 : vector<8x16xf32>
    %150 = tpu.transpose %142, [1, 0] : vector<8x16xf32> -> vector<16x8xf32>
    %cst_106 = arith.constant dense<0.000000e+00> : vector<8x8xf32>
    %151 = tpu.matmul %135, %150, %cst_106 {dimension_numbers = #tpu.dot_dimension_numbers<[1], [0], [0], [1], [0, 0, 1, 1], [], []>} : vector<8x16xf32>, vector<16x8xf32>, vector<8x8xf32> -> vector<8x8xf32>
    %cst_107 = arith.constant 2.500000e-01 : f32
    %152 = vector.broadcast %cst_107 : f32 to vector<8x8xf32>
    %153 = arith.mulf %151, %152 : vector<8x8xf32>
    %cst_108 = arith.constant dense<0xFF800000> : vector<8xf32>
    %154 = vector.multi_reduction <maximumf>, %153, %cst_108 [1] : vector<8x8xf32> to vector<8xf32>
    %155 = vector.shape_cast %154 : vector<8xf32> to vector<8x1xf32>
    %156 = vector.broadcast %155 : vector<8x1xf32> to vector<8x8xf32>
    %157 = arith.subf %153, %156 : vector<8x8xf32>
    %158 = math.exp %157 : vector<8x8xf32>
    %cst_109 = arith.constant dense<0.000000e+00> : vector<8xf32>
    %159 = vector.multi_reduction <add>, %158, %cst_109 [1] : vector<8x8xf32> to vector<8xf32>
    %160 = vector.shape_cast %159 : vector<8xf32> to vector<8x1xf32>
    %161 = tpu.reciprocal %160 {approx = true} : vector<8x1xf32> -> vector<8x1xf32>
    %162 = vector.broadcast %161 : vector<8x1xf32> to vector<8x8xf32>
    %163 = arith.mulf %158, %162 : vector<8x8xf32>
    %cst_110 = arith.constant dense<0.000000e+00> : vector<8x16xf32>
    %164 = tpu.matmul %163, %149, %cst_110 {dimension_numbers = #tpu.dot_dimension_numbers<[1], [0], [0], [1], [0, 0, 1, 1], [], []>} : vector<8x8xf32>, vector<8x16xf32>, vector<8x16xf32> -> vector<8x16xf32>
    %165 = arith.truncf %164 : vector<8x16xf32> to vector<8x16xbf16>
    %c3_111 = arith.constant 3 : index
    %c0_112 = arith.constant 0 : index
    %c0_113 = arith.constant 0 : index
    %166 = vector.load %arg6[%c3_111, %c0_112, %c0_113] : memref<8x16x64xbf16, #tpu.memory_space<vmem>>, vector<1x16x64xbf16>
    %167 = vector.shape_cast %166 : vector<1x16x64xbf16> to vector<16x64xbf16>
    %cst_114 = arith.constant dense<0.000000e+00> : vector<8x64xf32>
    %168 = tpu.matmul %165, %167, %cst_114 {dimension_numbers = #tpu.dot_dimension_numbers<[1], [0], [0], [1], [0, 0, 1, 1], [], []>} : vector<8x16xbf16>, vector<16x64xbf16>, vector<8x64xf32> -> vector<8x64xf32>
    %169 = arith.addf %128, %168 : vector<8x64xf32>
    %c8_115 = arith.constant 8 : index
    %c0_116 = arith.constant 0 : index
    %170 = vector.load %arg3[%c8_115, %c0_116] : memref<24x64xf32, #tpu.memory_space<vmem>>, vector<1x64xf32>
    %171 = vector.broadcast %170 : vector<1x64xf32> to vector<8x64xf32>
    %172 = arith.addf %169, %171 : vector<8x64xf32>
    %173 = arith.addf %5, %172 : vector<8x64xf32>
    %c10_117 = arith.constant 10 : index
    %c0_118 = arith.constant 0 : index
    %174 = vector.load %arg3[%c10_117, %c0_118] : memref<24x64xf32, #tpu.memory_space<vmem>>, vector<1x64xf32>
    %c11_119 = arith.constant 11 : index
    %c0_120 = arith.constant 0 : index
    %175 = vector.load %arg3[%c11_119, %c0_120] : memref<24x64xf32, #tpu.memory_space<vmem>>, vector<1x64xf32>
    %cst_121 = arith.constant dense<0.000000e+00> : vector<8xf32>
    %176 = vector.multi_reduction <add>, %173, %cst_121 [1] : vector<8x64xf32> to vector<8xf32>
    %177 = vector.shape_cast %176 : vector<8xf32> to vector<8x1xf32>
    %cst_122 = arith.constant 6.400000e+01 : f32
    %178 = vector.broadcast %cst_122 : f32 to vector<8x1xf32>
    %179 = arith.divf %177, %178 : vector<8x1xf32>
    %180 = vector.broadcast %179 : vector<8x1xf32> to vector<8x64xf32>
    %181 = arith.subf %173, %180 : vector<8x64xf32>
    %182 = arith.mulf %181, %181 : vector<8x64xf32>
    %cst_123 = arith.constant dense<0.000000e+00> : vector<8xf32>
    %183 = vector.multi_reduction <add>, %182, %cst_123 [1] : vector<8x64xf32> to vector<8xf32>
    %184 = vector.shape_cast %183 : vector<8xf32> to vector<8x1xf32>
    %cst_124 = arith.constant 6.400000e+01 : f32
    %185 = vector.broadcast %cst_124 : f32 to vector<8x1xf32>
    %186 = arith.divf %184, %185 : vector<8x1xf32>
    %187 = vector.broadcast %179 : vector<8x1xf32> to vector<8x64xf32>
    %188 = arith.subf %173, %187 : vector<8x64xf32>
    %cst_125 = arith.constant 9.99999974E-6 : f32
    %189 = vector.broadcast %cst_125 : f32 to vector<8x1xf32>
    %190 = arith.addf %186, %189 : vector<8x1xf32>
    %191 = math.rsqrt %190 : vector<8x1xf32>
    %192 = vector.broadcast %191 : vector<8x1xf32> to vector<8x64xf32>
    %193 = arith.mulf %188, %192 : vector<8x64xf32>
    %194 = vector.broadcast %174 : vector<1x64xf32> to vector<8x64xf32>
    %195 = arith.mulf %193, %194 : vector<8x64xf32>
    %196 = vector.broadcast %175 : vector<1x64xf32> to vector<8x64xf32>
    %197 = arith.addf %195, %196 : vector<8x64xf32>
    %198 = arith.truncf %197 : vector<8x64xf32> to vector<8x64xbf16>
    %c0_126 = arith.constant 0 : index
    %c0_127 = arith.constant 0 : index
    %c0_128 = arith.constant 0 : index
    %199 = vector.load %arg7[%c0_126, %c0_127, %c0_128] : memref<2x64x256xbf16, #tpu.memory_space<vmem>>, vector<1x64x256xbf16>
    %200 = vector.shape_cast %199 : vector<1x64x256xbf16> to vector<64x256xbf16>
    %cst_129 = arith.constant dense<0.000000e+00> : vector<8x256xf32>
    %201 = tpu.matmul %198, %200, %cst_129 {dimension_numbers = #tpu.dot_dimension_numbers<[1], [0], [0], [1], [0, 0, 1, 1], [], []>} : vector<8x64xbf16>, vector<64x256xbf16>, vector<8x256xf32> -> vector<8x256xf32>
    %c0_130 = arith.constant 0 : index
    %c0_131 = arith.constant 0 : index
    %c0_132 = arith.constant 0 : index
    %202 = vector.load %arg8[%c0_130, %c0_131, %c0_132] : memref<2x1x256xf32, #tpu.memory_space<vmem>>, vector<1x1x256xf32>
    %203 = vector.shape_cast %202 : vector<1x1x256xf32> to vector<1x256xf32>
    %204 = vector.broadcast %203 : vector<1x256xf32> to vector<8x256xf32>
    %205 = arith.addf %201, %204 : vector<8x256xf32>
    %cst_133 = arith.constant 0.000000e+00 : f32
    %206 = vector.broadcast %cst_133 : f32 to vector<8x256xf32>
    %207 = arith.maximumf %205, %206 : vector<8x256xf32>
    %208 = arith.truncf %207 : vector<8x256xf32> to vector<8x256xbf16>
    %c0_134 = arith.constant 0 : index
    %c0_135 = arith.constant 0 : index
    %c0_136 = arith.constant 0 : index
    %209 = vector.load %arg9[%c0_134, %c0_135, %c0_136] : memref<2x256x64xbf16, #tpu.memory_space<vmem>>, vector<1x256x64xbf16>
    %210 = vector.shape_cast %209 : vector<1x256x64xbf16> to vector<256x64xbf16>
    %cst_137 = arith.constant dense<0.000000e+00> : vector<8x64xf32>
    %211 = tpu.matmul %208, %210, %cst_137 {dimension_numbers = #tpu.dot_dimension_numbers<[1], [0], [0], [1], [0, 0, 1, 1], [], []>} : vector<8x256xbf16>, vector<256x64xbf16>, vector<8x64xf32> -> vector<8x64xf32>
    %c9_138 = arith.constant 9 : index
    %c0_139 = arith.constant 0 : index
    %212 = vector.load %arg3[%c9_138, %c0_139] : memref<24x64xf32, #tpu.memory_space<vmem>>, vector<1x64xf32>
    %213 = vector.broadcast %212 : vector<1x64xf32> to vector<8x64xf32>
    %214 = arith.addf %211, %213 : vector<8x64xf32>
    %215 = arith.addf %197, %214 : vector<8x64xf32>
    %c12 = arith.constant 12 : index
    %c0_140 = arith.constant 0 : index
    %216 = vector.load %arg3[%c12, %c0_140] : memref<24x64xf32, #tpu.memory_space<vmem>>, vector<1x64xf32>
    %c13 = arith.constant 13 : index
    %c0_141 = arith.constant 0 : index
    %217 = vector.load %arg3[%c13, %c0_141] : memref<24x64xf32, #tpu.memory_space<vmem>>, vector<1x64xf32>
    %cst_142 = arith.constant dense<0.000000e+00> : vector<8xf32>
    %218 = vector.multi_reduction <add>, %215, %cst_142 [1] : vector<8x64xf32> to vector<8xf32>
    %219 = vector.shape_cast %218 : vector<8xf32> to vector<8x1xf32>
    %cst_143 = arith.constant 6.400000e+01 : f32
    %220 = vector.broadcast %cst_143 : f32 to vector<8x1xf32>
    %221 = arith.divf %219, %220 : vector<8x1xf32>
    %222 = vector.broadcast %221 : vector<8x1xf32> to vector<8x64xf32>
    %223 = arith.subf %215, %222 : vector<8x64xf32>
    %224 = arith.mulf %223, %223 : vector<8x64xf32>
    %cst_144 = arith.constant dense<0.000000e+00> : vector<8xf32>
    %225 = vector.multi_reduction <add>, %224, %cst_144 [1] : vector<8x64xf32> to vector<8xf32>
    %226 = vector.shape_cast %225 : vector<8xf32> to vector<8x1xf32>
    %cst_145 = arith.constant 6.400000e+01 : f32
    %227 = vector.broadcast %cst_145 : f32 to vector<8x1xf32>
    %228 = arith.divf %226, %227 : vector<8x1xf32>
    %229 = vector.broadcast %221 : vector<8x1xf32> to vector<8x64xf32>
    %230 = arith.subf %215, %229 : vector<8x64xf32>
    %cst_146 = arith.constant 9.99999974E-6 : f32
    %231 = vector.broadcast %cst_146 : f32 to vector<8x1xf32>
    %232 = arith.addf %228, %231 : vector<8x1xf32>
    %233 = math.rsqrt %232 : vector<8x1xf32>
    %234 = vector.broadcast %233 : vector<8x1xf32> to vector<8x64xf32>
    %235 = arith.mulf %230, %234 : vector<8x64xf32>
    %236 = vector.broadcast %216 : vector<1x64xf32> to vector<8x64xf32>
    %237 = arith.mulf %235, %236 : vector<8x64xf32>
    %238 = vector.broadcast %217 : vector<1x64xf32> to vector<8x64xf32>
    %239 = arith.addf %237, %238 : vector<8x64xf32>
    %240 = arith.truncf %239 : vector<8x64xf32> to vector<8x64xbf16>
    %c12_147 = arith.constant 12 : index
    %c0_148 = arith.constant 0 : index
    %c0_149 = arith.constant 0 : index
    %241 = vector.load %arg4[%c12_147, %c0_148, %c0_149] : memref<24x64x16xbf16, #tpu.memory_space<vmem>>, vector<1x64x16xbf16>
    %242 = vector.shape_cast %241 : vector<1x64x16xbf16> to vector<64x16xbf16>
    %cst_150 = arith.constant dense<0.000000e+00> : vector<8x16xf32>
    %243 = tpu.matmul %240, %242, %cst_150 {dimension_numbers = #tpu.dot_dimension_numbers<[1], [0], [0], [1], [0, 0, 1, 1], [], []>} : vector<8x64xbf16>, vector<64x16xbf16>, vector<8x16xf32> -> vector<8x16xf32>
    %c12_151 = arith.constant 12 : index
    %c0_152 = arith.constant 0 : index
    %c0_153 = arith.constant 0 : index
    %244 = vector.load %arg5[%c12_151, %c0_152, %c0_153] : memref<24x1x16xf32, #tpu.memory_space<vmem>>, vector<1x1x16xf32>
    %245 = vector.shape_cast %244 : vector<1x1x16xf32> to vector<1x16xf32>
    %246 = vector.broadcast %245 : vector<1x16xf32> to vector<8x16xf32>
    %247 = arith.addf %243, %246 : vector<8x16xf32>
    %c16 = arith.constant 16 : index
    %c0_154 = arith.constant 0 : index
    %c0_155 = arith.constant 0 : index
    %248 = vector.load %arg4[%c16, %c0_154, %c0_155] : memref<24x64x16xbf16, #tpu.memory_space<vmem>>, vector<1x64x16xbf16>
    %249 = vector.shape_cast %248 : vector<1x64x16xbf16> to vector<64x16xbf16>
    %cst_156 = arith.constant dense<0.000000e+00> : vector<8x16xf32>
    %250 = tpu.matmul %240, %249, %cst_156 {dimension_numbers = #tpu.dot_dimension_numbers<[1], [0], [0], [1], [0, 0, 1, 1], [], []>} : vector<8x64xbf16>, vector<64x16xbf16>, vector<8x16xf32> -> vector<8x16xf32>
    %c16_157 = arith.constant 16 : index
    %c0_158 = arith.constant 0 : index
    %c0_159 = arith.constant 0 : index
    %251 = vector.load %arg5[%c16_157, %c0_158, %c0_159] : memref<24x1x16xf32, #tpu.memory_space<vmem>>, vector<1x1x16xf32>
    %252 = vector.shape_cast %251 : vector<1x1x16xf32> to vector<1x16xf32>
    %253 = vector.broadcast %252 : vector<1x16xf32> to vector<8x16xf32>
    %254 = arith.addf %250, %253 : vector<8x16xf32>
    %c20 = arith.constant 20 : index
    %c0_160 = arith.constant 0 : index
    %c0_161 = arith.constant 0 : index
    %255 = vector.load %arg4[%c20, %c0_160, %c0_161] : memref<24x64x16xbf16, #tpu.memory_space<vmem>>, vector<1x64x16xbf16>
    %256 = vector.shape_cast %255 : vector<1x64x16xbf16> to vector<64x16xbf16>
    %cst_162 = arith.constant dense<0.000000e+00> : vector<8x16xf32>
    %257 = tpu.matmul %240, %256, %cst_162 {dimension_numbers = #tpu.dot_dimension_numbers<[1], [0], [0], [1], [0, 0, 1, 1], [], []>} : vector<8x64xbf16>, vector<64x16xbf16>, vector<8x16xf32> -> vector<8x16xf32>
    %c20_163 = arith.constant 20 : index
    %c0_164 = arith.constant 0 : index
    %c0_165 = arith.constant 0 : index
    %258 = vector.load %arg5[%c20_163, %c0_164, %c0_165] : memref<24x1x16xf32, #tpu.memory_space<vmem>>, vector<1x1x16xf32>
    %259 = vector.shape_cast %258 : vector<1x1x16xf32> to vector<1x16xf32>
    %260 = vector.broadcast %259 : vector<1x16xf32> to vector<8x16xf32>
    %261 = arith.addf %257, %260 : vector<8x16xf32>
    %262 = tpu.transpose %254, [1, 0] : vector<8x16xf32> -> vector<16x8xf32>
    %cst_166 = arith.constant dense<0.000000e+00> : vector<8x8xf32>
    %263 = tpu.matmul %247, %262, %cst_166 {dimension_numbers = #tpu.dot_dimension_numbers<[1], [0], [0], [1], [0, 0, 1, 1], [], []>} : vector<8x16xf32>, vector<16x8xf32>, vector<8x8xf32> -> vector<8x8xf32>
    %cst_167 = arith.constant 2.500000e-01 : f32
    %264 = vector.broadcast %cst_167 : f32 to vector<8x8xf32>
    %265 = arith.mulf %263, %264 : vector<8x8xf32>
    %cst_168 = arith.constant dense<0xFF800000> : vector<8xf32>
    %266 = vector.multi_reduction <maximumf>, %265, %cst_168 [1] : vector<8x8xf32> to vector<8xf32>
    %267 = vector.shape_cast %266 : vector<8xf32> to vector<8x1xf32>
    %268 = vector.broadcast %267 : vector<8x1xf32> to vector<8x8xf32>
    %269 = arith.subf %265, %268 : vector<8x8xf32>
    %270 = math.exp %269 : vector<8x8xf32>
    %cst_169 = arith.constant dense<0.000000e+00> : vector<8xf32>
    %271 = vector.multi_reduction <add>, %270, %cst_169 [1] : vector<8x8xf32> to vector<8xf32>
    %272 = vector.shape_cast %271 : vector<8xf32> to vector<8x1xf32>
    %273 = tpu.reciprocal %272 {approx = true} : vector<8x1xf32> -> vector<8x1xf32>
    %274 = vector.broadcast %273 : vector<8x1xf32> to vector<8x8xf32>
    %275 = arith.mulf %270, %274 : vector<8x8xf32>
    %cst_170 = arith.constant dense<0.000000e+00> : vector<8x16xf32>
    %276 = tpu.matmul %275, %261, %cst_170 {dimension_numbers = #tpu.dot_dimension_numbers<[1], [0], [0], [1], [0, 0, 1, 1], [], []>} : vector<8x8xf32>, vector<8x16xf32>, vector<8x16xf32> -> vector<8x16xf32>
    %277 = arith.truncf %276 : vector<8x16xf32> to vector<8x16xbf16>
    %c4_171 = arith.constant 4 : index
    %c0_172 = arith.constant 0 : index
    %c0_173 = arith.constant 0 : index
    %278 = vector.load %arg6[%c4_171, %c0_172, %c0_173] : memref<8x16x64xbf16, #tpu.memory_space<vmem>>, vector<1x16x64xbf16>
    %279 = vector.shape_cast %278 : vector<1x16x64xbf16> to vector<16x64xbf16>
    %cst_174 = arith.constant dense<0.000000e+00> : vector<8x64xf32>
    %280 = tpu.matmul %277, %279, %cst_174 {dimension_numbers = #tpu.dot_dimension_numbers<[1], [0], [0], [1], [0, 0, 1, 1], [], []>} : vector<8x16xbf16>, vector<16x64xbf16>, vector<8x64xf32> -> vector<8x64xf32>
    %c13_175 = arith.constant 13 : index
    %c0_176 = arith.constant 0 : index
    %c0_177 = arith.constant 0 : index
    %281 = vector.load %arg4[%c13_175, %c0_176, %c0_177] : memref<24x64x16xbf16, #tpu.memory_space<vmem>>, vector<1x64x16xbf16>
    %282 = vector.shape_cast %281 : vector<1x64x16xbf16> to vector<64x16xbf16>
    %cst_178 = arith.constant dense<0.000000e+00> : vector<8x16xf32>
    %283 = tpu.matmul %240, %282, %cst_178 {dimension_numbers = #tpu.dot_dimension_numbers<[1], [0], [0], [1], [0, 0, 1, 1], [], []>} : vector<8x64xbf16>, vector<64x16xbf16>, vector<8x16xf32> -> vector<8x16xf32>
    %c13_179 = arith.constant 13 : index
    %c0_180 = arith.constant 0 : index
    %c0_181 = arith.constant 0 : index
    %284 = vector.load %arg5[%c13_179, %c0_180, %c0_181] : memref<24x1x16xf32, #tpu.memory_space<vmem>>, vector<1x1x16xf32>
    %285 = vector.shape_cast %284 : vector<1x1x16xf32> to vector<1x16xf32>
    %286 = vector.broadcast %285 : vector<1x16xf32> to vector<8x16xf32>
    %287 = arith.addf %283, %286 : vector<8x16xf32>
    %c17 = arith.constant 17 : index
    %c0_182 = arith.constant 0 : index
    %c0_183 = arith.constant 0 : index
    %288 = vector.load %arg4[%c17, %c0_182, %c0_183] : memref<24x64x16xbf16, #tpu.memory_space<vmem>>, vector<1x64x16xbf16>
    %289 = vector.shape_cast %288 : vector<1x64x16xbf16> to vector<64x16xbf16>
    %cst_184 = arith.constant dense<0.000000e+00> : vector<8x16xf32>
    %290 = tpu.matmul %240, %289, %cst_184 {dimension_numbers = #tpu.dot_dimension_numbers<[1], [0], [0], [1], [0, 0, 1, 1], [], []>} : vector<8x64xbf16>, vector<64x16xbf16>, vector<8x16xf32> -> vector<8x16xf32>
    %c17_185 = arith.constant 17 : index
    %c0_186 = arith.constant 0 : index
    %c0_187 = arith.constant 0 : index
    %291 = vector.load %arg5[%c17_185, %c0_186, %c0_187] : memref<24x1x16xf32, #tpu.memory_space<vmem>>, vector<1x1x16xf32>
    %292 = vector.shape_cast %291 : vector<1x1x16xf32> to vector<1x16xf32>
    %293 = vector.broadcast %292 : vector<1x16xf32> to vector<8x16xf32>
    %294 = arith.addf %290, %293 : vector<8x16xf32>
    %c21 = arith.constant 21 : index
    %c0_188 = arith.constant 0 : index
    %c0_189 = arith.constant 0 : index
    %295 = vector.load %arg4[%c21, %c0_188, %c0_189] : memref<24x64x16xbf16, #tpu.memory_space<vmem>>, vector<1x64x16xbf16>
    %296 = vector.shape_cast %295 : vector<1x64x16xbf16> to vector<64x16xbf16>
    %cst_190 = arith.constant dense<0.000000e+00> : vector<8x16xf32>
    %297 = tpu.matmul %240, %296, %cst_190 {dimension_numbers = #tpu.dot_dimension_numbers<[1], [0], [0], [1], [0, 0, 1, 1], [], []>} : vector<8x64xbf16>, vector<64x16xbf16>, vector<8x16xf32> -> vector<8x16xf32>
    %c21_191 = arith.constant 21 : index
    %c0_192 = arith.constant 0 : index
    %c0_193 = arith.constant 0 : index
    %298 = vector.load %arg5[%c21_191, %c0_192, %c0_193] : memref<24x1x16xf32, #tpu.memory_space<vmem>>, vector<1x1x16xf32>
    %299 = vector.shape_cast %298 : vector<1x1x16xf32> to vector<1x16xf32>
    %300 = vector.broadcast %299 : vector<1x16xf32> to vector<8x16xf32>
    %301 = arith.addf %297, %300 : vector<8x16xf32>
    %302 = tpu.transpose %294, [1, 0] : vector<8x16xf32> -> vector<16x8xf32>
    %cst_194 = arith.constant dense<0.000000e+00> : vector<8x8xf32>
    %303 = tpu.matmul %287, %302, %cst_194 {dimension_numbers = #tpu.dot_dimension_numbers<[1], [0], [0], [1], [0, 0, 1, 1], [], []>} : vector<8x16xf32>, vector<16x8xf32>, vector<8x8xf32> -> vector<8x8xf32>
    %cst_195 = arith.constant 2.500000e-01 : f32
    %304 = vector.broadcast %cst_195 : f32 to vector<8x8xf32>
    %305 = arith.mulf %303, %304 : vector<8x8xf32>
    %cst_196 = arith.constant dense<0xFF800000> : vector<8xf32>
    %306 = vector.multi_reduction <maximumf>, %305, %cst_196 [1] : vector<8x8xf32> to vector<8xf32>
    %307 = vector.shape_cast %306 : vector<8xf32> to vector<8x1xf32>
    %308 = vector.broadcast %307 : vector<8x1xf32> to vector<8x8xf32>
    %309 = arith.subf %305, %308 : vector<8x8xf32>
    %310 = math.exp %309 : vector<8x8xf32>
    %cst_197 = arith.constant dense<0.000000e+00> : vector<8xf32>
    %311 = vector.multi_reduction <add>, %310, %cst_197 [1] : vector<8x8xf32> to vector<8xf32>
    %312 = vector.shape_cast %311 : vector<8xf32> to vector<8x1xf32>
    %313 = tpu.reciprocal %312 {approx = true} : vector<8x1xf32> -> vector<8x1xf32>
    %314 = vector.broadcast %313 : vector<8x1xf32> to vector<8x8xf32>
    %315 = arith.mulf %310, %314 : vector<8x8xf32>
    %cst_198 = arith.constant dense<0.000000e+00> : vector<8x16xf32>
    %316 = tpu.matmul %315, %301, %cst_198 {dimension_numbers = #tpu.dot_dimension_numbers<[1], [0], [0], [1], [0, 0, 1, 1], [], []>} : vector<8x8xf32>, vector<8x16xf32>, vector<8x16xf32> -> vector<8x16xf32>
    %317 = arith.truncf %316 : vector<8x16xf32> to vector<8x16xbf16>
    %c5_199 = arith.constant 5 : index
    %c0_200 = arith.constant 0 : index
    %c0_201 = arith.constant 0 : index
    %318 = vector.load %arg6[%c5_199, %c0_200, %c0_201] : memref<8x16x64xbf16, #tpu.memory_space<vmem>>, vector<1x16x64xbf16>
    %319 = vector.shape_cast %318 : vector<1x16x64xbf16> to vector<16x64xbf16>
    %cst_202 = arith.constant dense<0.000000e+00> : vector<8x64xf32>
    %320 = tpu.matmul %317, %319, %cst_202 {dimension_numbers = #tpu.dot_dimension_numbers<[1], [0], [0], [1], [0, 0, 1, 1], [], []>} : vector<8x16xbf16>, vector<16x64xbf16>, vector<8x64xf32> -> vector<8x64xf32>
    %321 = arith.addf %280, %320 : vector<8x64xf32>
    %c14 = arith.constant 14 : index
    %c0_203 = arith.constant 0 : index
    %c0_204 = arith.constant 0 : index
    %322 = vector.load %arg4[%c14, %c0_203, %c0_204] : memref<24x64x16xbf16, #tpu.memory_space<vmem>>, vector<1x64x16xbf16>
    %323 = vector.shape_cast %322 : vector<1x64x16xbf16> to vector<64x16xbf16>
    %cst_205 = arith.constant dense<0.000000e+00> : vector<8x16xf32>
    %324 = tpu.matmul %240, %323, %cst_205 {dimension_numbers = #tpu.dot_dimension_numbers<[1], [0], [0], [1], [0, 0, 1, 1], [], []>} : vector<8x64xbf16>, vector<64x16xbf16>, vector<8x16xf32> -> vector<8x16xf32>
    %c14_206 = arith.constant 14 : index
    %c0_207 = arith.constant 0 : index
    %c0_208 = arith.constant 0 : index
    %325 = vector.load %arg5[%c14_206, %c0_207, %c0_208] : memref<24x1x16xf32, #tpu.memory_space<vmem>>, vector<1x1x16xf32>
    %326 = vector.shape_cast %325 : vector<1x1x16xf32> to vector<1x16xf32>
    %327 = vector.broadcast %326 : vector<1x16xf32> to vector<8x16xf32>
    %328 = arith.addf %324, %327 : vector<8x16xf32>
    %c18 = arith.constant 18 : index
    %c0_209 = arith.constant 0 : index
    %c0_210 = arith.constant 0 : index
    %329 = vector.load %arg4[%c18, %c0_209, %c0_210] : memref<24x64x16xbf16, #tpu.memory_space<vmem>>, vector<1x64x16xbf16>
    %330 = vector.shape_cast %329 : vector<1x64x16xbf16> to vector<64x16xbf16>
    %cst_211 = arith.constant dense<0.000000e+00> : vector<8x16xf32>
    %331 = tpu.matmul %240, %330, %cst_211 {dimension_numbers = #tpu.dot_dimension_numbers<[1], [0], [0], [1], [0, 0, 1, 1], [], []>} : vector<8x64xbf16>, vector<64x16xbf16>, vector<8x16xf32> -> vector<8x16xf32>
    %c18_212 = arith.constant 18 : index
    %c0_213 = arith.constant 0 : index
    %c0_214 = arith.constant 0 : index
    %332 = vector.load %arg5[%c18_212, %c0_213, %c0_214] : memref<24x1x16xf32, #tpu.memory_space<vmem>>, vector<1x1x16xf32>
    %333 = vector.shape_cast %332 : vector<1x1x16xf32> to vector<1x16xf32>
    %334 = vector.broadcast %333 : vector<1x16xf32> to vector<8x16xf32>
    %335 = arith.addf %331, %334 : vector<8x16xf32>
    %c22 = arith.constant 22 : index
    %c0_215 = arith.constant 0 : index
    %c0_216 = arith.constant 0 : index
    %336 = vector.load %arg4[%c22, %c0_215, %c0_216] : memref<24x64x16xbf16, #tpu.memory_space<vmem>>, vector<1x64x16xbf16>
    %337 = vector.shape_cast %336 : vector<1x64x16xbf16> to vector<64x16xbf16>
    %cst_217 = arith.constant dense<0.000000e+00> : vector<8x16xf32>
    %338 = tpu.matmul %240, %337, %cst_217 {dimension_numbers = #tpu.dot_dimension_numbers<[1], [0], [0], [1], [0, 0, 1, 1], [], []>} : vector<8x64xbf16>, vector<64x16xbf16>, vector<8x16xf32> -> vector<8x16xf32>
    %c22_218 = arith.constant 22 : index
    %c0_219 = arith.constant 0 : index
    %c0_220 = arith.constant 0 : index
    %339 = vector.load %arg5[%c22_218, %c0_219, %c0_220] : memref<24x1x16xf32, #tpu.memory_space<vmem>>, vector<1x1x16xf32>
    %340 = vector.shape_cast %339 : vector<1x1x16xf32> to vector<1x16xf32>
    %341 = vector.broadcast %340 : vector<1x16xf32> to vector<8x16xf32>
    %342 = arith.addf %338, %341 : vector<8x16xf32>
    %343 = tpu.transpose %335, [1, 0] : vector<8x16xf32> -> vector<16x8xf32>
    %cst_221 = arith.constant dense<0.000000e+00> : vector<8x8xf32>
    %344 = tpu.matmul %328, %343, %cst_221 {dimension_numbers = #tpu.dot_dimension_numbers<[1], [0], [0], [1], [0, 0, 1, 1], [], []>} : vector<8x16xf32>, vector<16x8xf32>, vector<8x8xf32> -> vector<8x8xf32>
    %cst_222 = arith.constant 2.500000e-01 : f32
    %345 = vector.broadcast %cst_222 : f32 to vector<8x8xf32>
    %346 = arith.mulf %344, %345 : vector<8x8xf32>
    %cst_223 = arith.constant dense<0xFF800000> : vector<8xf32>
    %347 = vector.multi_reduction <maximumf>, %346, %cst_223 [1] : vector<8x8xf32> to vector<8xf32>
    %348 = vector.shape_cast %347 : vector<8xf32> to vector<8x1xf32>
    %349 = vector.broadcast %348 : vector<8x1xf32> to vector<8x8xf32>
    %350 = arith.subf %346, %349 : vector<8x8xf32>
    %351 = math.exp %350 : vector<8x8xf32>
    %cst_224 = arith.constant dense<0.000000e+00> : vector<8xf32>
    %352 = vector.multi_reduction <add>, %351, %cst_224 [1] : vector<8x8xf32> to vector<8xf32>
    %353 = vector.shape_cast %352 : vector<8xf32> to vector<8x1xf32>
    %354 = tpu.reciprocal %353 {approx = true} : vector<8x1xf32> -> vector<8x1xf32>
    %355 = vector.broadcast %354 : vector<8x1xf32> to vector<8x8xf32>
    %356 = arith.mulf %351, %355 : vector<8x8xf32>
    %cst_225 = arith.constant dense<0.000000e+00> : vector<8x16xf32>
    %357 = tpu.matmul %356, %342, %cst_225 {dimension_numbers = #tpu.dot_dimension_numbers<[1], [0], [0], [1], [0, 0, 1, 1], [], []>} : vector<8x8xf32>, vector<8x16xf32>, vector<8x16xf32> -> vector<8x16xf32>
    %358 = arith.truncf %357 : vector<8x16xf32> to vector<8x16xbf16>
    %c6_226 = arith.constant 6 : index
    %c0_227 = arith.constant 0 : index
    %c0_228 = arith.constant 0 : index
    %359 = vector.load %arg6[%c6_226, %c0_227, %c0_228] : memref<8x16x64xbf16, #tpu.memory_space<vmem>>, vector<1x16x64xbf16>
    %360 = vector.shape_cast %359 : vector<1x16x64xbf16> to vector<16x64xbf16>
    %cst_229 = arith.constant dense<0.000000e+00> : vector<8x64xf32>
    %361 = tpu.matmul %358, %360, %cst_229 {dimension_numbers = #tpu.dot_dimension_numbers<[1], [0], [0], [1], [0, 0, 1, 1], [], []>} : vector<8x16xbf16>, vector<16x64xbf16>, vector<8x64xf32> -> vector<8x64xf32>
    %362 = arith.addf %321, %361 : vector<8x64xf32>
    %c15 = arith.constant 15 : index
    %c0_230 = arith.constant 0 : index
    %c0_231 = arith.constant 0 : index
    %363 = vector.load %arg4[%c15, %c0_230, %c0_231] : memref<24x64x16xbf16, #tpu.memory_space<vmem>>, vector<1x64x16xbf16>
    %364 = vector.shape_cast %363 : vector<1x64x16xbf16> to vector<64x16xbf16>
    %cst_232 = arith.constant dense<0.000000e+00> : vector<8x16xf32>
    %365 = tpu.matmul %240, %364, %cst_232 {dimension_numbers = #tpu.dot_dimension_numbers<[1], [0], [0], [1], [0, 0, 1, 1], [], []>} : vector<8x64xbf16>, vector<64x16xbf16>, vector<8x16xf32> -> vector<8x16xf32>
    %c15_233 = arith.constant 15 : index
    %c0_234 = arith.constant 0 : index
    %c0_235 = arith.constant 0 : index
    %366 = vector.load %arg5[%c15_233, %c0_234, %c0_235] : memref<24x1x16xf32, #tpu.memory_space<vmem>>, vector<1x1x16xf32>
    %367 = vector.shape_cast %366 : vector<1x1x16xf32> to vector<1x16xf32>
    %368 = vector.broadcast %367 : vector<1x16xf32> to vector<8x16xf32>
    %369 = arith.addf %365, %368 : vector<8x16xf32>
    %c19 = arith.constant 19 : index
    %c0_236 = arith.constant 0 : index
    %c0_237 = arith.constant 0 : index
    %370 = vector.load %arg4[%c19, %c0_236, %c0_237] : memref<24x64x16xbf16, #tpu.memory_space<vmem>>, vector<1x64x16xbf16>
    %371 = vector.shape_cast %370 : vector<1x64x16xbf16> to vector<64x16xbf16>
    %cst_238 = arith.constant dense<0.000000e+00> : vector<8x16xf32>
    %372 = tpu.matmul %240, %371, %cst_238 {dimension_numbers = #tpu.dot_dimension_numbers<[1], [0], [0], [1], [0, 0, 1, 1], [], []>} : vector<8x64xbf16>, vector<64x16xbf16>, vector<8x16xf32> -> vector<8x16xf32>
    %c19_239 = arith.constant 19 : index
    %c0_240 = arith.constant 0 : index
    %c0_241 = arith.constant 0 : index
    %373 = vector.load %arg5[%c19_239, %c0_240, %c0_241] : memref<24x1x16xf32, #tpu.memory_space<vmem>>, vector<1x1x16xf32>
    %374 = vector.shape_cast %373 : vector<1x1x16xf32> to vector<1x16xf32>
    %375 = vector.broadcast %374 : vector<1x16xf32> to vector<8x16xf32>
    %376 = arith.addf %372, %375 : vector<8x16xf32>
    %c23 = arith.constant 23 : index
    %c0_242 = arith.constant 0 : index
    %c0_243 = arith.constant 0 : index
    %377 = vector.load %arg4[%c23, %c0_242, %c0_243] : memref<24x64x16xbf16, #tpu.memory_space<vmem>>, vector<1x64x16xbf16>
    %378 = vector.shape_cast %377 : vector<1x64x16xbf16> to vector<64x16xbf16>
    %cst_244 = arith.constant dense<0.000000e+00> : vector<8x16xf32>
    %379 = tpu.matmul %240, %378, %cst_244 {dimension_numbers = #tpu.dot_dimension_numbers<[1], [0], [0], [1], [0, 0, 1, 1], [], []>} : vector<8x64xbf16>, vector<64x16xbf16>, vector<8x16xf32> -> vector<8x16xf32>
    %c23_245 = arith.constant 23 : index
    %c0_246 = arith.constant 0 : index
    %c0_247 = arith.constant 0 : index
    %380 = vector.load %arg5[%c23_245, %c0_246, %c0_247] : memref<24x1x16xf32, #tpu.memory_space<vmem>>, vector<1x1x16xf32>
    %381 = vector.shape_cast %380 : vector<1x1x16xf32> to vector<1x16xf32>
    %382 = vector.broadcast %381 : vector<1x16xf32> to vector<8x16xf32>
    %383 = arith.addf %379, %382 : vector<8x16xf32>
    %384 = tpu.transpose %376, [1, 0] : vector<8x16xf32> -> vector<16x8xf32>
    %cst_248 = arith.constant dense<0.000000e+00> : vector<8x8xf32>
    %385 = tpu.matmul %369, %384, %cst_248 {dimension_numbers = #tpu.dot_dimension_numbers<[1], [0], [0], [1], [0, 0, 1, 1], [], []>} : vector<8x16xf32>, vector<16x8xf32>, vector<8x8xf32> -> vector<8x8xf32>
    %cst_249 = arith.constant 2.500000e-01 : f32
    %386 = vector.broadcast %cst_249 : f32 to vector<8x8xf32>
    %387 = arith.mulf %385, %386 : vector<8x8xf32>
    %cst_250 = arith.constant dense<0xFF800000> : vector<8xf32>
    %388 = vector.multi_reduction <maximumf>, %387, %cst_250 [1] : vector<8x8xf32> to vector<8xf32>
    %389 = vector.shape_cast %388 : vector<8xf32> to vector<8x1xf32>
    %390 = vector.broadcast %389 : vector<8x1xf32> to vector<8x8xf32>
    %391 = arith.subf %387, %390 : vector<8x8xf32>
    %392 = math.exp %391 : vector<8x8xf32>
    %cst_251 = arith.constant dense<0.000000e+00> : vector<8xf32>
    %393 = vector.multi_reduction <add>, %392, %cst_251 [1] : vector<8x8xf32> to vector<8xf32>
    %394 = vector.shape_cast %393 : vector<8xf32> to vector<8x1xf32>
    %395 = tpu.reciprocal %394 {approx = true} : vector<8x1xf32> -> vector<8x1xf32>
    %396 = vector.broadcast %395 : vector<8x1xf32> to vector<8x8xf32>
    %397 = arith.mulf %392, %396 : vector<8x8xf32>
    %cst_252 = arith.constant dense<0.000000e+00> : vector<8x16xf32>
    %398 = tpu.matmul %397, %383, %cst_252 {dimension_numbers = #tpu.dot_dimension_numbers<[1], [0], [0], [1], [0, 0, 1, 1], [], []>} : vector<8x8xf32>, vector<8x16xf32>, vector<8x16xf32> -> vector<8x16xf32>
    %399 = arith.truncf %398 : vector<8x16xf32> to vector<8x16xbf16>
    %c7_253 = arith.constant 7 : index
    %c0_254 = arith.constant 0 : index
    %c0_255 = arith.constant 0 : index
    %400 = vector.load %arg6[%c7_253, %c0_254, %c0_255] : memref<8x16x64xbf16, #tpu.memory_space<vmem>>, vector<1x16x64xbf16>
    %401 = vector.shape_cast %400 : vector<1x16x64xbf16> to vector<16x64xbf16>
    %cst_256 = arith.constant dense<0.000000e+00> : vector<8x64xf32>
    %402 = tpu.matmul %399, %401, %cst_256 {dimension_numbers = #tpu.dot_dimension_numbers<[1], [0], [0], [1], [0, 0, 1, 1], [], []>} : vector<8x16xbf16>, vector<16x64xbf16>, vector<8x64xf32> -> vector<8x64xf32>
    %403 = arith.addf %362, %402 : vector<8x64xf32>
    %c14_257 = arith.constant 14 : index
    %c0_258 = arith.constant 0 : index
    %404 = vector.load %arg3[%c14_257, %c0_258] : memref<24x64xf32, #tpu.memory_space<vmem>>, vector<1x64xf32>
    %405 = vector.broadcast %404 : vector<1x64xf32> to vector<8x64xf32>
    %406 = arith.addf %403, %405 : vector<8x64xf32>
    %407 = arith.addf %239, %406 : vector<8x64xf32>
    %c16_259 = arith.constant 16 : index
    %c0_260 = arith.constant 0 : index
    %408 = vector.load %arg3[%c16_259, %c0_260] : memref<24x64xf32, #tpu.memory_space<vmem>>, vector<1x64xf32>
    %c17_261 = arith.constant 17 : index
    %c0_262 = arith.constant 0 : index
    %409 = vector.load %arg3[%c17_261, %c0_262] : memref<24x64xf32, #tpu.memory_space<vmem>>, vector<1x64xf32>
    %cst_263 = arith.constant dense<0.000000e+00> : vector<8xf32>
    %410 = vector.multi_reduction <add>, %407, %cst_263 [1] : vector<8x64xf32> to vector<8xf32>
    %411 = vector.shape_cast %410 : vector<8xf32> to vector<8x1xf32>
    %cst_264 = arith.constant 6.400000e+01 : f32
    %412 = vector.broadcast %cst_264 : f32 to vector<8x1xf32>
    %413 = arith.divf %411, %412 : vector<8x1xf32>
    %414 = vector.broadcast %413 : vector<8x1xf32> to vector<8x64xf32>
    %415 = arith.subf %407, %414 : vector<8x64xf32>
    %416 = arith.mulf %415, %415 : vector<8x64xf32>
    %cst_265 = arith.constant dense<0.000000e+00> : vector<8xf32>
    %417 = vector.multi_reduction <add>, %416, %cst_265 [1] : vector<8x64xf32> to vector<8xf32>
    %418 = vector.shape_cast %417 : vector<8xf32> to vector<8x1xf32>
    %cst_266 = arith.constant 6.400000e+01 : f32
    %419 = vector.broadcast %cst_266 : f32 to vector<8x1xf32>
    %420 = arith.divf %418, %419 : vector<8x1xf32>
    %421 = vector.broadcast %413 : vector<8x1xf32> to vector<8x64xf32>
    %422 = arith.subf %407, %421 : vector<8x64xf32>
    %cst_267 = arith.constant 9.99999974E-6 : f32
    %423 = vector.broadcast %cst_267 : f32 to vector<8x1xf32>
    %424 = arith.addf %420, %423 : vector<8x1xf32>
    %425 = math.rsqrt %424 : vector<8x1xf32>
    %426 = vector.broadcast %425 : vector<8x1xf32> to vector<8x64xf32>
    %427 = arith.mulf %422, %426 : vector<8x64xf32>
    %428 = vector.broadcast %408 : vector<1x64xf32> to vector<8x64xf32>
    %429 = arith.mulf %427, %428 : vector<8x64xf32>
    %430 = vector.broadcast %409 : vector<1x64xf32> to vector<8x64xf32>
    %431 = arith.addf %429, %430 : vector<8x64xf32>
    %432 = arith.truncf %431 : vector<8x64xf32> to vector<8x64xbf16>
    %c1_268 = arith.constant 1 : index
    %c0_269 = arith.constant 0 : index
    %c0_270 = arith.constant 0 : index
    %433 = vector.load %arg7[%c1_268, %c0_269, %c0_270] : memref<2x64x256xbf16, #tpu.memory_space<vmem>>, vector<1x64x256xbf16>
    %434 = vector.shape_cast %433 : vector<1x64x256xbf16> to vector<64x256xbf16>
    %cst_271 = arith.constant dense<0.000000e+00> : vector<8x256xf32>
    %435 = tpu.matmul %432, %434, %cst_271 {dimension_numbers = #tpu.dot_dimension_numbers<[1], [0], [0], [1], [0, 0, 1, 1], [], []>} : vector<8x64xbf16>, vector<64x256xbf16>, vector<8x256xf32> -> vector<8x256xf32>
    %c1_272 = arith.constant 1 : index
    %c0_273 = arith.constant 0 : index
    %c0_274 = arith.constant 0 : index
    %436 = vector.load %arg8[%c1_272, %c0_273, %c0_274] : memref<2x1x256xf32, #tpu.memory_space<vmem>>, vector<1x1x256xf32>
    %437 = vector.shape_cast %436 : vector<1x1x256xf32> to vector<1x256xf32>
    %438 = vector.broadcast %437 : vector<1x256xf32> to vector<8x256xf32>
    %439 = arith.addf %435, %438 : vector<8x256xf32>
    %cst_275 = arith.constant 0.000000e+00 : f32
    %440 = vector.broadcast %cst_275 : f32 to vector<8x256xf32>
    %441 = arith.maximumf %439, %440 : vector<8x256xf32>
    %442 = arith.truncf %441 : vector<8x256xf32> to vector<8x256xbf16>
    %c1_276 = arith.constant 1 : index
    %c0_277 = arith.constant 0 : index
    %c0_278 = arith.constant 0 : index
    %443 = vector.load %arg9[%c1_276, %c0_277, %c0_278] : memref<2x256x64xbf16, #tpu.memory_space<vmem>>, vector<1x256x64xbf16>
    %444 = vector.shape_cast %443 : vector<1x256x64xbf16> to vector<256x64xbf16>
    %cst_279 = arith.constant dense<0.000000e+00> : vector<8x64xf32>
    %445 = tpu.matmul %442, %444, %cst_279 {dimension_numbers = #tpu.dot_dimension_numbers<[1], [0], [0], [1], [0, 0, 1, 1], [], []>} : vector<8x256xbf16>, vector<256x64xbf16>, vector<8x64xf32> -> vector<8x64xf32>
    %c15_280 = arith.constant 15 : index
    %c0_281 = arith.constant 0 : index
    %446 = vector.load %arg3[%c15_280, %c0_281] : memref<24x64xf32, #tpu.memory_space<vmem>>, vector<1x64xf32>
    %447 = vector.broadcast %446 : vector<1x64xf32> to vector<8x64xf32>
    %448 = arith.addf %445, %447 : vector<8x64xf32>
    %449 = arith.addf %431, %448 : vector<8x64xf32>
    %c18_282 = arith.constant 18 : index
    %c0_283 = arith.constant 0 : index
    %450 = vector.load %arg3[%c18_282, %c0_283] : memref<24x64xf32, #tpu.memory_space<vmem>>, vector<1x64xf32>
    %c19_284 = arith.constant 19 : index
    %c0_285 = arith.constant 0 : index
    %451 = vector.load %arg3[%c19_284, %c0_285] : memref<24x64xf32, #tpu.memory_space<vmem>>, vector<1x64xf32>
    %cst_286 = arith.constant dense<0.000000e+00> : vector<8xf32>
    %452 = vector.multi_reduction <add>, %449, %cst_286 [1] : vector<8x64xf32> to vector<8xf32>
    %453 = vector.shape_cast %452 : vector<8xf32> to vector<8x1xf32>
    %cst_287 = arith.constant 6.400000e+01 : f32
    %454 = vector.broadcast %cst_287 : f32 to vector<8x1xf32>
    %455 = arith.divf %453, %454 : vector<8x1xf32>
    %456 = vector.broadcast %455 : vector<8x1xf32> to vector<8x64xf32>
    %457 = arith.subf %449, %456 : vector<8x64xf32>
    %458 = arith.mulf %457, %457 : vector<8x64xf32>
    %cst_288 = arith.constant dense<0.000000e+00> : vector<8xf32>
    %459 = vector.multi_reduction <add>, %458, %cst_288 [1] : vector<8x64xf32> to vector<8xf32>
    %460 = vector.shape_cast %459 : vector<8xf32> to vector<8x1xf32>
    %cst_289 = arith.constant 6.400000e+01 : f32
    %461 = vector.broadcast %cst_289 : f32 to vector<8x1xf32>
    %462 = arith.divf %460, %461 : vector<8x1xf32>
    %463 = vector.broadcast %455 : vector<8x1xf32> to vector<8x64xf32>
    %464 = arith.subf %449, %463 : vector<8x64xf32>
    %cst_290 = arith.constant 9.99999974E-6 : f32
    %465 = vector.broadcast %cst_290 : f32 to vector<8x1xf32>
    %466 = arith.addf %462, %465 : vector<8x1xf32>
    %467 = math.rsqrt %466 : vector<8x1xf32>
    %468 = vector.broadcast %467 : vector<8x1xf32> to vector<8x64xf32>
    %469 = arith.mulf %464, %468 : vector<8x64xf32>
    %470 = vector.broadcast %450 : vector<1x64xf32> to vector<8x64xf32>
    %471 = arith.mulf %469, %470 : vector<8x64xf32>
    %472 = vector.broadcast %451 : vector<1x64xf32> to vector<8x64xf32>
    %473 = arith.addf %471, %472 : vector<8x64xf32>
    %474 = vector.extract_strided_slice %473 {offsets = [7, 0], sizes = [1, 64], strides = [1, 1]} : vector<8x64xf32> to vector<1x64xf32>
    %c0_291 = arith.constant 0 : index
    %c0_292 = arith.constant 0 : index
    %475 = vector.load %arg10[%c0_291, %c0_292] : memref<64x64xf32, #tpu.memory_space<vmem>>, vector<64x64xf32>
    %cst_293 = arith.constant dense<0.000000e+00> : vector<1x64xf32>
    %476 = tpu.matmul %474, %475, %cst_293 {dimension_numbers = #tpu.dot_dimension_numbers<[1], [0], [0], [1], [0, 0, 1, 1], [], []>} : vector<1x64xf32>, vector<64x64xf32>, vector<1x64xf32> -> vector<1x64xf32>
    %c20_294 = arith.constant 20 : index
    %c0_295 = arith.constant 0 : index
    %477 = vector.load %arg3[%c20_294, %c0_295] : memref<24x64xf32, #tpu.memory_space<vmem>>, vector<1x64xf32>
    %478 = arith.addf %476, %477 : vector<1x64xf32>
    %cst_296 = arith.constant 0.000000e+00 : f32
    %479 = vector.broadcast %cst_296 : f32 to vector<1x64xf32>
    %480 = arith.maximumf %478, %479 : vector<1x64xf32>
    %c21_297 = arith.constant 21 : index
    %c0_298 = arith.constant 0 : index
    %481 = vector.load %arg3[%c21_297, %c0_298] : memref<24x64xf32, #tpu.memory_space<vmem>>, vector<1x64xf32>
    %482 = arith.mulf %480, %481 : vector<1x64xf32>
    %cst_299 = arith.constant dense<0.000000e+00> : vector<1xf32>
    %483 = vector.multi_reduction <add>, %482, %cst_299 [1] : vector<1x64xf32> to vector<1xf32>
    %484 = vector.shape_cast %483 : vector<1xf32> to vector<1x1xf32>
    %485 = vector.shape_cast %484 : vector<1x1xf32> to vector<1x1x1xf32>
    %c0_300 = arith.constant 0 : index
    %c0_301 = arith.constant 0 : index
    %c0_302 = arith.constant 0 : index
    %486 = vector.load %arg11[%c0_300, %c0_301, %c0_302] : memref<1x1x1xf32, #tpu.memory_space<vmem>>, vector<1x1x1xf32>
    tpu.vector_store %arg11[%c0_300, %c0_301, %c0_302], %485 {strides = array<i32>} : memref<1x1x1xf32, #tpu.memory_space<vmem>>, vector<1x1x1xf32>,
    return
  }
  func.func @transform_0(%arg0: i32) -> (i32, i32, i32) {
    %c0_i32 = arith.constant 0 : i32
    %c0_i32_0 = arith.constant 0 : i32
    %c0_i32_1 = arith.constant 0 : i32
    return %arg0, %c0_i32, %c0_i32_0 : i32, i32, i32
  }
  func.func @transform_1(%arg0: i32) -> (i32, i32) {
    %c0_i32 = arith.constant 0 : i32
    %c0_i32_0 = arith.constant 0 : i32
    %c0_i32_1 = arith.constant 0 : i32
    return %c0_i32, %c0_i32_0 : i32, i32
  }
  func.func @transform_2(%arg0: i32) -> (i32, i32) {
    %c0_i32 = arith.constant 0 : i32
    %c0_i32_0 = arith.constant 0 : i32
    %c0_i32_1 = arith.constant 0 : i32
    return %c0_i32, %c0_i32_0 : i32, i32
  }
  func.func @transform_3(%arg0: i32) -> (i32, i32, i32) {
    %c0_i32 = arith.constant 0 : i32
    %c0_i32_0 = arith.constant 0 : i32
    %c0_i32_1 = arith.constant 0 : i32
    %c0_i32_2 = arith.constant 0 : i32
    return %c0_i32, %c0_i32_0, %c0_i32_1 : i32, i32, i32
  }
  func.func @transform_4(%arg0: i32) -> (i32, i32, i32) {
    %c0_i32 = arith.constant 0 : i32
    %c0_i32_0 = arith.constant 0 : i32
    %c0_i32_1 = arith.constant 0 : i32
    %c0_i32_2 = arith.constant 0 : i32
    return %c0_i32, %c0_i32_0, %c0_i32_1 : i32, i32, i32
  }
  func.func @transform_5(%arg0: i32) -> (i32, i32, i32) {
    %c0_i32 = arith.constant 0 : i32
    %c0_i32_0 = arith.constant 0 : i32
    %c0_i32_1 = arith.constant 0 : i32
    %c0_i32_2 = arith.constant 0 : i32
    return %c0_i32, %c0_i32_0, %c0_i32_1 : i32, i32, i32
  }
  func.func @transform_6(%arg0: i32) -> (i32, i32, i32) {
    %c0_i32 = arith.constant 0 : i32
    %c0_i32_0 = arith.constant 0 : i32
    %c0_i32_1 = arith.constant 0 : i32
    %c0_i32_2 = arith.constant 0 : i32
    return %c0_i32, %c0_i32_0, %c0_i32_1 : i32, i32, i32
  }
  func.func @transform_7(%arg0: i32) -> (i32, i32, i32) {
    %c0_i32 = arith.constant 0 : i32
    %c0_i32_0 = arith.constant 0 : i32
    %c0_i32_1 = arith.constant 0 : i32
    %c0_i32_2 = arith.constant 0 : i32
    return %c0_i32, %c0_i32_0, %c0_i32_1 : i32, i32, i32
  }
  func.func @transform_8(%arg0: i32) -> (i32, i32, i32) {
    %c0_i32 = arith.constant 0 : i32
    %c0_i32_0 = arith.constant 0 : i32
    %c0_i32_1 = arith.constant 0 : i32
    %c0_i32_2 = arith.constant 0 : i32
    return %c0_i32, %c0_i32_0, %c0_i32_1 : i32, i32, i32
  }
  func.func @transform_9(%arg0: i32) -> (i32, i32) {
    %c0_i32 = arith.constant 0 : i32
    %c0_i32_0 = arith.constant 0 : i32
    %c0_i32_1 = arith.constant 0 : i32
    return %c0_i32, %c0_i32_0 : i32, i32
  }
  func.func @transform_10(%arg0: i32) -> (i32, i32, i32) {
    %c0_i32 = arith.constant 0 : i32
    %c0_i32_0 = arith.constant 0 : i32
    %c0_i32_1 = arith.constant 0 : i32
    return %arg0, %c0_i32, %c0_i32_0 : i32, i32, i32
  }
}

</mosaic_0001>

<llo_original>
// kernel: time_series_transformer.1
$region0: #{time_series_transformer.1}
  #allocation0 [shape = 'u32[]', space=smem, size = 0x4, offset = 0x4, fixed_abs, tag = 'smem constant byte address 0x4 - core index']
  #allocation1 [shape = 'u32[144,128]{1,0:T(1,128)}', space=vmem, size = 0x12000, scoped, tag = 'internal scratch']
  %s0 = inlined_call_operand.vmem [shape: f32[2,8,4], index: 0, kind: input, shape index: {}]
  %s1 = inlined_call_operand.vmem [shape: f32[4,64], index: 1, kind: input, shape index: {}]
  %s2 = inlined_call_operand.vmem [shape: f32[24,64], index: 2, kind: input, shape index: {}]
  %s3 = inlined_call_operand.vmem [shape: bf16[24,64,16], index: 3, kind: input, shape index: {}]
  %s4 = inlined_call_operand.vmem [shape: f32[24,1,16], index: 4, kind: input, shape index: {}]
  %s5 = inlined_call_operand.vmem [shape: bf16[8,16,64], index: 5, kind: input, shape index: {}]
  %s6 = inlined_call_operand.vmem [shape: bf16[2,64,256], index: 6, kind: input, shape index: {}]
  %s7 = inlined_call_operand.vmem [shape: f32[2,1,256], index: 7, kind: input, shape index: {}]
  %s8 = inlined_call_operand.vmem [shape: bf16[2,256,64], index: 8, kind: input, shape index: {}]
  %s9 = inlined_call_operand.vmem [shape: f32[64,64], index: 9, kind: input, shape index: {}]
  %s10 = inlined_call_operand.vmem [shape: f32[2,1,1], index: 10, kind: output, shape index: {}]
  %s11 = sld [smem:[#allocation0]]
  $region73: #{time_series_transformer.1} parent=0
    _
  %s13 = ssub.s32 1, %s11
  %s14 = scalar_select 0, %s13, %s11
  loop: start=0, step=1, limit=4
  $region2: #{time_series_transformer.1} parent=0 // loop_pre_header
    _
  $region3: #{time_series_transformer.1} parent=0 // loop_header
    %s16 = sphi 0, %s20
    %p17 = scmp.ge.s32.totalorder %s16, 4
    %s26 = sphi 0, %s28
    %s29 = sphi 0, %s26
    %s30 = sphi 0, %s29
    %s46 = sphi 0, %s30
    %s50 = sphi 0, %s50
    %s52 = sphi 0, %s50
    %s53 = sphi 0, %s52
    %s67 = sphi 0, %s53
    %s71 = sphi 0, %s71
    %s73 = sphi 0, %s71
    %s74 = sphi 0, %s73
    %s88 = sphi 0, %s74
    %s92 = sphi 0, %s92
    %s94 = sphi 0, %s92
    %s95 = sphi 0, %s94
    %s109 = sphi 0, %s95
    %s113 = sphi 0, %s113
    %s115 = sphi 0, %s113
    %s116 = sphi 0, %s115
    %s130 = sphi 0, %s116
    %s134 = sphi 0, %s134
    %s136 = sphi 0, %s134
    %s137 = sphi 0, %s136
    %s151 = sphi 0, %s137
    %s155 = sphi 0, %s155
    %s157 = sphi 0, %s155
    %s158 = sphi 0, %s157
    %s172 = sphi 0, %s158
    %s176 = sphi 0, %s176
    %s178 = sphi 0, %s176
    %s179 = sphi 0, %s178
    %s193 = sphi 0, %s179
    %s197 = sphi 0, %s197
    %s199 = sphi 0, %s197
    %s200 = sphi 0, %s199
    %s214 = sphi 0, %s200
    %s218 = sphi 0, %s218
    %s220 = sphi 0, %s218
    %s221 = sphi 0, %s220
    %s235 = sphi 0, %s221
    %s241 = sphi 0, %s243
    %s244 = sphi 0, %s241
    %s245 = sphi 0, %s244
    %s261 = sphi 0, %s245
  $region4: #{time_series_transformer.1} parent=0 // loop_header_branch
    %19 = sbr.rel (%p17) target = $region8
  $region5: #{time_series_transformer.1} parent=0 // loop_body
    %s21 = ssub.s32 %s16, 1
    %s22 = ssub.s32 %s16, 2
    %s23 = sadd.s32 %s16, 1
    %s24 = ssub.s32 %s16, %s23
    %p25 = scmp.eq.s32.totalorder %s24, 0
    %s27 = sadd.s32 %s26, 1
    %s28 = scalar_select %p25, %s26, %s27
    %p31 = pneg %p25
    %p32 = scmp.eq.s32.totalorder %s16, 1
    %p33 = por %p31, %p32
    %p34 = scmp.ne.s32.totalorder %s26, %s29
    %p35 = scmp.eq.s32.totalorder %s16, 0
    %p36 = por %p34, %p35
    %p37 = scmp.ne.s32.totalorder %s26, %s29
    %p38 = scmp.eq.s32.totalorder %s21, 1
    %p39 = por %p37, %p38
    %p40 = scmp.ne.s32.totalorder %s29, %s30
    %p41 = scmp.eq.s32.totalorder %s21, 0
    %p42 = por %p40, %p41
    %p43 = scmp.ne.s32.totalorder %s29, %s30
    %p44 = scmp.eq.s32.totalorder %s22, 1
    %p45 = por %p43, %p44
    %p47 = scmp.ne.s32.totalorder %s30, %s46
    %p48 = scmp.eq.s32.totalorder %s22, 0
    %p49 = por %p47, %p48
    %s51 = sadd.s32 %s50, 1
    %p54 = scmp.eq.s32.totalorder %s16, 1
    %p55 = scmp.ne.s32.totalorder %s50, %s52
    %p56 = scmp.eq.s32.totalorder %s16, 0
    %p57 = por %p55, %p56
    %p58 = scmp.ne.s32.totalorder %s50, %s52
    %p59 = scmp.eq.s32.totalorder %s21, 1
    %p60 = por %p58, %p59
    %p61 = scmp.ne.s32.totalorder %s52, %s53
    %p62 = scmp.eq.s32.totalorder %s21, 0
    %p63 = por %p61, %p62
    %p64 = scmp.ne.s32.totalorder %s52, %s53
    %p65 = scmp.eq.s32.totalorder %s22, 1
    %p66 = por %p64, %p65
    %p68 = scmp.ne.s32.totalorder %s53, %s67
    %p69 = scmp.eq.s32.totalorder %s22, 0
    %p70 = por %p68, %p69
    %s72 = sadd.s32 %s71, 1
    %p75 = scmp.eq.s32.totalorder %s16, 1
    %p76 = scmp.ne.s32.totalorder %s71, %s73
    %p77 = scmp.eq.s32.totalorder %s16, 0
    %p78 = por %p76, %p77
    %p79 = scmp.ne.s32.totalorder %s71, %s73
    %p80 = scmp.eq.s32.totalorder %s21, 1
    %p81 = por %p79, %p80
    %p82 = scmp.ne.s32.totalorder %s73, %s74
    %p83 = scmp.eq.s32.totalorder %s21, 0
    %p84 = por %p82, %p83
    %p85 = scmp.ne.s32.totalorder %s73, %s74
    %p86 = scmp.eq.s32.totalorder %s22, 1
    %p87 = por %p85, %p86
    %p89 = scmp.ne.s32.totalorder %s74, %s88
    %p90 = scmp.eq.s32.totalorder %s22, 0
    %p91 = por %p89, %p90
    %s93 = sadd.s32 %s92, 1
    %p96 = scmp.eq.s32.totalorder %s16, 1
    %p97 = scmp.ne.s32.totalorder %s92, %s94
    %p98 = scmp.eq.s32.totalorder %s16, 0
    %p99 = por %p97, %p98
    %p100 = scmp.ne.s32.totalorder %s92, %s94
    %p101 = scmp.eq.s32.totalorder %s21, 1
    %p102 = por %p100, %p101
    %p103 = scmp.ne.s32.totalorder %s94, %s95
    %p104 = scmp.eq.s32.totalorder %s21, 0
    %p105 = por %p103, %p104
    %p106 = scmp.ne.s32.totalorder %s94, %s95
    %p107 = scmp.eq.s32.totalorder %s22, 1
    %p108 = por %p106, %p107
    %p110 = scmp.ne.s32.totalorder %s95, %s109
    %p111 = scmp.eq.s32.totalorder %s22, 0
    %p112 = por %p110, %p111
    %s114 = sadd.s32 %s113, 1
    %p117 = scmp.eq.s32.totalorder %s16, 1
    %p118 = scmp.ne.s32.totalorder %s113, %s115
    %p119 = scmp.eq.s32.totalorder %s16, 0
    %p120 = por %p118, %p119
    %p121 = scmp.ne.s32.totalorder %s113, %s115
    %p122 = scmp.eq.s32.totalorder %s21, 1
    %p123 = por %p121, %p122
    %p124 = scmp.ne.s32.totalorder %s115, %s116
    %p125 = scmp.eq.s32.totalorder %s21, 0
    %p126 = por %p124, %p125
    %p127 = scmp.ne.s32.totalorder %s115, %s116
    %p128 = scmp.eq.s32.totalorder %s22, 1
    %p129 = por %p127, %p128
    %p131 = scmp.ne.s32.totalorder %s116, %s130
    %p132 = scmp.eq.s32.totalorder %s22, 0
    %p133 = por %p131, %p132
    %s135 = sadd.s32 %s134, 1
    %p138 = scmp.eq.s32.totalorder %s16, 1
    %p139 = scmp.ne.s32.totalorder %s134, %s136
    %p140 = scmp.eq.s32.totalorder %s16, 0
    %p141 = por %p139, %p140
    %p142 = scmp.ne.s32.totalorder %s134, %s136
    %p143 = scmp.eq.s32.totalorder %s21, 1
    %p144 = por %p142, %p143
    %p145 = scmp.ne.s32.totalorder %s136, %s137
    %p146 = scmp.eq.s32.totalorder %s21, 0
    %p147 = por %p145, %p146
    %p148 = scmp.ne.s32.totalorder %s136, %s137
    %p149 = scmp.eq.s32.totalorder %s22, 1
    %p150 = por %p148, %p149
    %p152 = scmp.ne.s32.totalorder %s137, %s151
    %p153 = scmp.eq.s32.totalorder %s22, 0
    %p154 = por %p152, %p153
    %s156 = sadd.s32 %s155, 1
    %p159 = scmp.eq.s32.totalorder %s16, 1
    %p160 = scmp.ne.s32.totalorder %s155, %s157
    %p161 = scmp.eq.s32.totalorder %s16, 0
    %p162 = por %p160, %p161
    %p163 = scmp.ne.s32.totalorder %s155, %s157
    %p164 = scmp.eq.s32.totalorder %s21, 1
    %p165 = por %p163, %p164
    %p166 = scmp.ne.s32.totalorder %s157, %s158
    %p167 = scmp.eq.s32.totalorder %s21, 0
    %p168 = por %p166, %p167
    %p169 = scmp.ne.s32.totalorder %s157, %s158
    %p170 = scmp.eq.s32.totalorder %s22, 1
    %p171 = por %p169, %p170
    %p173 = scmp.ne.s32.totalorder %s158, %s172
    %p174 = scmp.eq.s32.totalorder %s22, 0
    %p175 = por %p173, %p174
    %s177 = sadd.s32 %s176, 1
    %p180 = scmp.eq.s32.totalorder %s16, 1
    %p181 = scmp.ne.s32.totalorder %s176, %s178
    %p182 = scmp.eq.s32.totalorder %s16, 0
    %p183 = por %p181, %p182
    %p184 = scmp.ne.s32.totalorder %s176, %s178
    %p185 = scmp.eq.s32.totalorder %s21, 1
    %p186 = por %p184, %p185
    %p187 = scmp.ne.s32.totalorder %s178, %s179
    %p188 = scmp.eq.s32.totalorder %s21, 0
    %p189 = por %p187, %p188
    %p190 = scmp.ne.s32.totalorder %s178, %s179
    %p191 = scmp.eq.s32.totalorder %s22, 1
    %p192 = por %p190, %p191
    %p194 = scmp.ne.s32.totalorder %s179, %s193
    %p195 = scmp.eq.s32.totalorder %s22, 0
    %p196 = por %p194, %p195
    %s198 = sadd.s32 %s197, 1
    %p201 = scmp.eq.s32.totalorder %s16, 1
    %p202 = scmp.ne.s32.totalorder %s197, %s199
    %p203 = scmp.eq.s32.totalorder %s16, 0
    %p204 = por %p202, %p203
    %p205 = scmp.ne.s32.totalorder %s197, %s199
    %p206 = scmp.eq.s32.totalorder %s21, 1
    %p207 = por %p205, %p206
    %p208 = scmp.ne.s32.totalorder %s199, %s200
    %p209 = scmp.eq.s32.totalorder %s21, 0
    %p210 = por %p208, %p209
    %p211 = scmp.ne.s32.totalorder %s199, %s200
    %p212 = scmp.eq.s32.totalorder %s22, 1
    %p213 = por %p211, %p212
    %p215 = scmp.ne.s32.totalorder %s200, %s214
    %p216 = scmp.eq.s32.totalorder %s22, 0
    %p217 = por %p215, %p216
    %s219 = sadd.s32 %s218, 1
    %p222 = scmp.eq.s32.totalorder %s16, 1
    %p223 = scmp.ne.s32.totalorder %s218, %s220
    %p224 = scmp.eq.s32.totalorder %s16, 0
    %p225 = por %p223, %p224
    %p226 = scmp.ne.s32.totalorder %s218, %s220
    %p227 = scmp.eq.s32.totalorder %s21, 1
    %p228 = por %p226, %p227
    %p229 = scmp.ne.s32.totalorder %s220, %s221
    %p230 = scmp.eq.s32.totalorder %s21, 0
    %p231 = por %p229, %p230
    %p232 = scmp.ne.s32.totalorder %s220, %s221
    %p233 = scmp.eq.s32.totalorder %s22, 1
    %p234 = por %p232, %p233
    %p236 = scmp.ne.s32.totalorder %s221, %s235
    %p237 = scmp.eq.s32.totalorder %s22, 0
    %p238 = por %p236, %p237
    %s239 = ssub.s32 %s16, %s23
    %p240 = scmp.eq.s32.totalorder %s239, 0
    %s242 = sadd.s32 %s241, 1
    %s243 = scalar_select %p240, %s241, %s242
    %p246 = pneg %p240
    %p247 = scmp.eq.s32.totalorder %s16, 1
    %p248 = por %p246, %p247
    %p249 = scmp.ne.s32.totalorder %s241, %s244
    %p250 = scmp.eq.s32.totalorder %s16, 0
    %p251 = por %p249, %p250
    %p252 = scmp.ne.s32.totalorder %s241, %s244
    %p253 = scmp.eq.s32.totalorder %s21, 1
    %p254 = por %p252, %p253
    %p255 = scmp.ne.s32.totalorder %s244, %s245
    %p256 = scmp.eq.s32.totalorder %s21, 0
    %p257 = por %p255, %p256
    %p258 = scmp.ne.s32.totalorder %s244, %s245
    %p259 = scmp.eq.s32.totalorder %s22, 1
    %p260 = por %p258, %p259
    %p262 = scmp.ne.s32.totalorder %s245, %s261
    %p263 = scmp.eq.s32.totalorder %s22, 0
    %p264 = por %p262, %p263
    %p265 = scmp.le.s32.totalorder 1, %s16
    %p266 = scmp.lt.s32.totalorder %s16, 3
    %p267 = pnand %p265, %p266
    %p268 = pneg %p267
    // Predicated region
    $region9: #{time_series_transformer.1} parent=5 // pred_check
      _
    $region10: #{time_series_transformer.1} parent=5 // pred_check_branch
      %270 = sbr.rel (%p267) target = $region12
    $region11: #{time_series_transformer.1} parent=5 // pred_region
      %s271 = ssub.s32 %s16, 1
      // Predicated region
      $region13: #{time_series_transformer.1} parent=11 // pred_check
        %p272 = pneg %p63
      $region14: #{time_series_transformer.1} parent=11 // pred_check_branch
        %274 = sbr.rel (%p272) target = $region16
      $region15: #{time_series_transformer.1} parent=11 // pred_region
        _
      $region16: #{time_series_transformer.1} parent=11 // pred_fallthru
        _
      // Predicated region
      $region17: #{time_series_transformer.1} parent=11 // pred_check
        %p275 = pneg %p84
      $region18: #{time_series_transformer.1} parent=11 // pred_check_branch
        %277 = sbr.rel (%p275) target = $region20
      $region19: #{time_series_transformer.1} parent=11 // pred_region
        _
      $region20: #{time_series_transformer.1} parent=11 // pred_fallthru
        _
      // Predicated region
      $region21: #{time_series_transformer.1} parent=11 // pred_check
        %p278 = pneg %p105
      $region22: #{time_series_transformer.1} parent=11 // pred_check_branch
        %280 = sbr.rel (%p278) target = $region24
      $region23: #{time_series_transformer.1} parent=11 // pred_region
        _
      $region24: #{time_series_transformer.1} parent=11 // pred_fallthru
        _
      // Predicated region
      $region25: #{time_series_transformer.1} parent=11 // pred_check
        %p281 = pneg %p126
      $region26: #{time_series_transformer.1} parent=11 // pred_check_branch
        %283 = sbr.rel (%p281) target = $region28
      $region27: #{time_series_transformer.1} parent=11 // pred_region
        _
      $region28: #{time_series_transformer.1} parent=11 // pred_fallthru
        _
      // Predicated region
      $region29: #{time_series_transformer.1} parent=11 // pred_check
        %p284 = pneg %p147
      $region30: #{time_series_transformer.1} parent=11 // pred_check_branch
        %286 = sbr.rel (%p284) target = $region32
      $region31: #{time_series_transformer.1} parent=11 // pred_region
        _
      $region32: #{time_series_transformer.1} parent=11 // pred_fallthru
        _
      // Predicated region
      $region33: #{time_series_transformer.1} parent=11 // pred_check
        %p287 = pneg %p168
      $region34: #{time_series_transformer.1} parent=11 // pred_check_branch
        %289 = sbr.rel (%p287) target = $region36
      $region35: #{time_series_transformer.1} parent=11 // pred_region
        _
      $region36: #{time_series_transformer.1} parent=11 // pred_fallthru
        _
      // Predicated region
      $region37: #{time_series_transformer.1} parent=11 // pred_check
        %p290 = pneg %p189
      $region38: #{time_series_transformer.1} parent=11 // pred_check_branch
        %292 = sbr.rel (%p290) target = $region40
      $region39: #{time_series_transformer.1} parent=11 // pred_region
        _
      $region40: #{time_series_transformer.1} parent=11 // pred_fallthru
        _
      // Predicated region
      $region41: #{time_series_transformer.1} parent=11 // pred_check
        %p293 = pneg %p210
      $region42: #{time_series_transformer.1} parent=11 // pred_check_branch
        %295 = sbr.rel (%p293) target = $region44
      $region43: #{time_series_transformer.1} parent=11 // pred_region
        _
      $region44: #{time_series_transformer.1} parent=11 // pred_fallthru
        _
      // Predicated region
      $region45: #{time_series_transformer.1} parent=11 // pred_check
        %p296 = pneg %p231
      $region46: #{time_series_transformer.1} parent=11 // pred_check_branch
        %298 = sbr.rel (%p296) target = $region48
      $region47: #{time_series_transformer.1} parent=11 // pred_region
        _
      $region48: #{time_series_transformer.1} parent=11 // pred_fallthru
        _
    $region12: #{time_series_transformer.1} parent=5 // pred_fallthru
      _
    %p299 = scmp.lt.s32.totalorder %s16, 2
    // Predicated region
    $region49: #{time_series_transformer.1} parent=5 // pred_check
      %p300 = pneg %p299
    $region50: #{time_series_transformer.1} parent=5 // pred_check_branch
      %302 = sbr.rel (%p300) target = $region52
    $region51: #{time_series_transformer.1} parent=5 // pred_region
      // Predicated region
      $region53: #{time_series_transformer.1} parent=51 // pred_check
        %p303 = pneg %p36
      $region54: #{time_series_transformer.1} parent=51 // pred_check_branch
        %305 = sbr.rel (%p303) target = $region56
      $region55: #{time_series_transformer.1} parent=51 // pred_region
        %p306 = scmp.lt.s32.totalorder %s16, 1
        %s307 = scalar_select %p306, %s16, 1
        %s308 = smul.addr %s307, 8
        %s309 = scalar_lea.vmem %s0, %s308
      $region56: #{time_series_transformer.1} parent=51 // pred_fallthru
        _
    $region52: #{time_series_transformer.1} parent=5 // pred_fallthru
      _
    %p310 = scmp.le.s32.totalorder 1, %s16
    %p311 = scmp.lt.s32.totalorder %s16, 3
    %p312 = pnand %p310, %p311
    %p313 = pneg %p312
    // Predicated region
    $region57: #{time_series_transformer.1} parent=5 // pred_check
      _
    $region58: #{time_series_transformer.1} parent=5 // pred_check_branch
      %315 = sbr.rel (%p312) target = $region60
    $region59: #{time_series_transformer.1} parent=5 // pred_region
      %s316 = ssub.s32 %s16, 1
      %p317 = scmp.lt.s32.totalorder %s21, 1
      %s318 = scalar_select %p317, %s21, 1
      %s319 = smul.addr %s318, 8
      %s320 = scalar_lea.vmem %s0, %s319
      %p321 = pneg %p42
      %p322 = pneg %p39
      %p323 = pneg %p63
      %p324 = pneg %p60
      %p325 = pneg %p84
      %p326 = pneg %p81
      %p327 = pneg %p105
      %p328 = pneg %p102
      %p329 = pneg %p126
      %p330 = pneg %p123
      %p331 = pneg %p147
      %p332 = pneg %p144
      %p333 = pneg %p168
      %p334 = pneg %p165
      %p335 = pneg %p189
      %p336 = pneg %p186
      %p337 = pneg %p210
      %p338 = pneg %p207
      %p339 = pneg %p231
      %p340 = pneg %p228
      %p341 = pneg %p257
      %p342 = pneg %p254
      %p343 = scmp.lt.s32.totalorder %s21, 1
      %s344 = scalar_select %p343, %s21, 1
      %s345 = scalar_lea.vmem %s10, %s344
      %p346 = scmp.lt.s32.totalorder %s21, 1
      %s347 = scalar_select %p346, %s21, 1
      %s348 = smul.addr %s347, 8
      %s349 = scalar_lea.vmem %s0, %s348
      %p350 = scmp.lt.s32.totalorder %s21, 1
      %s351 = scalar_select %p350, %s21, 1
      %s352 = scalar_lea.vmem %s10, %s351
      %v354 = vld [vmem:[%s349] sm:$0xff]
      %v355 = vld [vmem:[%s1] sm:$0xf]
      %v356 = vld [vmem:[%s2] sm:$0xff]
      %vm357 = vcmask 31744
      %v359 = vsel %vm357, %v354, 0
      %vm361 = vcmask 1043456
      %v363 = vsel %vm361, %v355, 0
      %365 = vmatprep.subr.mxu0 0.0
      %366 = vmatpush1.msra.mxu0 0.0
      %367 = vmatprep.subr.mxu0 0.0
      %368 = vmatpush1.msra.mxu0 0.0
      %369 = vmatprep.subr.mxu0 0.0
      %370 = vmatpush1.msra.mxu0 0.0
      %371 = vmatprep.subr.mxu0 0.0
      %372 = vmatpush1.msra.mxu0 0.0
      %373 = vmatprep.subr.mxu0 0.0
      %374 = vmatpush1.msra.mxu0 0.0
      %375 = vmatprep.subr.mxu0 0.0
      %376 = vmatpush1.msra.mxu0 0.0
      %377 = vmatprep.subr.mxu0 0.0
      %378 = vmatpush1.msra.mxu0 0.0
      %379 = vmatprep.subr.mxu0 0.0
      %380 = vmatpush1.msra.mxu0 0.0
      %381 = vmatprep.subr.mxu0 0.0
      %382 = vmatpush1.msra.mxu0 0.0
      %383 = vmatprep.subr.mxu0 0.0
      %384 = vmatpush1.msra.mxu0 0.0
      %385 = vmatprep.subr.mxu0 0.0
      %386 = vmatpush1.msra.mxu0 0.0
      %387 = vmatprep.subr.mxu0 0.0
      %388 = vmatpush1.msra.mxu0 0.0
      %389 = vmatprep.subr.mxu0 0.0
      %390 = vmatpush1.msra.mxu0 0.0
      %391 = vmatprep.subr.mxu0 0.0
      %392 = vmatpush1.msra.mxu0 0.0
      %393 = vmatprep.subr.mxu0 0.0
      %394 = vmatpush1.msra.mxu0 0.0
      %395 = vmatprep.subr.mxu0 0.0
      %396 = vmatpush1.msra.mxu0 %v363
      %397 = vmatprep.subr.mxu0 0.0
      %398 = vmatpush2.msra.mxu0 0.0
      %399 = vmatprep.subr.mxu0 0.0
      %400 = vmatpush2.msra.mxu0 0.0
      %401 = vmatprep.subr.mxu0 0.0
      %402 = vmatpush2.msra.mxu0 0.0
      %403 = vmatprep.subr.mxu0 0.0
      %404 = vmatpush2.msra.mxu0 0.0
      %405 = vmatprep.subr.mxu0 0.0
      %406 = vmatpush2.msra.mxu0 0.0
      %407 = vmatprep.subr.mxu0 0.0
      %408 = vmatpush2.msra.mxu0 0.0
      %409 = vmatprep.subr.mxu0 0.0
      %410 = vmatpush2.msra.mxu0 0.0
      %411 = vmatprep.subr.mxu0 0.0
      %412 = vmatpush2.msra.mxu0 0.0
      %413 = vmatprep.subr.mxu0 0.0
      %414 = vmatpush2.msra.mxu0 0.0
      %415 = vmatprep.subr.mxu0 0.0
      %416 = vmatpush2.msra.mxu0 0.0
      %417 = vmatprep.subr.mxu0 0.0
      %418 = vmatpush2.msra.mxu0 0.0
      %419 = vmatprep.subr.mxu0 0.0
      %420 = vmatpush2.msra.mxu0 0.0
      %421 = vmatprep.subr.mxu0 0.0
      %422 = vmatpush2.msra.mxu0 0.0
      %423 = vmatprep.subr.mxu0 0.0
      %424 = vmatpush2.msra.mxu0 0.0
      %425 = vmatprep.subr.mxu0 0.0
      %426 = vmatpush2.msra.mxu0 0.0
      %427 = vmatprep.subr.mxu0 0.0
      %428 = vmatpush2.msra.mxu0 0.0
      %429 = vmatprep.mubr.f32.mxu0 0.0
      %430 = vmatmul.mubr.f32.gmra.mxu0 %v359
      %v431 = vpop.f32.mrf.mxu0
      %v432 = vadd.f32 %v356, %v431
      %v433 = vpop.f32.mrf.mxu0
      %434 = vdwg.mxu0
      %v435 = vpack.c.bf16 %v432, %v432
      %v436 = vld [vmem:[%s3] sm:$0xf]
      %v437 = vld [vmem:[%s3 + $0x4] sm:$0xf]
      %v438 = vld [vmem:[%s3 + $0x8] sm:$0xf]
      %v439 = vld [vmem:[%s3 + $0xc] sm:$0xf]
      %v440 = vld [vmem:[%s3 + $0x10] sm:$0xf]
      %v441 = vld [vmem:[%s3 + $0x14] sm:$0xf]
      %v442 = vld [vmem:[%s3 + $0x18] sm:$0xf]
      %v443 = vld [vmem:[%s3 + $0x1c] sm:$0xf]
      %v444 = vld [vmem:[%s4] sm:$0x1]
      %v446 = vlaneseq
      %v447 = vshrl.u32 %v446, 7
      %v448 = vsub.s32 0, %v447
      %v449 = vrot.slane %v444, %v448
      %v459 = vunpack.c.l.b16 %v436
      %v460 = vunpack.c.l.b16 %v437
      %v461 = vunpack.c.l.b16 %v438
      %v462 = vunpack.c.l.b16 %v439
      %v463 = vunpack.c.l.b16 %v440
      %v464 = vunpack.c.l.b16 %v441
      %v465 = vunpack.c.l.b16 %v442
      %v466 = vunpack.c.l.b16 %v443
      %v467 = vpack.c.b16 %v460, %v459
      %v468 = vpack.c.b16 %v462, %v461
      %v469 = vpack.c.b16 %v464, %v463
      %v470 = vpack.c.b16 %v466, %v465
      %vm475 = vcmask 523264
      %v477 = vsel %vm475, %v435, 0
      %479 = vmatprep.subr.bf16.mxu0 0
      %480 = vmatpush1.bf16.msra.mxu0 0
      %481 = vmatprep.subr.bf16.mxu0 0
      %482 = vmatpush1.bf16.msra.mxu0 0
      %483 = vmatprep.subr.bf16.mxu0 0
      %484 = vmatpush1.bf16.msra.mxu0 0
      %485 = vmatprep.subr.bf16.mxu0 0
      %486 = vmatpush1.bf16.msra.mxu0 0
      %487 = vmatprep.subr.bf16.mxu0 0
      %488 = vmatpush1.bf16.msra.mxu0 %v470
      %489 = vmatprep.subr.bf16.mxu0 0
      %490 = vmatpush1.bf16.msra.mxu0 %v469
      %491 = vmatprep.subr.bf16.mxu0 0
      %492 = vmatpush1.bf16.msra.mxu0 %v468
      %493 = vmatprep.subr.bf16.mxu0 0
      %494 = vmatpush1.bf16.msra.mxu0 %v467
      %495 = vmatprep.subr.bf16.mxu0 0
      %496 = vmatpush2.bf16.msra.mxu0 0
      %497 = vmatprep.subr.bf16.mxu0 0
      %498 = vmatpush2.bf16.msra.mxu0 0
      %499 = vmatprep.subr.bf16.mxu0 0
      %500 = vmatpush2.bf16.msra.mxu0 0
      %501 = vmatprep.subr.bf16.mxu0 0
      %502 = vmatpush2.bf16.msra.mxu0 0
      %503 = vmatprep.subr.bf16.mxu0 0
      %504 = vmatpush2.bf16.msra.mxu0 0
      %505 = vmatprep.subr.bf16.mxu0 0
      %506 = vmatpush2.bf16.msra.mxu0 0
      %507 = vmatprep.subr.bf16.mxu0 0
      %508 = vmatpush2.bf16.msra.mxu0 0
      %509 = vmatprep.subr.bf16.mxu0 0
      %510 = vmatpush2.bf16.msra.mxu0 0
      %511 = vmatprep.mubr.bf16.mxu0 0
      %512 = vmatmul.mubr.bf16.gmra.mxu0 %v477
      %v513 = vpop.f32.mrf.mxu0
      %v514 = vadd.f32 %v449, %v513
      %v515 = vpop.f32.mrf.mxu0
      %v516 = vpop.f32.mrf.mxu0
      %v517 = vpop.f32.mrf.mxu0
      %518 = vdwg.mxu0
      %s519 = scalar_lea.vmem %s3, 128
      %v520 = vld [vmem:[%s519] sm:$0xf]
      %v521 = vld [vmem:[%s519 + $0x4] sm:$0xf]
      %v522 = vld [vmem:[%s519 + $0x8] sm:$0xf]
      %v523 = vld [vmem:[%s519 + $0xc] sm:$0xf]
      %v524 = vld [vmem:[%s519 + $0x10] sm:$0xf]
      %v525 = vld [vmem:[%s519 + $0x14] sm:$0xf]
      %v526 = vld [vmem:[%s519 + $0x18] sm:$0xf]
      %v527 = vld [vmem:[%s519 + $0x1c] sm:$0xf]
      %s528 = scalar_lea.vmem %s4, 4
      %v529 = vld [vmem:[%s528] sm:$0x1]
      %v531 = vlaneseq
      %v532 = vshrl.u32 %v531, 7
      %v533 = vsub.s32 0, %v532
      %v534 = vrot.slane %v529, %v533
      %v544 = vunpack.c.l.b16 %v520
      %v545 = vunpack.c.l.b16 %v521
      %v546 = vunpack.c.l.b16 %v522
      %v547 = vunpack.c.l.b16 %v523
      %v548 = vunpack.c.l.b16 %v524
      %v549 = vunpack.c.l.b16 %v525
      %v550 = vunpack.c.l.b16 %v526
      %v551 = vunpack.c.l.b16 %v527
      %v552 = vpack.c.b16 %v545, %v544
      %v553 = vpack.c.b16 %v547, %v546
      %v554 = vpack.c.b16 %v549, %v548
      %v555 = vpack.c.b16 %v551, %v550
      %560 = vmatprep.subr.bf16.mxu0 0
      %561 = vmatpush1.bf16.msra.mxu0 0
      %562 = vmatprep.subr.bf16.mxu0 0
      %563 = vmatpush1.bf16.msra.mxu0 0
      %564 = vmatprep.subr.bf16.mxu0 0
      %565 = vmatpush1.bf16.msra.mxu0 0
      %566 = vmatprep.subr.bf16.mxu0 0
      %567 = vmatpush1.bf16.msra.mxu0 0
      %568 = vmatprep.subr.bf16.mxu0 0
      %569 = vmatpush1.bf16.msra.mxu0 %v555
      %570 = vmatprep.subr.bf16.mxu0 0
      %571 = vmatpush1.bf16.msra.mxu0 %v554
      %572 = vmatprep.subr.bf16.mxu0 0
      %573 = vmatpush1.bf16.msra.mxu0 %v553
      %574 = vmatprep.subr.bf16.mxu0 0
      %575 = vmatpush1.bf16.msra.mxu0 %v552
      %576 = vmatprep.subr.bf16.mxu0 0
      %577 = vmatpush2.bf16.msra.mxu0 0
      %578 = vmatprep.subr.bf16.mxu0 0
      %579 = vmatpush2.bf16.msra.mxu0 0
      %580 = vmatprep.subr.bf16.mxu0 0
      %581 = vmatpush2.bf16.msra.mxu0 0
      %582 = vmatprep.subr.bf16.mxu0 0
      %583 = vmatpush2.bf16.msra.mxu0 0
      %584 = vmatprep.subr.bf16.mxu0 0
      %585 = vmatpush2.bf16.msra.mxu0 0
      %586 = vmatprep.subr.bf16.mxu0 0
      %587 = vmatpush2.bf16.msra.mxu0 0
      %588 = vmatprep.subr.bf16.mxu0 0
      %589 = vmatpush2.bf16.msra.mxu0 0
      %590 = vmatprep.subr.bf16.mxu0 0
      %591 = vmatpush2.bf16.msra.mxu0 0
      %592 = vmatprep.mubr.bf16.mxu0 0
      %593 = vmatmul.mubr.bf16.gmra.mxu0 %v477
      %v594 = vpop.f32.mrf.mxu0
      %v595 = vadd.f32 %v534, %v594
      %v596 = vpop.f32.mrf.mxu0
      %v597 = vpop.f32.mrf.mxu0
      %v598 = vpop.f32.mrf.mxu0
      %599 = vdwg.mxu0
      %s600 = scalar_lea.vmem %s3, 256
      %v601 = vld [vmem:[%s600] sm:$0xf]
      %v602 = vld [vmem:[%s600 + $0x4] sm:$0xf]
      %v603 = vld [vmem:[%s600 + $0x8] sm:$0xf]
      %v604 = vld [vmem:[%s600 + $0xc] sm:$0xf]
      %v605 = vld [vmem:[%s600 + $0x10] sm:$0xf]
      %v606 = vld [vmem:[%s600 + $0x14] sm:$0xf]
      %v607 = vld [vmem:[%s600 + $0x18] sm:$0xf]
      %v608 = vld [vmem:[%s600 + $0x1c] sm:$0xf]
      %s609 = scalar_lea.vmem %s4, 8
      %v610 = vld [vmem:[%s609] sm:$0x1]
      %v612 = vlaneseq
      %v613 = vshrl.u32 %v612, 7
      %v614 = vsub.s32 0, %v613
      %v615 = vrot.slane %v610, %v614
      %v625 = vunpack.c.l.b16 %v601
      %v626 = vunpack.c.l.b16 %v602
      %v627 = vunpack.c.l.b16 %v603
      %v628 = vunpack.c.l.b16 %v604
      %v629 = vunpack.c.l.b16 %v605
      %v630 = vunpack.c.l.b16 %v606
      %v631 = vunpack.c.l.b16 %v607
      %v632 = vunpack.c.l.b16 %v608
      %v633 = vpack.c.b16 %v626, %v625
      %v634 = vpack.c.b16 %v628, %v627
      %v635 = vpack.c.b16 %v630, %v629
      %v636 = vpack.c.b16 %v632, %v631
      %641 = vmatprep.subr.bf16.mxu0 0
      %642 = vmatpush1.bf16.msra.mxu0 0
      %643 = vmatprep.subr.bf16.mxu0 0
      %644 = vmatpush1.bf16.msra.mxu0 0
      %645 = vmatprep.subr.bf16.mxu0 0
      %646 = vmatpush1.bf16.msra.mxu0 0
      %647 = vmatprep.subr.bf16.mxu0 0
      %648 = vmatpush1.bf16.msra.mxu0 0
      %649 = vmatprep.subr.bf16.mxu0 0
      %650 = vmatpush1.bf16.msra.mxu0 %v636
      %651 = vmatprep.subr.bf16.mxu0 0
      %652 = vmatpush1.bf16.msra.mxu0 %v635
      %653 = vmatprep.subr.bf16.mxu0 0
      %654 = vmatpush1.bf16.msra.mxu0 %v634
      %655 = vmatprep.subr.bf16.mxu0 0
      %656 = vmatpush1.bf16.msra.mxu0 %v633
      %657 = vmatprep.subr.bf16.mxu0 0
      %658 = vmatpush2.bf16.msra.mxu0 0
      %659 = vmatprep.subr.bf16.mxu0 0
      %660 = vmatpush2.bf16.msra.mxu0 0
      %661 = vmatprep.subr.bf16.mxu0 0
      %662 = vmatpush2.bf16.msra.mxu0 0
      %663 = vmatprep.subr.bf16.mxu0 0
      %664 = vmatpush2.bf16.msra.mxu0 0
      %665 = vmatprep.subr.bf16.mxu0 0
      %666 = vmatpush2.bf16.msra.mxu0 0
      %667 = vmatprep.subr.bf16.mxu0 0
      %668 = vmatpush2.bf16.msra.mxu0 0
      %669 = vmatprep.subr.bf16.mxu0 0
      %670 = vmatpush2.bf16.msra.mxu0 0
      %671 = vmatprep.subr.bf16.mxu0 0
      %672 = vmatpush2.bf16.msra.mxu0 0
      %673 = vmatprep.mubr.bf16.mxu0 0
      %674 = vmatmul.mubr.bf16.gmra.mxu0 %v477
      %v675 = vpop.f32.mrf.mxu0
      %v676 = vadd.f32 %v615, %v675
      %v677 = vpop.f32.mrf.mxu0
      %v678 = vpop.f32.mrf.mxu0
      %v679 = vpop.f32.mrf.mxu0
      %680 = vdwg.mxu0
      %vm681 = vcmask 130048
      %v683 = vsel %vm681, %v514, 0
      %v686 = vsel %vm681, %v595, 0
      %688 = vmatprep.subr.mxu0 0.0
      %689 = vmatpush1.xpose.msra.mxu0 0.0
      %690 = vmatprep.subr.mxu0 0.0
      %691 = vmatpush1.xpose.msra.mxu0 0.0
      %692 = vmatprep.subr.mxu0 0.0
      %693 = vmatpush1.xpose.msra.mxu0 0.0
      %694 = vmatprep.subr.mxu0 0.0
      %695 = vmatpush1.xpose.msra.mxu0 0.0
      %696 = vmatprep.subr.mxu0 0.0
      %697 = vmatpush1.xpose.msra.mxu0 0.0
      %698 = vmatprep.subr.mxu0 0.0
      %699 = vmatpush1.xpose.msra.mxu0 0.0
      %700 = vmatprep.subr.mxu0 0.0
      %701 = vmatpush1.xpose.msra.mxu0 0.0
      %702 = vmatprep.subr.mxu0 0.0
      %703 = vmatpush1.xpose.msra.mxu0 0.0
      %704 = vmatprep.subr.mxu0 0.0
      %705 = vmatpush1.xpose.msra.mxu0 0.0
      %706 = vmatprep.subr.mxu0 0.0
      %707 = vmatpush1.xpose.msra.mxu0 0.0
      %708 = vmatprep.subr.mxu0 0.0
      %709 = vmatpush1.xpose.msra.mxu0 0.0
      %710 = vmatprep.subr.mxu0 0.0
      %711 = vmatpush1.xpose.msra.mxu0 0.0
      %712 = vmatprep.subr.mxu0 0.0
      %713 = vmatpush1.xpose.msra.mxu0 0.0
      %714 = vmatprep.subr.mxu0 0.0
      %715 = vmatpush1.xpose.msra.mxu0 0.0
      %716 = vmatprep.subr.mxu0 0.0
      %717 = vmatpush1.xpose.msra.mxu0 0.0
      %718 = vmatprep.subr.mxu0 0.0
      %719 = vmatpush1.xpose.msra.mxu0 %v686
      %720 = vmatprep.subr.mxu0 0.0
      %721 = vmatpush2.xpose.msra.mxu0 0.0
      %722 = vmatprep.subr.mxu0 0.0
      %723 = vmatpush2.xpose.msra.mxu0 0.0
      %724 = vmatprep.subr.mxu0 0.0
      %725 = vmatpush2.xpose.msra.mxu0 0.0
      %726 = vmatprep.subr.mxu0 0.0
      %727 = vmatpush2.xpose.msra.mxu0 0.0
      %728 = vmatprep.subr.mxu0 0.0
      %729 = vmatpush2.xpose.msra.mxu0 0.0
      %730 = vmatprep.subr.mxu0 0.0
      %731 = vmatpush2.xpose.msra.mxu0 0.0
      %732 = vmatprep.subr.mxu0 0.0
      %733 = vmatpush2.xpose.msra.mxu0 0.0
      %734 = vmatprep.subr.mxu0 0.0
      %735 = vmatpush2.xpose.msra.mxu0 0.0
      %736 = vmatprep.subr.mxu0 0.0
      %737 = vmatpush2.xpose.msra.mxu0 0.0
      %738 = vmatprep.subr.mxu0 0.0
      %739 = vmatpush2.xpose.msra.mxu0 0.0
      %740 = vmatprep.subr.mxu0 0.0
      %741 = vmatpush2.xpose.msra.mxu0 0.0
      %742 = vmatprep.subr.mxu0 0.0
      %743 = vmatpush2.xpose.msra.mxu0 0.0
      %744 = vmatprep.subr.mxu0 0.0
      %745 = vmatpush2.xpose.msra.mxu0 0.0
      %746 = vmatprep.subr.mxu0 0.0
      %747 = vmatpush2.xpose.msra.mxu0 0.0
      %748 = vmatprep.subr.mxu0 0.0
      %749 = vmatpush2.xpose.msra.mxu0 0.0
      %750 = vmatprep.subr.mxu0 0.0
      %751 = vmatpush2.xpose.msra.mxu0 0.0
      %752 = vmatprep.mubr.f32.mxu0 0.0
      %753 = vmatmul.mubr.f32.gmra.mxu0 %v683
      %v754 = vpop.f32.mrf.mxu0
      %v755 = vadd.f32 0.0, %v754
      %v756 = vpop.f32.mrf.mxu0
      %757 = vdwg.mxu0
      %v758 = vmul.f32 %v755, 0.25
      %vm759 = vcmask 64512
      %v760 = vsel %vm759, %v758, -inf
      %761 = vmax.xlane.f32.xlu0 %v760
      %v762 = vpop.xlane.xlu0 %761
      %v763 = vsub.f32 %v758, %v762
      %v764 = vmul.f32 %v763, 1.442695
      %v765 = vpow.pop %v764
      %v766 = vsel %vm759, %v765, 0.0
      %767 = vadd.xlane.f32.xlu0 %v766
      %v768 = vpop.xlane.xlu0 %767
      %v769 = vrcp.pop %v768
      %v770 = vmul.f32 %v765, %v769
      %v772 = vsel %vm759, %v770, 0
      %774 = vmatprep.subr.mxu0 0.0
      %775 = vmatpush1.msra.mxu0 0.0
      %776 = vmatprep.subr.mxu0 0.0
      %777 = vmatpush1.msra.mxu0 0.0
      %778 = vmatprep.subr.mxu0 0.0
      %779 = vmatpush1.msra.mxu0 0.0
      %780 = vmatprep.subr.mxu0 0.0
      %781 = vmatpush1.msra.mxu0 0.0
      %782 = vmatprep.subr.mxu0 0.0
      %783 = vmatpush1.msra.mxu0 0.0
      %784 = vmatprep.subr.mxu0 0.0
      %785 = vmatpush1.msra.mxu0 0.0
      %786 = vmatprep.subr.mxu0 0.0
      %787 = vmatpush1.msra.mxu0 0.0
      %788 = vmatprep.subr.mxu0 0.0
      %789 = vmatpush1.msra.mxu0 0.0
      %790 = vmatprep.subr.mxu0 0.0
      %791 = vmatpush1.msra.mxu0 0.0
      %792 = vmatprep.subr.mxu0 0.0
      %793 = vmatpush1.msra.mxu0 0.0
      %794 = vmatprep.subr.mxu0 0.0
      %795 = vmatpush1.msra.mxu0 0.0
      %796 = vmatprep.subr.mxu0 0.0
      %797 = vmatpush1.msra.mxu0 0.0
      %798 = vmatprep.subr.mxu0 0.0
      %799 = vmatpush1.msra.mxu0 0.0
      %800 = vmatprep.subr.mxu0 0.0
      %801 = vmatpush1.msra.mxu0 0.0
      %802 = vmatprep.subr.mxu0 0.0
      %803 = vmatpush1.msra.mxu0 0.0
      %804 = vmatprep.subr.mxu0 0.0
      %805 = vmatpush1.msra.mxu0 %v676
      %806 = vmatprep.subr.mxu0 0.0
      %807 = vmatpush2.msra.mxu0 0.0
      %808 = vmatprep.subr.mxu0 0.0
      %809 = vmatpush2.msra.mxu0 0.0
      %810 = vmatprep.subr.mxu0 0.0
      %811 = vmatpush2.msra.mxu0 0.0
      %812 = vmatprep.subr.mxu0 0.0
      %813 = vmatpush2.msra.mxu0 0.0
      %814 = vmatprep.subr.mxu0 0.0
      %815 = vmatpush2.msra.mxu0 0.0
      %816 = vmatprep.subr.mxu0 0.0
      %817 = vmatpush2.msra.mxu0 0.0
      %818 = vmatprep.subr.mxu0 0.0
      %819 = vmatpush2.msra.mxu0 0.0
      %820 = vmatprep.subr.mxu0 0.0
      %821 = vmatpush2.msra.mxu0 0.0
      %822 = vmatprep.subr.mxu0 0.0
      %823 = vmatpush2.msra.mxu0 0.0
      %824 = vmatprep.subr.mxu0 0.0
      %825 = vmatpush2.msra.mxu0 0.0
      %826 = vmatprep.subr.mxu0 0.0
      %827 = vmatpush2.msra.mxu0 0.0
      %828 = vmatprep.subr.mxu0 0.0
      %829 = vmatpush2.msra.mxu0 0.0
      %830 = vmatprep.subr.mxu0 0.0
      %831 = vmatpush2.msra.mxu0 0.0
      %832 = vmatprep.subr.mxu0 0.0
      %833 = vmatpush2.msra.mxu0 0.0
      %834 = vmatprep.subr.mxu0 0.0
      %835 = vmatpush2.msra.mxu0 0.0
      %836 = vmatprep.subr.mxu0 0.0
      %837 = vmatpush2.msra.mxu0 0.0
      %838 = vmatprep.mubr.f32.mxu0 0.0
      %839 = vmatmul.mubr.f32.gmra.mxu0 %v772
      %v840 = vpop.f32.mrf.mxu0
      %v841 = vadd.f32 0.0, %v840
      %v842 = vpop.f32.mrf.mxu0
      %843 = vdwg.mxu0
      %v844 = vpack.c.bf16 %v841, %v841
      %v845 = vld [vmem:[%s5] sm:$0xf]
      %v846 = vld [vmem:[%s5 + $0x4] sm:$0xf]
      %s847 = scalar_lea.vmem %s3, 32
      %v848 = vld [vmem:[%s847] sm:$0xf]
      %v849 = vld [vmem:[%s847 + $0x4] sm:$0xf]
      %v850 = vld [vmem:[%s847 + $0x8] sm:$0xf]
      %v851 = vld [vmem:[%s847 + $0xc] sm:$0xf]
      %v852 = vld [vmem:[%s847 + $0x10] sm:$0xf]
      %v853 = vld [vmem:[%s847 + $0x14] sm:$0xf]
      %v854 = vld [vmem:[%s847 + $0x18] sm:$0xf]
      %v855 = vld [vmem:[%s847 + $0x1c] sm:$0xf]
      %s856 = scalar_lea.vmem %s4, 1
      %v857 = vld [vmem:[%s856] sm:$0x1]
      %v859 = vlaneseq
      %v860 = vshrl.u32 %v859, 7
      %v861 = vsub.s32 0, %v860
      %v862 = vrot.slane %v857, %v861
      %v872 = vunpack.c.l.b16 %v848
      %v873 = vunpack.c.l.b16 %v849
      %v874 = vunpack.c.l.b16 %v850
      %v875 = vunpack.c.l.b16 %v851
      %v876 = vunpack.c.l.b16 %v852
      %v877 = vunpack.c.l.b16 %v853
      %v878 = vunpack.c.l.b16 %v854
      %v879 = vunpack.c.l.b16 %v855
      %v880 = vpack.c.b16 %v873, %v872
      %v881 = vpack.c.b16 %v875, %v874
      %v882 = vpack.c.b16 %v877, %v876
      %v883 = vpack.c.b16 %v879, %v878
      %888 = vmatprep.subr.bf16.mxu0 0
      %889 = vmatpush1.bf16.msra.mxu0 0
      %890 = vmatprep.subr.bf16.mxu0 0
      %891 = vmatpush1.bf16.msra.mxu0 0
      %892 = vmatprep.subr.bf16.mxu0 0
      %893 = vmatpush1.bf16.msra.mxu0 0
      %894 = vmatprep.subr.bf16.mxu0 0
      %895 = vmatpush1.bf16.msra.mxu0 0
      %896 = vmatprep.subr.bf16.mxu0 0
      %897 = vmatpush1.bf16.msra.mxu0 %v883
      %898 = vmatprep.subr.bf16.mxu0 0
      %899 = vmatpush1.bf16.msra.mxu0 %v882
      %900 = vmatprep.subr.bf16.mxu0 0
      %901 = vmatpush1.bf16.msra.mxu0 %v881
      %902 = vmatprep.subr.bf16.mxu0 0
      %903 = vmatpush1.bf16.msra.mxu0 %v880
      %904 = vmatprep.subr.bf16.mxu0 0
      %905 = vmatpush2.bf16.msra.mxu0 0
      %906 = vmatprep.subr.bf16.mxu0 0
      %907 = vmatpush2.bf16.msra.mxu0 0
      %908 = vmatprep.subr.bf16.mxu0 0
      %909 = vmatpush2.bf16.msra.mxu0 0
      %910 = vmatprep.subr.bf16.mxu0 0
      %911 = vmatpush2.bf16.msra.mxu0 0
      %912 = vmatprep.subr.bf16.mxu0 0
      %913 = vmatpush2.bf16.msra.mxu0 0
      %914 = vmatprep.subr.bf16.mxu0 0
      %915 = vmatpush2.bf16.msra.mxu0 0
      %916 = vmatprep.subr.bf16.mxu0 0
      %917 = vmatpush2.bf16.msra.mxu0 0
      %918 = vmatprep.subr.bf16.mxu0 0
      %919 = vmatpush2.bf16.msra.mxu0 0
      %920 = vmatprep.mubr.bf16.mxu0 0
      %921 = vmatmul.mubr.bf16.gmra.mxu0 %v477
      %v922 = vpop.f32.mrf.mxu0
      %v923 = vadd.f32 %v862, %v922
      %v924 = vpop.f32.mrf.mxu0
      %v925 = vpop.f32.mrf.mxu0
      %v926 = vpop.f32.mrf.mxu0
      %927 = vdwg.mxu0
      %s928 = scalar_lea.vmem %s3, 160
      %v929 = vld [vmem:[%s928] sm:$0xf]
      %v930 = vld [vmem:[%s928 + $0x4] sm:$0xf]
      %v931 = vld [vmem:[%s928 + $0x8] sm:$0xf]
      %v932 = vld [vmem:[%s928 + $0xc] sm:$0xf]
      %v933 = vld [vmem:[%s928 + $0x10] sm:$0xf]
      %v934 = vld [vmem:[%s928 + $0x14] sm:$0xf]
      %v935 = vld [vmem:[%s928 + $0x18] sm:$0xf]
      %v936 = vld [vmem:[%s928 + $0x1c] sm:$0xf]
      %s937 = scalar_lea.vmem %s4, 5
      %v938 = vld [vmem:[%s937] sm:$0x1]
      %v940 = vlaneseq
      %v941 = vshrl.u32 %v940, 7
      %v942 = vsub.s32 0, %v941
      %v943 = vrot.slane %v938, %v942
      %v953 = vunpack.c.l.b16 %v929
      %v954 = vunpack.c.l.b16 %v930
      %v955 = vunpack.c.l.b16 %v931
      %v956 = vunpack.c.l.b16 %v932
      %v957 = vunpack.c.l.b16 %v933
      %v958 = vunpack.c.l.b16 %v934
      %v959 = vunpack.c.l.b16 %v935
      %v960 = vunpack.c.l.b16 %v936
      %v961 = vpack.c.b16 %v954, %v953
      %v962 = vpack.c.b16 %v956, %v955
      %v963 = vpack.c.b16 %v958, %v957
      %v964 = vpack.c.b16 %v960, %v959
      %969 = vmatprep.subr.bf16.mxu0 0
      %970 = vmatpush1.bf16.msra.mxu0 0
      %971 = vmatprep.subr.bf16.mxu0 0
      %972 = vmatpush1.bf16.msra.mxu0 0
      %973 = vmatprep.subr.bf16.mxu0 0
      %974 = vmatpush1.bf16.msra.mxu0 0
      %975 = vmatprep.subr.bf16.mxu0 0
      %976 = vmatpush1.bf16.msra.mxu0 0
      %977 = vmatprep.subr.bf16.mxu0 0
      %978 = vmatpush1.bf16.msra.mxu0 %v964
      %979 = vmatprep.subr.bf16.mxu0 0
      %980 = vmatpush1.bf16.msra.mxu0 %v963
      %981 = vmatprep.subr.bf16.mxu0 0
      %982 = vmatpush1.bf16.msra.mxu0 %v962
      %983 = vmatprep.subr.bf16.mxu0 0
      %984 = vmatpush1.bf16.msra.mxu0 %v961
      %985 = vmatprep.subr.bf16.mxu0 0
      %986 = vmatpush2.bf16.msra.mxu0 0
      %987 = vmatprep.subr.bf16.mxu0 0
      %988 = vmatpush2.bf16.msra.mxu0 0
      %989 = vmatprep.subr.bf16.mxu0 0
      %990 = vmatpush2.bf16.msra.mxu0 0
      %991 = vmatprep.subr.bf16.mxu0 0
      %992 = vmatpush2.bf16.msra.mxu0 0
      %993 = vmatprep.subr.bf16.mxu0 0
      %994 = vmatpush2.bf16.msra.mxu0 0
      %995 = vmatprep.subr.bf16.mxu0 0
      %996 = vmatpush2.bf16.msra.mxu0 0
      %997 = vmatprep.subr.bf16.mxu0 0
      %998 = vmatpush2.bf16.msra.mxu0 0
      %999 = vmatprep.subr.bf16.mxu0 0
      %1000 = vmatpush2.bf16.msra.mxu0 0
      %1001 = vmatprep.mubr.bf16.mxu0 0
      %1002 = vmatmul.mubr.bf16.gmra.mxu0 %v477
      %v1003 = vpop.f32.mrf.mxu0
      %v1004 = vadd.f32 %v943, %v1003
      %v1005 = vpop.f32.mrf.mxu0
      %v1006 = vpop.f32.mrf.mxu0
      %v1007 = vpop.f32.mrf.mxu0
      %1008 = vdwg.mxu0
      %s1009 = scalar_lea.vmem %s3, 288
      %v1010 = vld [vmem:[%s1009] sm:$0xf]
      %v1011 = vld [vmem:[%s1009 + $0x4] sm:$0xf]
      %v1012 = vld [vmem:[%s1009 + $0x8] sm:$0xf]
      %v1013 = vld [vmem:[%s1009 + $0xc] sm:$0xf]
      %v1014 = vld [vmem:[%s1009 + $0x10] sm:$0xf]
      %v1015 = vld [vmem:[%s1009 + $0x14] sm:$0xf]
      %v1016 = vld [vmem:[%s1009 + $0x18] sm:$0xf]
      %v1017 = vld [vmem:[%s1009 + $0x1c] sm:$0xf]
      %s1018 = scalar_lea.vmem %s4, 9
      %v1019 = vld [vmem:[%s1018] sm:$0x1]
      %v1021 = vlaneseq
      %v1022 = vshrl.u32 %v1021, 7
      %v1023 = vsub.s32 0, %v1022
      %v1024 = vrot.slane %v1019, %v1023
      %v1034 = vunpack.c.l.b16 %v1010
      %v1035 = vunpack.c.l.b16 %v1011
      %v1036 = vunpack.c.l.b16 %v1012
      %v1037 = vunpack.c.l.b16 %v1013
      %v1038 = vunpack.c.l.b16 %v1014
      %v1039 = vunpack.c.l.b16 %v1015
      %v1040 = vunpack.c.l.b16 %v1016
      %v1041 = vunpack.c.l.b16 %v1017
      %v1042 = vpack.c.b16 %v1035, %v1034
      %v1043 = vpack.c.b16 %v1037, %v1036
      %v1044 = vpack.c.b16 %v1039, %v1038
      %v1045 = vpack.c.b16 %v1041, %v1040
      %1050 = vmatprep.subr.bf16.mxu0 0
      %1051 = vmatpush1.bf16.msra.mxu0 0
      %1052 = vmatprep.subr.bf16.mxu0 0
      %1053 = vmatpush1.bf16.msra.mxu0 0
      %1054 = vmatprep.subr.bf16.mxu0 0
      %1055 = vmatpush1.bf16.msra.mxu0 0
      %1056 = vmatprep.subr.bf16.mxu0 0
      %1057 = vmatpush1.bf16.msra.mxu0 0
      %1058 = vmatprep.subr.bf16.mxu0 0
      %1059 = vmatpush1.bf16.msra.mxu0 %v1045
      %1060 = vmatprep.subr.bf16.mxu0 0
      %1061 = vmatpush1.bf16.msra.mxu0 %v1044
      %1062 = vmatprep.subr.bf16.mxu0 0
      %1063 = vmatpush1.bf16.msra.mxu0 %v1043
      %1064 = vmatprep.subr.bf16.mxu0 0
      %1065 = vmatpush1.bf16.msra.mxu0 %v1042
      %1066 = vmatprep.subr.bf16.mxu0 0
      %1067 = vmatpush2.bf16.msra.mxu0 0
      %1068 = vmatprep.subr.bf16.mxu0 0
      %1069 = vmatpush2.bf16.msra.mxu0 0
      %1070 = vmatprep.subr.bf16.mxu0 0
      %1071 = vmatpush2.bf16.msra.mxu0 0
      %1072 = vmatprep.subr.bf16.mxu0 0
      %1073 = vmatpush2.bf16.msra.mxu0 0
      %1074 = vmatprep.subr.bf16.mxu0 0
      %1075 = vmatpush2.bf16.msra.mxu0 0
      %1076 = vmatprep.subr.bf16.mxu0 0
      %1077 = vmatpush2.bf16.msra.mxu0 0
      %1078 = vmatprep.subr.bf16.mxu0 0
      %1079 = vmatpush2.bf16.msra.mxu0 0
      %1080 = vmatprep.subr.bf16.mxu0 0
      %1081 = vmatpush2.bf16.msra.mxu0 0
      %1082 = vmatprep.mubr.bf16.mxu0 0
      %1083 = vmatmul.mubr.bf16.gmra.mxu0 %v477
      %v1084 = vpop.f32.mrf.mxu0
      %v1085 = vadd.f32 %v1024, %v1084
      %v1086 = vpop.f32.mrf.mxu0
      %v1087 = vpop.f32.mrf.mxu0
      %v1088 = vpop.f32.mrf.mxu0
      %1089 = vdwg.mxu0
      %v1091 = vsel %vm681, %v923, 0
      %v1094 = vsel %vm681, %v1004, 0
      %1096 = vmatprep.subr.mxu0 0.0
      %1097 = vmatpush1.xpose.msra.mxu0 0.0
      %1098 = vmatprep.subr.mxu0 0.0
      %1099 = vmatpush1.xpose.msra.mxu0 0.0
      %1100 = vmatprep.subr.mxu0 0.0
      %1101 = vmatpush1.xpose.msra.mxu0 0.0
      %1102 = vmatprep.subr.mxu0 0.0
      %1103 = vmatpush1.xpose.msra.mxu0 0.0
      %1104 = vmatprep.subr.mxu0 0.0
      %1105 = vmatpush1.xpose.msra.mxu0 0.0
      %1106 = vmatprep.subr.mxu0 0.0
      %1107 = vmatpush1.xpose.msra.mxu0 0.0
      %1108 = vmatprep.subr.mxu0 0.0
      %1109 = vmatpush1.xpose.msra.mxu0 0.0
      %1110 = vmatprep.subr.mxu0 0.0
      %1111 = vmatpush1.xpose.msra.mxu0 0.0
      %1112 = vmatprep.subr.mxu0 0.0
      %1113 = vmatpush1.xpose.msra.mxu0 0.0
      %1114 = vmatprep.subr.mxu0 0.0
      %1115 = vmatpush1.xpose.msra.mxu0 0.0
      %1116 = vmatprep.subr.mxu0 0.0
      %1117 = vmatpush1.xpose.msra.mxu0 0.0
      %1118 = vmatprep.subr.mxu0 0.0
      %1119 = vmatpush1.xpose.msra.mxu0 0.0
      %1120 = vmatprep.subr.mxu0 0.0
      %1121 = vmatpush1.xpose.msra.mxu0 0.0
      %1122 = vmatprep.subr.mxu0 0.0
      %1123 = vmatpush1.xpose.msra.mxu0 0.0
      %1124 = vmatprep.subr.mxu0 0.0
      %1125 = vmatpush1.xpose.msra.mxu0 0.0
      %1126 = vmatprep.subr.mxu0 0.0
      %1127 = vmatpush1.xpose.msra.mxu0 %v1094
      %1128 = vmatprep.subr.mxu0 0.0
      %1129 = vmatpush2.xpose.msra.mxu0 0.0
      %1130 = vmatprep.subr.mxu0 0.0
      %1131 = vmatpush2.xpose.msra.mxu0 0.0
      %1132 = vmatprep.subr.mxu0 0.0
      %1133 = vmatpush2.xpose.msra.mxu0 0.0
      %1134 = vmatprep.subr.mxu0 0.0
      %1135 = vmatpush2.xpose.msra.mxu0 0.0
      %1136 = vmatprep.subr.mxu0 0.0
      %1137 = vmatpush2.xpose.msra.mxu0 0.0
      %1138 = vmatprep.subr.mxu0 0.0
      %1139 = vmatpush2.xpose.msra.mxu0 0.0
      %1140 = vmatprep.subr.mxu0 0.0
      %1141 = vmatpush2.xpose.msra.mxu0 0.0
      %1142 = vmatprep.subr.mxu0 0.0
      %1143 = vmatpush2.xpose.msra.mxu0 0.0
      %1144 = vmatprep.subr.mxu0 0.0
      %1145 = vmatpush2.xpose.msra.mxu0 0.0
      %1146 = vmatprep.subr.mxu0 0.0
      %1147 = vmatpush2.xpose.msra.mxu0 0.0
      %1148 = vmatprep.subr.mxu0 0.0
      %1149 = vmatpush2.xpose.msra.mxu0 0.0
      %1150 = vmatprep.subr.mxu0 0.0
      %1151 = vmatpush2.xpose.msra.mxu0 0.0
      %1152 = vmatprep.subr.mxu0 0.0
      %1153 = vmatpush2.xpose.msra.mxu0 0.0
      %1154 = vmatprep.subr.mxu0 0.0
      %1155 = vmatpush2.xpose.msra.mxu0 0.0
      %1156 = vmatprep.subr.mxu0 0.0
      %1157 = vmatpush2.xpose.msra.mxu0 0.0
      %1158 = vmatprep.subr.mxu0 0.0
      %1159 = vmatpush2.xpose.msra.mxu0 0.0
      %1160 = vmatprep.mubr.f32.mxu0 0.0
      %1161 = vmatmul.mubr.f32.gmra.mxu0 %v1091
      %v1162 = vpop.f32.mrf.mxu0
      %v1163 = vadd.f32 0.0, %v1162
      %v1164 = vpop.f32.mrf.mxu0
      %1165 = vdwg.mxu0
      %v1166 = vmul.f32 %v1163, 0.25
      %v1167 = vsel %vm759, %v1166, -inf
      %1168 = vmax.xlane.f32.xlu0 %v1167
      %v1169 = vpop.xlane.xlu0 %1168
      %v1170 = vsub.f32 %v1166, %v1169
      %v1171 = vmul.f32 %v1170, 1.442695
      %v1172 = vpow.pop %v1171
      %v1173 = vsel %vm759, %v1172, 0.0
      %1174 = vadd.xlane.f32.xlu0 %v1173
      %v1175 = vpop.xlane.xlu0 %1174
      %v1176 = vrcp.pop %v1175
      %v1177 = vmul.f32 %v1172, %v1176
      %v1179 = vsel %vm759, %v1177, 0
      %1181 = vmatprep.subr.mxu0 0.0
      %1182 = vmatpush1.msra.mxu0 0.0
      %1183 = vmatprep.subr.mxu0 0.0
      %1184 = vmatpush1.msra.mxu0 0.0
      %1185 = vmatprep.subr.mxu0 0.0
      %1186 = vmatpush1.msra.mxu0 0.0
      %1187 = vmatprep.subr.mxu0 0.0
      %1188 = vmatpush1.msra.mxu0 0.0
      %1189 = vmatprep.subr.mxu0 0.0
      %1190 = vmatpush1.msra.mxu0 0.0
      %1191 = vmatprep.subr.mxu0 0.0
      %1192 = vmatpush1.msra.mxu0 0.0
      %1193 = vmatprep.subr.mxu0 0.0
      %1194 = vmatpush1.msra.mxu0 0.0
      %1195 = vmatprep.subr.mxu0 0.0
      %1196 = vmatpush1.msra.mxu0 0.0
      %1197 = vmatprep.subr.mxu0 0.0
      %1198 = vmatpush1.msra.mxu0 0.0
      %1199 = vmatprep.subr.mxu0 0.0
      %1200 = vmatpush1.msra.mxu0 0.0
      %1201 = vmatprep.subr.mxu0 0.0
      %1202 = vmatpush1.msra.mxu0 0.0
      %1203 = vmatprep.subr.mxu0 0.0
      %1204 = vmatpush1.msra.mxu0 0.0
      %1205 = vmatprep.subr.mxu0 0.0
      %1206 = vmatpush1.msra.mxu0 0.0
      %1207 = vmatprep.subr.mxu0 0.0
      %1208 = vmatpush1.msra.mxu0 0.0
      %1209 = vmatprep.subr.mxu0 0.0
      %1210 = vmatpush1.msra.mxu0 0.0
      %1211 = vmatprep.subr.mxu0 0.0
      %1212 = vmatpush1.msra.mxu0 %v1085
      %1213 = vmatprep.subr.mxu0 0.0
      %1214 = vmatpush2.msra.mxu0 0.0
      %1215 = vmatprep.subr.mxu0 0.0
      %1216 = vmatpush2.msra.mxu0 0.0
      %1217 = vmatprep.subr.mxu0 0.0
      %1218 = vmatpush2.msra.mxu0 0.0
      %1219 = vmatprep.subr.mxu0 0.0
      %1220 = vmatpush2.msra.mxu0 0.0
      %1221 = vmatprep.subr.mxu0 0.0
      %1222 = vmatpush2.msra.mxu0 0.0
      %1223 = vmatprep.subr.mxu0 0.0
      %1224 = vmatpush2.msra.mxu0 0.0
      %1225 = vmatprep.subr.mxu0 0.0
      %1226 = vmatpush2.msra.mxu0 0.0
      %1227 = vmatprep.subr.mxu0 0.0
      %1228 = vmatpush2.msra.mxu0 0.0
      %1229 = vmatprep.subr.mxu0 0.0
      %1230 = vmatpush2.msra.mxu0 0.0
      %1231 = vmatprep.subr.mxu0 0.0
      %1232 = vmatpush2.msra.mxu0 0.0
      %1233 = vmatprep.subr.mxu0 0.0
      %1234 = vmatpush2.msra.mxu0 0.0
      %1235 = vmatprep.subr.mxu0 0.0
      %1236 = vmatpush2.msra.mxu0 0.0
      %1237 = vmatprep.subr.mxu0 0.0
      %1238 = vmatpush2.msra.mxu0 0.0
      %1239 = vmatprep.subr.mxu0 0.0
      %1240 = vmatpush2.msra.mxu0 0.0
      %1241 = vmatprep.subr.mxu0 0.0
      %1242 = vmatpush2.msra.mxu0 0.0
      %1243 = vmatprep.subr.mxu0 0.0
      %1244 = vmatpush2.msra.mxu0 0.0
      %1245 = vmatprep.mubr.f32.mxu0 0.0
      %1246 = vmatmul.mubr.f32.gmra.mxu0 %v1179
      %v1247 = vpop.f32.mrf.mxu0
      %v1248 = vadd.f32 0.0, %v1247
      %v1249 = vpop.f32.mrf.mxu0
      %1250 = vdwg.mxu0
      %v1251 = vpack.c.bf16 %v1248, %v1248
      %s1252 = scalar_lea.vmem %s5, 8
      %v1253 = vld [vmem:[%s1252] sm:$0xf]
      %v1254 = vld [vmem:[%s1252 + $0x4] sm:$0xf]
      %v1257 = vunpack.c.l.b16 %v1253
      %v1258 = vunpack.c.l.b16 %v1254
      %v1259 = vpack.c.b16 %v1258, %v1257
      %v1262 = vsel %vm681, %v1251, 0
      %1264 = vmatprep.subr.bf16.mxu0 0
      %1265 = vmatpush1.bf16.msra.mxu0 0
      %1266 = vmatprep.subr.bf16.mxu0 0
      %1267 = vmatpush1.bf16.msra.mxu0 0
      %1268 = vmatprep.subr.bf16.mxu0 0
      %1269 = vmatpush1.bf16.msra.mxu0 0
      %1270 = vmatprep.subr.bf16.mxu0 0
      %1271 = vmatpush1.bf16.msra.mxu0 0
      %1272 = vmatprep.subr.bf16.mxu0 0
      %1273 = vmatpush1.bf16.msra.mxu0 0
      %1274 = vmatprep.subr.bf16.mxu0 0
      %1275 = vmatpush1.bf16.msra.mxu0 0
      %1276 = vmatprep.subr.bf16.mxu0 0
      %1277 = vmatpush1.bf16.msra.mxu0 0
      %1278 = vmatprep.subr.bf16.mxu0 0
      %1279 = vmatpush1.bf16.msra.mxu0 %v1259
      %1280 = vmatprep.subr.bf16.mxu0 0
      %1281 = vmatpush2.bf16.msra.mxu0 0
      %1282 = vmatprep.subr.bf16.mxu0 0
      %1283 = vmatpush2.bf16.msra.mxu0 0
      %1284 = vmatprep.subr.bf16.mxu0 0
      %1285 = vmatpush2.bf16.msra.mxu0 0
      %1286 = vmatprep.subr.bf16.mxu0 0
      %1287 = vmatpush2.bf16.msra.mxu0 0
      %1288 = vmatprep.subr.bf16.mxu0 0
      %1289 = vmatpush2.bf16.msra.mxu0 0
      %1290 = vmatprep.subr.bf16.mxu0 0
      %1291 = vmatpush2.bf16.msra.mxu0 0
      %1292 = vmatprep.subr.bf16.mxu0 0
      %1293 = vmatpush2.bf16.msra.mxu0 0
      %1294 = vmatprep.subr.bf16.mxu0 0
      %1295 = vmatpush2.bf16.msra.mxu0 0
      %1296 = vmatprep.mubr.bf16.mxu0 0
      %1297 = vmatmul.mubr.bf16.gmra.mxu0 %v1262
      %v1298 = vpop.f32.mrf.mxu0
      %v1299 = vadd.f32 0.0, %v1298
      %v1300 = vpop.f32.mrf.mxu0
      %v1301 = vpop.f32.mrf.mxu0
      %v1302 = vpop.f32.mrf.mxu0
      %1303 = vdwg.mxu0
      %v1306 = vunpack.c.l.b16 %v845
      %v1307 = vunpack.c.l.b16 %v846
      %v1308 = vpack.c.b16 %v1307, %v1306
      %v1311 = vsel %vm681, %v844, 0
      %1313 = vmatprep.subr.bf16.mxu0 0
      %1314 = vmatpush1.bf16.msra.mxu0 0
      %1315 = vmatprep.subr.bf16.mxu0 0
      %1316 = vmatpush1.bf16.msra.mxu0 0
      %1317 = vmatprep.subr.bf16.mxu0 0
      %1318 = vmatpush1.bf16.msra.mxu0 0
      %1319 = vmatprep.subr.bf16.mxu0 0
      %1320 = vmatpush1.bf16.msra.mxu0 0
      %1321 = vmatprep.subr.bf16.mxu0 0
      %1322 = vmatpush1.bf16.msra.mxu0 0
      %1323 = vmatprep.subr.bf16.mxu0 0
      %1324 = vmatpush1.bf16.msra.mxu0 0
      %1325 = vmatprep.subr.bf16.mxu0 0
      %1326 = vmatpush1.bf16.msra.mxu0 0
      %1327 = vmatprep.subr.bf16.mxu0 0
      %1328 = vmatpush1.bf16.msra.mxu0 %v1308
      %1329 = vmatprep.subr.bf16.mxu0 0
      %1330 = vmatpush2.bf16.msra.mxu0 0
      %1331 = vmatprep.subr.bf16.mxu0 0
      %1332 = vmatpush2.bf16.msra.mxu0 0
      %1333 = vmatprep.subr.bf16.mxu0 0
      %1334 = vmatpush2.bf16.msra.mxu0 0
      %1335 = vmatprep.subr.bf16.mxu0 0
      %1336 = vmatpush2.bf16.msra.mxu0 0
      %1337 = vmatprep.subr.bf16.mxu0 0
      %1338 = vmatpush2.bf16.msra.mxu0 0
      %1339 = vmatprep.subr.bf16.mxu0 0
      %1340 = vmatpush2.bf16.msra.mxu0 0
      %1341 = vmatprep.subr.bf16.mxu0 0
      %1342 = vmatpush2.bf16.msra.mxu0 0
      %1343 = vmatprep.subr.bf16.mxu0 0
      %1344 = vmatpush2.bf16.msra.mxu0 0
      %1345 = vmatprep.mubr.bf16.mxu0 0
      %1346 = vmatmul.mubr.bf16.gmra.mxu0 %v1311
      %v1347 = vpop.f32.mrf.mxu0
      %v1348 = vadd.f32 %v1299, %v1347
      %v1349 = vpop.f32.mrf.mxu0
      %v1350 = vpop.f32.mrf.mxu0
      %v1351 = vpop.f32.mrf.mxu0
      %1352 = vdwg.mxu0
      %s1353 = scalar_lea.vmem %s3, 64
      %v1354 = vld [vmem:[%s1353] sm:$0xf]
      %v1355 = vld [vmem:[%s1353 + $0x4] sm:$0xf]
      %v1356 = vld [vmem:[%s1353 + $0x8] sm:$0xf]
      %v1357 = vld [vmem:[%s1353 + $0xc] sm:$0xf]
      %v1358 = vld [vmem:[%s1353 + $0x10] sm:$0xf]
      %v1359 = vld [vmem:[%s1353 + $0x14] sm:$0xf]
      %v1360 = vld [vmem:[%s1353 + $0x18] sm:$0xf]
      %v1361 = vld [vmem:[%s1353 + $0x1c] sm:$0xf]
      %s1362 = scalar_lea.vmem %s4, 2
      %v1363 = vld [vmem:[%s1362] sm:$0x1]
      %v1365 = vlaneseq
      %v1366 = vshrl.u32 %v1365, 7
      %v1367 = vsub.s32 0, %v1366
      %v1368 = vrot.slane %v1363, %v1367
      %v1378 = vunpack.c.l.b16 %v1354
      %v1379 = vunpack.c.l.b16 %v1355
      %v1380 = vunpack.c.l.b16 %v1356
      %v1381 = vunpack.c.l.b16 %v1357
      %v1382 = vunpack.c.l.b16 %v1358
      %v1383 = vunpack.c.l.b16 %v1359
      %v1384 = vunpack.c.l.b16 %v1360
      %v1385 = vunpack.c.l.b16 %v1361
      %v1386 = vpack.c.b16 %v1379, %v1378
      %v1387 = vpack.c.b16 %v1381, %v1380
      %v1388 = vpack.c.b16 %v1383, %v1382
      %v1389 = vpack.c.b16 %v1385, %v1384
      %1394 = vmatprep.subr.bf16.mxu0 0
      %1395 = vmatpush1.bf16.msra.mxu0 0
      %1396 = vmatprep.subr.bf16.mxu0 0
      %1397 = vmatpush1.bf16.msra.mxu0 0
      %1398 = vmatprep.subr.bf16.mxu0 0
      %1399 = vmatpush1.bf16.msra.mxu0 0
      %1400 = vmatprep.subr.bf16.mxu0 0
      %1401 = vmatpush1.bf16.msra.mxu0 0
      %1402 = vmatprep.subr.bf16.mxu0 0
      %1403 = vmatpush1.bf16.msra.mxu0 %v1389
      %1404 = vmatprep.subr.bf16.mxu0 0
      %1405 = vmatpush1.bf16.msra.mxu0 %v1388
      %1406 = vmatprep.subr.bf16.mxu0 0
      %1407 = vmatpush1.bf16.msra.mxu0 %v1387
      %1408 = vmatprep.subr.bf16.mxu0 0
      %1409 = vmatpush1.bf16.msra.mxu0 %v1386
      %1410 = vmatprep.subr.bf16.mxu0 0
      %1411 = vmatpush2.bf16.msra.mxu0 0
      %1412 = vmatprep.subr.bf16.mxu0 0
      %1413 = vmatpush2.bf16.msra.mxu0 0
      %1414 = vmatprep.subr.bf16.mxu0 0
      %1415 = vmatpush2.bf16.msra.mxu0 0
      %1416 = vmatprep.subr.bf16.mxu0 0
      %1417 = vmatpush2.bf16.msra.mxu0 0
      %1418 = vmatprep.subr.bf16.mxu0 0
      %1419 = vmatpush2.bf16.msra.mxu0 0
      %1420 = vmatprep.subr.bf16.mxu0 0
      %1421 = vmatpush2.bf16.msra.mxu0 0
      %1422 = vmatprep.subr.bf16.mxu0 0
      %1423 = vmatpush2.bf16.msra.mxu0 0
      %1424 = vmatprep.subr.bf16.mxu0 0
      %1425 = vmatpush2.bf16.msra.mxu0 0
      %1426 = vmatprep.mubr.bf16.mxu0 0
      %1427 = vmatmul.mubr.bf16.gmra.mxu0 %v477
      %v1428 = vpop.f32.mrf.mxu0
      %v1429 = vadd.f32 %v1368, %v1428
      %v1430 = vpop.f32.mrf.mxu0
      %v1431 = vpop.f32.mrf.mxu0
      %v1432 = vpop.f32.mrf.mxu0
      %1433 = vdwg.mxu0
      %s1434 = scalar_lea.vmem %s3, 192
      %v1435 = vld [vmem:[%s1434] sm:$0xf]
      %v1436 = vld [vmem:[%s1434 + $0x4] sm:$0xf]
      %v1437 = vld [vmem:[%s1434 + $0x8] sm:$0xf]
      %v1438 = vld [vmem:[%s1434 + $0xc] sm:$0xf]
      %v1439 = vld [vmem:[%s1434 + $0x10] sm:$0xf]
      %v1440 = vld [vmem:[%s1434 + $0x14] sm:$0xf]
      %v1441 = vld [vmem:[%s1434 + $0x18] sm:$0xf]
      %v1442 = vld [vmem:[%s1434 + $0x1c] sm:$0xf]
      %s1443 = scalar_lea.vmem %s4, 6
      %v1444 = vld [vmem:[%s1443] sm:$0x1]
      %v1446 = vlaneseq
      %v1447 = vshrl.u32 %v1446, 7
      %v1448 = vsub.s32 0, %v1447
      %v1449 = vrot.slane %v1444, %v1448
      %v1459 = vunpack.c.l.b16 %v1435
      %v1460 = vunpack.c.l.b16 %v1436
      %v1461 = vunpack.c.l.b16 %v1437
      %v1462 = vunpack.c.l.b16 %v1438
      %v1463 = vunpack.c.l.b16 %v1439
      %v1464 = vunpack.c.l.b16 %v1440
      %v1465 = vunpack.c.l.b16 %v1441
      %v1466 = vunpack.c.l.b16 %v1442
      %v1467 = vpack.c.b16 %v1460, %v1459
      %v1468 = vpack.c.b16 %v1462, %v1461
      %v1469 = vpack.c.b16 %v1464, %v1463
      %v1470 = vpack.c.b16 %v1466, %v1465
      %1475 = vmatprep.subr.bf16.mxu0 0
      %1476 = vmatpush1.bf16.msra.mxu0 0
      %1477 = vmatprep.subr.bf16.mxu0 0
      %1478 = vmatpush1.bf16.msra.mxu0 0
      %1479 = vmatprep.subr.bf16.mxu0 0
      %1480 = vmatpush1.bf16.msra.mxu0 0
      %1481 = vmatprep.subr.bf16.mxu0 0
      %1482 = vmatpush1.bf16.msra.mxu0 0
      %1483 = vmatprep.subr.bf16.mxu0 0
      %1484 = vmatpush1.bf16.msra.mxu0 %v1470
      %1485 = vmatprep.subr.bf16.mxu0 0
      %1486 = vmatpush1.bf16.msra.mxu0 %v1469
      %1487 = vmatprep.subr.bf16.mxu0 0
      %1488 = vmatpush1.bf16.msra.mxu0 %v1468
      %1489 = vmatprep.subr.bf16.mxu0 0
      %1490 = vmatpush1.bf16.msra.mxu0 %v1467
      %1491 = vmatprep.subr.bf16.mxu0 0
      %1492 = vmatpush2.bf16.msra.mxu0 0
      %1493 = vmatprep.subr.bf16.mxu0 0
      %1494 = vmatpush2.bf16.msra.mxu0 0
      %1495 = vmatprep.subr.bf16.mxu0 0
      %1496 = vmatpush2.bf16.msra.mxu0 0
      %1497 = vmatprep.subr.bf16.mxu0 0
      %1498 = vmatpush2.bf16.msra.mxu0 0
      %1499 = vmatprep.subr.bf16.mxu0 0
      %1500 = vmatpush2.bf16.msra.mxu0 0
      %1501 = vmatprep.subr.bf16.mxu0 0
      %1502 = vmatpush2.bf16.msra.mxu0 0
      %1503 = vmatprep.subr.bf16.mxu0 0
      %1504 = vmatpush2.bf16.msra.mxu0 0
      %1505 = vmatprep.subr.bf16.mxu0 0
      %1506 = vmatpush2.bf16.msra.mxu0 0
      %1507 = vmatprep.mubr.bf16.mxu0 0
      %1508 = vmatmul.mubr.bf16.gmra.mxu0 %v477
      %v1509 = vpop.f32.mrf.mxu0
      %v1510 = vadd.f32 %v1449, %v1509
      %v1511 = vpop.f32.mrf.mxu0
      %v1512 = vpop.f32.mrf.mxu0
      %v1513 = vpop.f32.mrf.mxu0
      %1514 = vdwg.mxu0
      %s1515 = scalar_lea.vmem %s3, 320
      %v1516 = vld [vmem:[%s1515] sm:$0xf]
      %v1517 = vld [vmem:[%s1515 + $0x4] sm:$0xf]
      %v1518 = vld [vmem:[%s1515 + $0x8] sm:$0xf]
      %v1519 = vld [vmem:[%s1515 + $0xc] sm:$0xf]
      %v1520 = vld [vmem:[%s1515 + $0x10] sm:$0xf]
      %v1521 = vld [vmem:[%s1515 + $0x14] sm:$0xf]
      %v1522 = vld [vmem:[%s1515 + $0x18] sm:$0xf]
      %v1523 = vld [vmem:[%s1515 + $0x1c] sm:$0xf]
      %s1524 = scalar_lea.vmem %s4, 10
      %v1525 = vld [vmem:[%s1524] sm:$0x1]
      %v1527 = vlaneseq
      %v1528 = vshrl.u32 %v1527, 7
      %v1529 = vsub.s32 0, %v1528
      %v1530 = vrot.slane %v1525, %v1529
      %v1540 = vunpack.c.l.b16 %v1516
      %v1541 = vunpack.c.l.b16 %v1517
      %v1542 = vunpack.c.l.b16 %v1518
      %v1543 = vunpack.c.l.b16 %v1519
      %v1544 = vunpack.c.l.b16 %v1520
      %v1545 = vunpack.c.l.b16 %v1521
      %v1546 = vunpack.c.l.b16 %v1522
      %v1547 = vunpack.c.l.b16 %v1523
      %v1548 = vpack.c.b16 %v1541, %v1540
      %v1549 = vpack.c.b16 %v1543, %v1542
      %v1550 = vpack.c.b16 %v1545, %v1544
      %v1551 = vpack.c.b16 %v1547, %v1546
      %1556 = vmatprep.subr.bf16.mxu0 0
      %1557 = vmatpush1.bf16.msra.mxu0 0
      %1558 = vmatprep.subr.bf16.mxu0 0
      %1559 = vmatpush1.bf16.msra.mxu0 0
      %1560 = vmatprep.subr.bf16.mxu0 0
      %1561 = vmatpush1.bf16.msra.mxu0 0
      %1562 = vmatprep.subr.bf16.mxu0 0
      %1563 = vmatpush1.bf16.msra.mxu0 0
      %1564 = vmatprep.subr.bf16.mxu0 0
      %1565 = vmatpush1.bf16.msra.mxu0 %v1551
      %1566 = vmatprep.subr.bf16.mxu0 0
      %1567 = vmatpush1.bf16.msra.mxu0 %v1550
      %1568 = vmatprep.subr.bf16.mxu0 0
      %1569 = vmatpush1.bf16.msra.mxu0 %v1549
      %1570 = vmatprep.subr.bf16.mxu0 0
      %1571 = vmatpush1.bf16.msra.mxu0 %v1548
      %1572 = vmatprep.subr.bf16.mxu0 0
      %1573 = vmatpush2.bf16.msra.mxu0 0
      %1574 = vmatprep.subr.bf16.mxu0 0
      %1575 = vmatpush2.bf16.msra.mxu0 0
      %1576 = vmatprep.subr.bf16.mxu0 0
      %1577 = vmatpush2.bf16.msra.mxu0 0
      %1578 = vmatprep.subr.bf16.mxu0 0
      %1579 = vmatpush2.bf16.msra.mxu0 0
      %1580 = vmatprep.subr.bf16.mxu0 0
      %1581 = vmatpush2.bf16.msra.mxu0 0
      %1582 = vmatprep.subr.bf16.mxu0 0
      %1583 = vmatpush2.bf16.msra.mxu0 0
      %1584 = vmatprep.subr.bf16.mxu0 0
      %1585 = vmatpush2.bf16.msra.mxu0 0
      %1586 = vmatprep.subr.bf16.mxu0 0
      %1587 = vmatpush2.bf16.msra.mxu0 0
      %1588 = vmatprep.mubr.bf16.mxu0 0
      %1589 = vmatmul.mubr.bf16.gmra.mxu0 %v477
      %v1590 = vpop.f32.mrf.mxu0
      %v1591 = vadd.f32 %v1530, %v1590
      %v1592 = vpop.f32.mrf.mxu0
      %v1593 = vpop.f32.mrf.mxu0
      %v1594 = vpop.f32.mrf.mxu0
      %1595 = vdwg.mxu0
      %v1597 = vsel %vm681, %v1429, 0
      %v1600 = vsel %vm681, %v1510, 0
      %1602 = vmatprep.subr.mxu0 0.0
      %1603 = vmatpush1.xpose.msra.mxu0 0.0
      %1604 = vmatprep.subr.mxu0 0.0
      %1605 = vmatpush1.xpose.msra.mxu0 0.0
      %1606 = vmatprep.subr.mxu0 0.0
      %1607 = vmatpush1.xpose.msra.mxu0 0.0
      %1608 = vmatprep.subr.mxu0 0.0
      %1609 = vmatpush1.xpose.msra.mxu0 0.0
      %1610 = vmatprep.subr.mxu0 0.0
      %1611 = vmatpush1.xpose.msra.mxu0 0.0
      %1612 = vmatprep.subr.mxu0 0.0
      %1613 = vmatpush1.xpose.msra.mxu0 0.0
      %1614 = vmatprep.subr.mxu0 0.0
      %1615 = vmatpush1.xpose.msra.mxu0 0.0
      %1616 = vmatprep.subr.mxu0 0.0
      %1617 = vmatpush1.xpose.msra.mxu0 0.0
      %1618 = vmatprep.subr.mxu0 0.0
      %1619 = vmatpush1.xpose.msra.mxu0 0.0
      %1620 = vmatprep.subr.mxu0 0.0
      %1621 = vmatpush1.xpose.msra.mxu0 0.0
      %1622 = vmatprep.subr.mxu0 0.0
      %1623 = vmatpush1.xpose.msra.mxu0 0.0
      %1624 = vmatprep.subr.mxu0 0.0
      %1625 = vmatpush1.xpose.msra.mxu0 0.0
      %1626 = vmatprep.subr.mxu0 0.0
      %1627 = vmatpush1.xpose.msra.mxu0 0.0
      %1628 = vmatprep.subr.mxu0 0.0
      %1629 = vmatpush1.xpose.msra.mxu0 0.0
      %1630 = vmatprep.subr.mxu0 0.0
      %1631 = vmatpush1.xpose.msra.mxu0 0.0
      %1632 = vmatprep.subr.mxu0 0.0
      %1633 = vmatpush1.xpose.msra.mxu0 %v1600
      %1634 = vmatprep.subr.mxu0 0.0
      %1635 = vmatpush2.xpose.msra.mxu0 0.0
      %1636 = vmatprep.subr.mxu0 0.0
      %1637 = vmatpush2.xpose.msra.mxu0 0.0
      %1638 = vmatprep.subr.mxu0 0.0
      %1639 = vmatpush2.xpose.msra.mxu0 0.0
      %1640 = vmatprep.subr.mxu0 0.0
      %1641 = vmatpush2.xpose.msra.mxu0 0.0
      %1642 = vmatprep.subr.mxu0 0.0
      %1643 = vmatpush2.xpose.msra.mxu0 0.0
      %1644 = vmatprep.subr.mxu0 0.0
      %1645 = vmatpush2.xpose.msra.mxu0 0.0
      %1646 = vmatprep.subr.mxu0 0.0
      %1647 = vmatpush2.xpose.msra.mxu0 0.0
      %1648 = vmatprep.subr.mxu0 0.0
      %1649 = vmatpush2.xpose.msra.mxu0 0.0
      %1650 = vmatprep.subr.mxu0 0.0
      %1651 = vmatpush2.xpose.msra.mxu0 0.0
      %1652 = vmatprep.subr.mxu0 0.0
      %1653 = vmatpush2.xpose.msra.mxu0 0.0
      %1654 = vmatprep.subr.mxu0 0.0
      %1655 = vmatpush2.xpose.msra.mxu0 0.0
      %1656 = vmatprep.subr.mxu0 0.0
      %1657 = vmatpush2.xpose.msra.mxu0 0.0
      %1658 = vmatprep.subr.mxu0 0.0
      %1659 = vmatpush2.xpose.msra.mxu0 0.0
      %1660 = vmatprep.subr.mxu0 0.0
      %1661 = vmatpush2.xpose.msra.mxu0 0.0
      %1662 = vmatprep.subr.mxu0 0.0
      %1663 = vmatpush2.xpose.msra.mxu0 0.0
      %1664 = vmatprep.subr.mxu0 0.0
      %1665 = vmatpush2.xpose.msra.mxu0 0.0
      %1666 = vmatprep.mubr.f32.mxu0 0.0
      %1667 = vmatmul.mubr.f32.gmra.mxu0 %v1597
      %v1668 = vpop.f32.mrf.mxu0
      %v1669 = vadd.f32 0.0, %v1668
      %v1670 = vpop.f32.mrf.mxu0
      %1671 = vdwg.mxu0
      %v1672 = vmul.f32 %v1669, 0.25
      %v1673 = vsel %vm759, %v1672, -inf
      %1674 = vmax.xlane.f32.xlu0 %v1673
      %v1675 = vpop.xlane.xlu0 %1674
      %v1676 = vsub.f32 %v1672, %v1675
      %v1677 = vmul.f32 %v1676, 1.442695
      %v1678 = vpow.pop %v1677
      %v1679 = vsel %vm759, %v1678, 0.0
      %1680 = vadd.xlane.f32.xlu0 %v1679
      %v1681 = vpop.xlane.xlu0 %1680
      %v1682 = vrcp.pop %v1681
      %v1683 = vmul.f32 %v1678, %v1682
      %v1685 = vsel %vm759, %v1683, 0
      %1687 = vmatprep.subr.mxu0 0.0
      %1688 = vmatpush1.msra.mxu0 0.0
      %1689 = vmatprep.subr.mxu0 0.0
      %1690 = vmatpush1.msra.mxu0 0.0
      %1691 = vmatprep.subr.mxu0 0.0
      %1692 = vmatpush1.msra.mxu0 0.0
      %1693 = vmatprep.subr.mxu0 0.0
      %1694 = vmatpush1.msra.mxu0 0.0
      %1695 = vmatprep.subr.mxu0 0.0
      %1696 = vmatpush1.msra.mxu0 0.0
      %1697 = vmatprep.subr.mxu0 0.0
      %1698 = vmatpush1.msra.mxu0 0.0
      %1699 = vmatprep.subr.mxu0 0.0
      %1700 = vmatpush1.msra.mxu0 0.0
      %1701 = vmatprep.subr.mxu0 0.0
      %1702 = vmatpush1.msra.mxu0 0.0
      %1703 = vmatprep.subr.mxu0 0.0
      %1704 = vmatpush1.msra.mxu0 0.0
      %1705 = vmatprep.subr.mxu0 0.0
      %1706 = vmatpush1.msra.mxu0 0.0
      %1707 = vmatprep.subr.mxu0 0.0
      %1708 = vmatpush1.msra.mxu0 0.0
      %1709 = vmatprep.subr.mxu0 0.0
      %1710 = vmatpush1.msra.mxu0 0.0
      %1711 = vmatprep.subr.mxu0 0.0
      %1712 = vmatpush1.msra.mxu0 0.0
      %1713 = vmatprep.subr.mxu0 0.0
      %1714 = vmatpush1.msra.mxu0 0.0
      %1715 = vmatprep.subr.mxu0 0.0
      %1716 = vmatpush1.msra.mxu0 0.0
      %1717 = vmatprep.subr.mxu0 0.0
      %1718 = vmatpush1.msra.mxu0 %v1591
      %1719 = vmatprep.subr.mxu0 0.0
      %1720 = vmatpush2.msra.mxu0 0.0
      %1721 = vmatprep.subr.mxu0 0.0
      %1722 = vmatpush2.msra.mxu0 0.0
      %1723 = vmatprep.subr.mxu0 0.0
      %1724 = vmatpush2.msra.mxu0 0.0
      %1725 = vmatprep.subr.mxu0 0.0
      %1726 = vmatpush2.msra.mxu0 0.0
      %1727 = vmatprep.subr.mxu0 0.0
      %1728 = vmatpush2.msra.mxu0 0.0
      %1729 = vmatprep.subr.mxu0 0.0
      %1730 = vmatpush2.msra.mxu0 0.0
      %1731 = vmatprep.subr.mxu0 0.0
      %1732 = vmatpush2.msra.mxu0 0.0
      %1733 = vmatprep.subr.mxu0 0.0
      %1734 = vmatpush2.msra.mxu0 0.0
      %1735 = vmatprep.subr.mxu0 0.0
      %1736 = vmatpush2.msra.mxu0 0.0
      %1737 = vmatprep.subr.mxu0 0.0
      %1738 = vmatpush2.msra.mxu0 0.0
      %1739 = vmatprep.subr.mxu0 0.0
      %1740 = vmatpush2.msra.mxu0 0.0
      %1741 = vmatprep.subr.mxu0 0.0
      %1742 = vmatpush2.msra.mxu0 0.0
      %1743 = vmatprep.subr.mxu0 0.0
      %1744 = vmatpush2.msra.mxu0 0.0
      %1745 = vmatprep.subr.mxu0 0.0
      %1746 = vmatpush2.msra.mxu0 0.0
      %1747 = vmatprep.subr.mxu0 0.0
      %1748 = vmatpush2.msra.mxu0 0.0
      %1749 = vmatprep.subr.mxu0 0.0
      %1750 = vmatpush2.msra.mxu0 0.0
      %1751 = vmatprep.mubr.f32.mxu0 0.0
      %1752 = vmatmul.mubr.f32.gmra.mxu0 %v1685
      %v1753 = vpop.f32.mrf.mxu0
      %v1754 = vadd.f32 0.0, %v1753
      %v1755 = vpop.f32.mrf.mxu0
      %1756 = vdwg.mxu0
      %v1757 = vpack.c.bf16 %v1754, %v1754
      %s1758 = scalar_lea.vmem %s5, 16
      %v1759 = vld [vmem:[%s1758] sm:$0xf]
      %v1760 = vld [vmem:[%s1758 + $0x4] sm:$0xf]
      %v1763 = vunpack.c.l.b16 %v1759
      %v1764 = vunpack.c.l.b16 %v1760
      %v1765 = vpack.c.b16 %v1764, %v1763
      %v1768 = vsel %vm681, %v1757, 0
      %1770 = vmatprep.subr.bf16.mxu0 0
      %1771 = vmatpush1.bf16.msra.mxu0 0
      %1772 = vmatprep.subr.bf16.mxu0 0
      %1773 = vmatpush1.bf16.msra.mxu0 0
      %1774 = vmatprep.subr.bf16.mxu0 0
      %1775 = vmatpush1.bf16.msra.mxu0 0
      %1776 = vmatprep.subr.bf16.mxu0 0
      %1777 = vmatpush1.bf16.msra.mxu0 0
      %1778 = vmatprep.subr.bf16.mxu0 0
      %1779 = vmatpush1.bf16.msra.mxu0 0
      %1780 = vmatprep.subr.bf16.mxu0 0
      %1781 = vmatpush1.bf16.msra.mxu0 0
      %1782 = vmatprep.subr.bf16.mxu0 0
      %1783 = vmatpush1.bf16.msra.mxu0 0
      %1784 = vmatprep.subr.bf16.mxu0 0
      %1785 = vmatpush1.bf16.msra.mxu0 %v1765
      %1786 = vmatprep.subr.bf16.mxu0 0
      %1787 = vmatpush2.bf16.msra.mxu0 0
      %1788 = vmatprep.subr.bf16.mxu0 0
      %1789 = vmatpush2.bf16.msra.mxu0 0
      %1790 = vmatprep.subr.bf16.mxu0 0
      %1791 = vmatpush2.bf16.msra.mxu0 0
      %1792 = vmatprep.subr.bf16.mxu0 0
      %1793 = vmatpush2.bf16.msra.mxu0 0
      %1794 = vmatprep.subr.bf16.mxu0 0
      %1795 = vmatpush2.bf16.msra.mxu0 0
      %1796 = vmatprep.subr.bf16.mxu0 0
      %1797 = vmatpush2.bf16.msra.mxu0 0
      %1798 = vmatprep.subr.bf16.mxu0 0
      %1799 = vmatpush2.bf16.msra.mxu0 0
      %1800 = vmatprep.subr.bf16.mxu0 0
      %1801 = vmatpush2.bf16.msra.mxu0 0
      %1802 = vmatprep.mubr.bf16.mxu0 0
      %1803 = vmatmul.mubr.bf16.gmra.mxu0 %v1768
      %v1804 = vpop.f32.mrf.mxu0
      %v1805 = vadd.f32 0.0, %v1804
      %v1806 = vpop.f32.mrf.mxu0
      %v1807 = vpop.f32.mrf.mxu0
      %v1808 = vpop.f32.mrf.mxu0
      %1809 = vdwg.mxu0
      %v1810 = vadd.f32 %v1348, %v1805
      %s1811 = scalar_lea.vmem %s3, 96
      %v1812 = vld [vmem:[%s1811] sm:$0xf]
      %v1813 = vld [vmem:[%s1811 + $0x4] sm:$0xf]
      %v1814 = vld [vmem:[%s1811 + $0x8] sm:$0xf]
      %v1815 = vld [vmem:[%s1811 + $0xc] sm:$0xf]
      %v1816 = vld [vmem:[%s1811 + $0x10] sm:$0xf]
      %v1817 = vld [vmem:[%s1811 + $0x14] sm:$0xf]
      %v1818 = vld [vmem:[%s1811 + $0x18] sm:$0xf]
      %v1819 = vld [vmem:[%s1811 + $0x1c] sm:$0xf]
      %s1820 = scalar_lea.vmem %s4, 3
      %v1821 = vld [vmem:[%s1820] sm:$0x1]
      %v1823 = vlaneseq
      %v1824 = vshrl.u32 %v1823, 7
      %v1825 = vsub.s32 0, %v1824
      %v1826 = vrot.slane %v1821, %v1825
      %v1836 = vunpack.c.l.b16 %v1812
      %v1837 = vunpack.c.l.b16 %v1813
      %v1838 = vunpack.c.l.b16 %v1814
      %v1839 = vunpack.c.l.b16 %v1815
      %v1840 = vunpack.c.l.b16 %v1816
      %v1841 = vunpack.c.l.b16 %v1817
      %v1842 = vunpack.c.l.b16 %v1818
      %v1843 = vunpack.c.l.b16 %v1819
      %v1844 = vpack.c.b16 %v1837, %v1836
      %v1845 = vpack.c.b16 %v1839, %v1838
      %v1846 = vpack.c.b16 %v1841, %v1840
      %v1847 = vpack.c.b16 %v1843, %v1842
      %1852 = vmatprep.subr.bf16.mxu0 0
      %1853 = vmatpush1.bf16.msra.mxu0 0
      %1854 = vmatprep.subr.bf16.mxu0 0
      %1855 = vmatpush1.bf16.msra.mxu0 0
      %1856 = vmatprep.subr.bf16.mxu0 0
      %1857 = vmatpush1.bf16.msra.mxu0 0
      %1858 = vmatprep.subr.bf16.mxu0 0
      %1859 = vmatpush1.bf16.msra.mxu0 0
      %1860 = vmatprep.subr.bf16.mxu0 0
      %1861 = vmatpush1.bf16.msra.mxu0 %v1847
      %1862 = vmatprep.subr.bf16.mxu0 0
      %1863 = vmatpush1.bf16.msra.mxu0 %v1846
      %1864 = vmatprep.subr.bf16.mxu0 0
      %1865 = vmatpush1.bf16.msra.mxu0 %v1845
      %1866 = vmatprep.subr.bf16.mxu0 0
      %1867 = vmatpush1.bf16.msra.mxu0 %v1844
      %1868 = vmatprep.subr.bf16.mxu0 0
      %1869 = vmatpush2.bf16.msra.mxu0 0
      %1870 = vmatprep.subr.bf16.mxu0 0
      %1871 = vmatpush2.bf16.msra.mxu0 0
      %1872 = vmatprep.subr.bf16.mxu0 0
      %1873 = vmatpush2.bf16.msra.mxu0 0
      %1874 = vmatprep.subr.bf16.mxu0 0
      %1875 = vmatpush2.bf16.msra.mxu0 0
      %1876 = vmatprep.subr.bf16.mxu0 0
      %1877 = vmatpush2.bf16.msra.mxu0 0
      %1878 = vmatprep.subr.bf16.mxu0 0
      %1879 = vmatpush2.bf16.msra.mxu0 0
      %1880 = vmatprep.subr.bf16.mxu0 0
      %1881 = vmatpush2.bf16.msra.mxu0 0
      %1882 = vmatprep.subr.bf16.mxu0 0
      %1883 = vmatpush2.bf16.msra.mxu0 0
      %1884 = vmatprep.mubr.bf16.mxu0 0
      %1885 = vmatmul.mubr.bf16.gmra.mxu0 %v477
      %v1886 = vpop.f32.mrf.mxu0
      %v1887 = vadd.f32 %v1826, %v1886
      %v1888 = vpop.f32.mrf.mxu0
      %v1889 = vpop.f32.mrf.mxu0
      %v1890 = vpop.f32.mrf.mxu0
      %1891 = vdwg.mxu0
      %s1892 = scalar_lea.vmem %s3, 224
      %v1893 = vld [vmem:[%s1892] sm:$0xf]
      %v1894 = vld [vmem:[%s1892 + $0x4] sm:$0xf]
      %v1895 = vld [vmem:[%s1892 + $0x8] sm:$0xf]
      %v1896 = vld [vmem:[%s1892 + $0xc] sm:$0xf]
      %v1897 = vld [vmem:[%s1892 + $0x10] sm:$0xf]
      %v1898 = vld [vmem:[%s1892 + $0x14] sm:$0xf]
      %v1899 = vld [vmem:[%s1892 + $0x18] sm:$0xf]
      %v1900 = vld [vmem:[%s1892 + $0x1c] sm:$0xf]
      %s1901 = scalar_lea.vmem %s4, 7
      %v1902 = vld [vmem:[%s1901] sm:$0x1]
      %v1904 = vlaneseq
      %v1905 = vshrl.u32 %v1904, 7
      %v1906 = vsub.s32 0, %v1905
      %v1907 = vrot.slane %v1902, %v1906
      %v1917 = vunpack.c.l.b16 %v1893
      %v1918 = vunpack.c.l.b16 %v1894
      %v1919 = vunpack.c.l.b16 %v1895
      %v1920 = vunpack.c.l.b16 %v1896
      %v1921 = vunpack.c.l.b16 %v1897
      %v1922 = vunpack.c.l.b16 %v1898
      %v1923 = vunpack.c.l.b16 %v1899
      %v1924 = vunpack.c.l.b16 %v1900
      %v1925 = vpack.c.b16 %v1918, %v1917
      %v1926 = vpack.c.b16 %v1920, %v1919
      %v1927 = vpack.c.b16 %v1922, %v1921
      %v1928 = vpack.c.b16 %v1924, %v1923
      %1933 = vmatprep.subr.bf16.mxu0 0
      %1934 = vmatpush1.bf16.msra.mxu0 0
      %1935 = vmatprep.subr.bf16.mxu0 0
      %1936 = vmatpush1.bf16.msra.mxu0 0
      %1937 = vmatprep.subr.bf16.mxu0 0
      %1938 = vmatpush1.bf16.msra.mxu0 0
      %1939 = vmatprep.subr.bf16.mxu0 0
      %1940 = vmatpush1.bf16.msra.mxu0 0
      %1941 = vmatprep.subr.bf16.mxu0 0
      %1942 = vmatpush1.bf16.msra.mxu0 %v1928
      %1943 = vmatprep.subr.bf16.mxu0 0
      %1944 = vmatpush1.bf16.msra.mxu0 %v1927
      %1945 = vmatprep.subr.bf16.mxu0 0
      %1946 = vmatpush1.bf16.msra.mxu0 %v1926
      %1947 = vmatprep.subr.bf16.mxu0 0
      %1948 = vmatpush1.bf16.msra.mxu0 %v1925
      %1949 = vmatprep.subr.bf16.mxu0 0
      %1950 = vmatpush2.bf16.msra.mxu0 0
      %1951 = vmatprep.subr.bf16.mxu0 0
      %1952 = vmatpush2.bf16.msra.mxu0 0
      %1953 = vmatprep.subr.bf16.mxu0 0
      %1954 = vmatpush2.bf16.msra.mxu0 0
      %1955 = vmatprep.subr.bf16.mxu0 0
      %1956 = vmatpush2.bf16.msra.mxu0 0
      %1957 = vmatprep.subr.bf16.mxu0 0
      %1958 = vmatpush2.bf16.msra.mxu0 0
      %1959 = vmatprep.subr.bf16.mxu0 0
      %1960 = vmatpush2.bf16.msra.mxu0 0
      %1961 = vmatprep.subr.bf16.mxu0 0
      %1962 = vmatpush2.bf16.msra.mxu0 0
      %1963 = vmatprep.subr.bf16.mxu0 0
      %1964 = vmatpush2.bf16.msra.mxu0 0
      %1965 = vmatprep.mubr.bf16.mxu0 0
      %1966 = vmatmul.mubr.bf16.gmra.mxu0 %v477
      %v1967 = vpop.f32.mrf.mxu0
      %v1968 = vadd.f32 %v1907, %v1967
      %v1969 = vpop.f32.mrf.mxu0
      %v1970 = vpop.f32.mrf.mxu0
      %v1971 = vpop.f32.mrf.mxu0
      %1972 = vdwg.mxu0
      %s1973 = scalar_lea.vmem %s3, 352
      %v1974 = vld [vmem:[%s1973] sm:$0xf]
      %v1975 = vld [vmem:[%s1973 + $0x4] sm:$0xf]
      %v1976 = vld [vmem:[%s1973 + $0x8] sm:$0xf]
      %v1977 = vld [vmem:[%s1973 + $0xc] sm:$0xf]
      %v1978 = vld [vmem:[%s1973 + $0x10] sm:$0xf]
      %v1979 = vld [vmem:[%s1973 + $0x14] sm:$0xf]
      %v1980 = vld [vmem:[%s1973 + $0x18] sm:$0xf]
      %v1981 = vld [vmem:[%s1973 + $0x1c] sm:$0xf]
      %s1982 = scalar_lea.vmem %s4, 11
      %v1983 = vld [vmem:[%s1982] sm:$0x1]
      %v1985 = vlaneseq
      %v1986 = vshrl.u32 %v1985, 7
      %v1987 = vsub.s32 0, %v1986
      %v1988 = vrot.slane %v1983, %v1987
      %v1998 = vunpack.c.l.b16 %v1974
      %v1999 = vunpack.c.l.b16 %v1975
      %v2000 = vunpack.c.l.b16 %v1976
      %v2001 = vunpack.c.l.b16 %v1977
      %v2002 = vunpack.c.l.b16 %v1978
      %v2003 = vunpack.c.l.b16 %v1979
      %v2004 = vunpack.c.l.b16 %v1980
      %v2005 = vunpack.c.l.b16 %v1981
      %v2006 = vpack.c.b16 %v1999, %v1998
      %v2007 = vpack.c.b16 %v2001, %v2000
      %v2008 = vpack.c.b16 %v2003, %v2002
      %v2009 = vpack.c.b16 %v2005, %v2004
      %2014 = vmatprep.subr.bf16.mxu0 0
      %2015 = vmatpush1.bf16.msra.mxu0 0
      %2016 = vmatprep.subr.bf16.mxu0 0
      %2017 = vmatpush1.bf16.msra.mxu0 0
      %2018 = vmatprep.subr.bf16.mxu0 0
      %2019 = vmatpush1.bf16.msra.mxu0 0
      %2020 = vmatprep.subr.bf16.mxu0 0
      %2021 = vmatpush1.bf16.msra.mxu0 0
      %2022 = vmatprep.subr.bf16.mxu0 0
      %2023 = vmatpush1.bf16.msra.mxu0 %v2009
      %2024 = vmatprep.subr.bf16.mxu0 0
      %2025 = vmatpush1.bf16.msra.mxu0 %v2008
      %2026 = vmatprep.subr.bf16.mxu0 0
      %2027 = vmatpush1.bf16.msra.mxu0 %v2007
      %2028 = vmatprep.subr.bf16.mxu0 0
      %2029 = vmatpush1.bf16.msra.mxu0 %v2006
      %2030 = vmatprep.subr.bf16.mxu0 0
      %2031 = vmatpush2.bf16.msra.mxu0 0
      %2032 = vmatprep.subr.bf16.mxu0 0
      %2033 = vmatpush2.bf16.msra.mxu0 0
      %2034 = vmatprep.subr.bf16.mxu0 0
      %2035 = vmatpush2.bf16.msra.mxu0 0
      %2036 = vmatprep.subr.bf16.mxu0 0
      %2037 = vmatpush2.bf16.msra.mxu0 0
      %2038 = vmatprep.subr.bf16.mxu0 0
      %2039 = vmatpush2.bf16.msra.mxu0 0
      %2040 = vmatprep.subr.bf16.mxu0 0
      %2041 = vmatpush2.bf16.msra.mxu0 0
      %2042 = vmatprep.subr.bf16.mxu0 0
      %2043 = vmatpush2.bf16.msra.mxu0 0
      %2044 = vmatprep.subr.bf16.mxu0 0
      %2045 = vmatpush2.bf16.msra.mxu0 0
      %2046 = vmatprep.mubr.bf16.mxu0 0
      %2047 = vmatmul.mubr.bf16.gmra.mxu0 %v477
      %v2048 = vpop.f32.mrf.mxu0
      %v2049 = vadd.f32 %v1988, %v2048
      %v2050 = vpop.f32.mrf.mxu0
      %v2051 = vpop.f32.mrf.mxu0
      %v2052 = vpop.f32.mrf.mxu0
      %2053 = vdwg.mxu0
      %v2055 = vsel %vm681, %v1887, 0
      %v2058 = vsel %vm681, %v1968, 0
      %2060 = vmatprep.subr.mxu0 0.0
      %2061 = vmatpush1.xpose.msra.mxu0 0.0
      %2062 = vmatprep.subr.mxu0 0.0
      %2063 = vmatpush1.xpose.msra.mxu0 0.0
      %2064 = vmatprep.subr.mxu0 0.0
      %2065 = vmatpush1.xpose.msra.mxu0 0.0
      %2066 = vmatprep.subr.mxu0 0.0
      %2067 = vmatpush1.xpose.msra.mxu0 0.0
      %2068 = vmatprep.subr.mxu0 0.0
      %2069 = vmatpush1.xpose.msra.mxu0 0.0
      %2070 = vmatprep.subr.mxu0 0.0
      %2071 = vmatpush1.xpose.msra.mxu0 0.0
      %2072 = vmatprep.subr.mxu0 0.0
      %2073 = vmatpush1.xpose.msra.mxu0 0.0
      %2074 = vmatprep.subr.mxu0 0.0
      %2075 = vmatpush1.xpose.msra.mxu0 0.0
      %2076 = vmatprep.subr.mxu0 0.0
      %2077 = vmatpush1.xpose.msra.mxu0 0.0
      %2078 = vmatprep.subr.mxu0 0.0
      %2079 = vmatpush1.xpose.msra.mxu0 0.0
      %2080 = vmatprep.subr.mxu0 0.0
      %2081 = vmatpush1.xpose.msra.mxu0 0.0
      %2082 = vmatprep.subr.mxu0 0.0
      %2083 = vmatpush1.xpose.msra.mxu0 0.0
      %2084 = vmatprep.subr.mxu0 0.0
      %2085 = vmatpush1.xpose.msra.mxu0 0.0
      %2086 = vmatprep.subr.mxu0 0.0
      %2087 = vmatpush1.xpose.msra.mxu0 0.0
      %2088 = vmatprep.subr.mxu0 0.0
      %2089 = vmatpush1.xpose.msra.mxu0 0.0
      %2090 = vmatprep.subr.mxu0 0.0
      %2091 = vmatpush1.xpose.msra.mxu0 %v2058
      %2092 = vmatprep.subr.mxu0 0.0
      %2093 = vmatpush2.xpose.msra.mxu0 0.0
      %2094 = vmatprep.subr.mxu0 0.0
      %2095 = vmatpush2.xpose.msra.mxu0 0.0
      %2096 = vmatprep.subr.mxu0 0.0
      %2097 = vmatpush2.xpose.msra.mxu0 0.0
      %2098 = vmatprep.subr.mxu0 0.0
      %2099 = vmatpush2.xpose.msra.mxu0 0.0
      %2100 = vmatprep.subr.mxu0 0.0
      %2101 = vmatpush2.xpose.msra.mxu0 0.0
      %2102 = vmatprep.subr.mxu0 0.0
      %2103 = vmatpush2.xpose.msra.mxu0 0.0
      %2104 = vmatprep.subr.mxu0 0.0
      %2105 = vmatpush2.xpose.msra.mxu0 0.0
      %2106 = vmatprep.subr.mxu0 0.0
      %2107 = vmatpush2.xpose.msra.mxu0 0.0
      %2108 = vmatprep.subr.mxu0 0.0
      %2109 = vmatpush2.xpose.msra.mxu0 0.0
      %2110 = vmatprep.subr.mxu0 0.0
      %2111 = vmatpush2.xpose.msra.mxu0 0.0
      %2112 = vmatprep.subr.mxu0 0.0
      %2113 = vmatpush2.xpose.msra.mxu0 0.0
      %2114 = vmatprep.subr.mxu0 0.0
      %2115 = vmatpush2.xpose.msra.mxu0 0.0
      %2116 = vmatprep.subr.mxu0 0.0
      %2117 = vmatpush2.xpose.msra.mxu0 0.0
      %2118 = vmatprep.subr.mxu0 0.0
      %2119 = vmatpush2.xpose.msra.mxu0 0.0
      %2120 = vmatprep.subr.mxu0 0.0
      %2121 = vmatpush2.xpose.msra.mxu0 0.0
      %2122 = vmatprep.subr.mxu0 0.0
      %2123 = vmatpush2.xpose.msra.mxu0 0.0
      %2124 = vmatprep.mubr.f32.mxu0 0.0
      %2125 = vmatmul.mubr.f32.gmra.mxu0 %v2055
      %v2126 = vpop.f32.mrf.mxu0
      %v2127 = vadd.f32 0.0, %v2126
      %v2128 = vpop.f32.mrf.mxu0
      %2129 = vdwg.mxu0
      %v2130 = vmul.f32 %v2127, 0.25
      %v2131 = vsel %vm759, %v2130, -inf
      %2132 = vmax.xlane.f32.xlu0 %v2131
      %v2133 = vpop.xlane.xlu0 %2132
      %v2134 = vsub.f32 %v2130, %v2133
      %v2135 = vmul.f32 %v2134, 1.442695
      %v2136 = vpow.pop %v2135
      %v2137 = vsel %vm759, %v2136, 0.0
      %2138 = vadd.xlane.f32.xlu0 %v2137
      %v2139 = vpop.xlane.xlu0 %2138
      %v2140 = vrcp.pop %v2139
      %v2141 = vmul.f32 %v2136, %v2140
      %v2143 = vsel %vm759, %v2141, 0
      %2145 = vmatprep.subr.mxu0 0.0
      %2146 = vmatpush1.msra.mxu0 0.0
      %2147 = vmatprep.subr.mxu0 0.0
      %2148 = vmatpush1.msra.mxu0 0.0
      %2149 = vmatprep.subr.mxu0 0.0
      %2150 = vmatpush1.msra.mxu0 0.0
      %2151 = vmatprep.subr.mxu0 0.0
      %2152 = vmatpush1.msra.mxu0 0.0
      %2153 = vmatprep.subr.mxu0 0.0
      %2154 = vmatpush1.msra.mxu0 0.0
      %2155 = vmatprep.subr.mxu0 0.0
      %2156 = vmatpush1.msra.mxu0 0.0
      %2157 = vmatprep.subr.mxu0 0.0
      %2158 = vmatpush1.msra.mxu0 0.0
      %2159 = vmatprep.subr.mxu0 0.0
      %2160 = vmatpush1.msra.mxu0 0.0
      %2161 = vmatprep.subr.mxu0 0.0
      %2162 = vmatpush1.msra.mxu0 0.0
      %2163 = vmatprep.subr.mxu0 0.0
      %2164 = vmatpush1.msra.mxu0 0.0
      %2165 = vmatprep.subr.mxu0 0.0
      %2166 = vmatpush1.msra.mxu0 0.0
      %2167 = vmatprep.subr.mxu0 0.0
      %2168 = vmatpush1.msra.mxu0 0.0
      %2169 = vmatprep.subr.mxu0 0.0
      %2170 = vmatpush1.msra.mxu0 0.0
      %2171 = vmatprep.subr.mxu0 0.0
      %2172 = vmatpush1.msra.mxu0 0.0
      %2173 = vmatprep.subr.mxu0 0.0
      %2174 = vmatpush1.msra.mxu0 0.0
      %2175 = vmatprep.subr.mxu0 0.0
      %2176 = vmatpush1.msra.mxu0 %v2049
      %2177 = vmatprep.subr.mxu0 0.0
      %2178 = vmatpush2.msra.mxu0 0.0
      %2179 = vmatprep.subr.mxu0 0.0
      %2180 = vmatpush2.msra.mxu0 0.0
      %2181 = vmatprep.subr.mxu0 0.0
      %2182 = vmatpush2.msra.mxu0 0.0
      %2183 = vmatprep.subr.mxu0 0.0
      %2184 = vmatpush2.msra.mxu0 0.0
      %2185 = vmatprep.subr.mxu0 0.0
      %2186 = vmatpush2.msra.mxu0 0.0
      %2187 = vmatprep.subr.mxu0 0.0
      %2188 = vmatpush2.msra.mxu0 0.0
      %2189 = vmatprep.subr.mxu0 0.0
      %2190 = vmatpush2.msra.mxu0 0.0
      %2191 = vmatprep.subr.mxu0 0.0
      %2192 = vmatpush2.msra.mxu0 0.0
      %2193 = vmatprep.subr.mxu0 0.0
      %2194 = vmatpush2.msra.mxu0 0.0
      %2195 = vmatprep.subr.mxu0 0.0
      %2196 = vmatpush2.msra.mxu0 0.0
      %2197 = vmatprep.subr.mxu0 0.0
      %2198 = vmatpush2.msra.mxu0 0.0
      %2199 = vmatprep.subr.mxu0 0.0
      %2200 = vmatpush2.msra.mxu0 0.0
      %2201 = vmatprep.subr.mxu0 0.0
      %2202 = vmatpush2.msra.mxu0 0.0
      %2203 = vmatprep.subr.mxu0 0.0
      %2204 = vmatpush2.msra.mxu0 0.0
      %2205 = vmatprep.subr.mxu0 0.0
      %2206 = vmatpush2.msra.mxu0 0.0
      %2207 = vmatprep.subr.mxu0 0.0
      %2208 = vmatpush2.msra.mxu0 0.0
      %2209 = vmatprep.mubr.f32.mxu0 0.0
      %2210 = vmatmul.mubr.f32.gmra.mxu0 %v2143
      %v2211 = vpop.f32.mrf.mxu0
      %v2212 = vadd.f32 0.0, %v2211
      %v2213 = vpop.f32.mrf.mxu0
      %2214 = vdwg.mxu0
      %v2215 = vpack.c.bf16 %v2212, %v2212
      %s2216 = scalar_lea.vmem %s5, 24
      %v2217 = vld [vmem:[%s2216] sm:$0xf]
      %v2218 = vld [vmem:[%s2216 + $0x4] sm:$0xf]
      %v2221 = vunpack.c.l.b16 %v2217
      %v2222 = vunpack.c.l.b16 %v2218
      %v2223 = vpack.c.b16 %v2222, %v2221
      %v2226 = vsel %vm681, %v2215, 0
      %2228 = vmatprep.subr.bf16.mxu0 0
      %2229 = vmatpush1.bf16.msra.mxu0 0
      %2230 = vmatprep.subr.bf16.mxu0 0
      %2231 = vmatpush1.bf16.msra.mxu0 0
      %2232 = vmatprep.subr.bf16.mxu0 0
      %2233 = vmatpush1.bf16.msra.mxu0 0
      %2234 = vmatprep.subr.bf16.mxu0 0
      %2235 = vmatpush1.bf16.msra.mxu0 0
      %2236 = vmatprep.subr.bf16.mxu0 0
      %2237 = vmatpush1.bf16.msra.mxu0 0
      %2238 = vmatprep.subr.bf16.mxu0 0
      %2239 = vmatpush1.bf16.msra.mxu0 0
      %2240 = vmatprep.subr.bf16.mxu0 0
      %2241 = vmatpush1.bf16.msra.mxu0 0
      %2242 = vmatprep.subr.bf16.mxu0 0
      %2243 = vmatpush1.bf16.msra.mxu0 %v2223
      %2244 = vmatprep.subr.bf16.mxu0 0
      %2245 = vmatpush2.bf16.msra.mxu0 0
      %2246 = vmatprep.subr.bf16.mxu0 0
      %2247 = vmatpush2.bf16.msra.mxu0 0
      %2248 = vmatprep.subr.bf16.mxu0 0
      %2249 = vmatpush2.bf16.msra.mxu0 0
      %2250 = vmatprep.subr.bf16.mxu0 0
      %2251 = vmatpush2.bf16.msra.mxu0 0
      %2252 = vmatprep.subr.bf16.mxu0 0
      %2253 = vmatpush2.bf16.msra.mxu0 0
      %2254 = vmatprep.subr.bf16.mxu0 0
      %2255 = vmatpush2.bf16.msra.mxu0 0
      %2256 = vmatprep.subr.bf16.mxu0 0
      %2257 = vmatpush2.bf16.msra.mxu0 0
      %2258 = vmatprep.subr.bf16.mxu0 0
      %2259 = vmatpush2.bf16.msra.mxu0 0
      %2260 = vmatprep.mubr.bf16.mxu0 0
      %2261 = vmatmul.mubr.bf16.gmra.mxu0 %v2226
      %v2262 = vpop.f32.mrf.mxu0
      %v2263 = vadd.f32 0.0, %v2262
      %v2264 = vpop.f32.mrf.mxu0
      %v2265 = vpop.f32.mrf.mxu0
      %v2266 = vpop.f32.mrf.mxu0
      %2267 = vdwg.mxu0
      %v2268 = vadd.f32 %v1810, %v2263
      %v2269 = vld [vmem:[%s2 + $0x8] sm:$0x1]
      %v2270 = vlaneseq
      %v2271 = vshrl.u32 %v2270, 7
      %v2272 = vsub.s32 0, %v2271
      %v2273 = vrot.slane %v2269, %v2272
      %v2274 = vadd.f32 %v2268, %v2273
      %v2275 = vadd.f32 %v432, %v2274
      %v2276 = vld [vmem:[%s2 + $0xa] sm:$0x1]
      %v2277 = vld [vmem:[%s2 + $0xb] sm:$0x1]
      %v2278 = vsel %vm475, %v2275, 0.0
      %2279 = vadd.xlane.f32.xlu0 %v2278
      %v2280 = vpop.xlane.xlu0 %2279
      %v2281 = vrcp.pop 64.0
      %v2282 = vmul.f32 %v2280, %v2281
      %v2283 = vsub.f32 %v2275, %v2282
      %v2284 = vmul.f32 %v2283, %v2283
      %v2285 = vsel %vm475, %v2284, 0.0
      %2286 = vadd.xlane.f32.xlu0 %v2285
      %v2287 = vpop.xlane.xlu0 %2286
      %v2288 = vmul.f32 %v2287, %v2281
      %v2289 = vadd.f32 %v2288, 1e-05
      %v2290 = vrsqrt.pop %v2289
      %v2291 = vmul.f32 %v2283, %v2290
      %v2292 = vlaneseq
      %v2293 = vshrl.u32 %v2292, 7
      %v2294 = vsub.s32 0, %v2293
      %v2295 = vrot.slane %v2276, %v2294
      %v2296 = vmul.f32 %v2291, %v2295
      %v2297 = vlaneseq
      %v2298 = vshrl.u32 %v2297, 7
      %v2299 = vsub.s32 0, %v2298
      %v2300 = vrot.slane %v2277, %v2299
      %v2301 = vadd.f32 %v2296, %v2300
      %v2302 = vpack.c.bf16 %v2301, %v2301
      %v2303 = vld [vmem:[%s6] sm:$0xff]
      %v2304 = vld [vmem:[%s6 + $0x8] sm:$0xff]
      %v2305 = vld [vmem:[%s6 + $0x10] sm:$0xff]
      %v2306 = vld [vmem:[%s6 + $0x18] sm:$0xff]
      %v2307 = vld [vmem:[%s6 + $0x20] sm:$0xff]
      %v2308 = vld [vmem:[%s6 + $0x28] sm:$0xff]
      %v2309 = vld [vmem:[%s6 + $0x30] sm:$0xff]
      %v2310 = vld [vmem:[%s6 + $0x38] sm:$0xff]
      %v2311 = vld [vmem:[%s7] sm:$0x3]
      %v2313 = vlaneseq
      %v2314 = vshrl.u32 %v2313, 7
      %v2315 = vsub.s32 0, %v2314
      %v2316 = vrot.slane %v2311, %v2315
      %v2317 = vlaneseq
      %v2318 = vshrl.u32 %v2317, 7
      %v2319 = vsub.s32 1, %v2318
      %v2320 = vrot.slane %v2311, %v2319
      %v2331 = vunpack.c.l.b16 %v2303
      %v2332 = vunpack.c.h.b16 %v2303
      %v2333 = vunpack.c.l.b16 %v2304
      %v2334 = vunpack.c.h.b16 %v2304
      %v2335 = vunpack.c.l.b16 %v2305
      %v2336 = vunpack.c.h.b16 %v2305
      %v2337 = vunpack.c.l.b16 %v2306
      %v2338 = vunpack.c.h.b16 %v2306
      %v2339 = vunpack.c.l.b16 %v2307
      %v2340 = vunpack.c.h.b16 %v2307
      %v2341 = vunpack.c.l.b16 %v2308
      %v2342 = vunpack.c.h.b16 %v2308
      %v2343 = vunpack.c.l.b16 %v2309
      %v2344 = vunpack.c.h.b16 %v2309
      %v2345 = vunpack.c.l.b16 %v2310
      %v2346 = vunpack.c.h.b16 %v2310
      %v2347 = vpack.c.b16 %v2333, %v2331
      %v2348 = vpack.c.b16 %v2334, %v2332
      %v2349 = vpack.c.b16 %v2337, %v2335
      %v2350 = vpack.c.b16 %v2338, %v2336
      %v2351 = vpack.c.b16 %v2341, %v2339
      %v2352 = vpack.c.b16 %v2342, %v2340
      %v2353 = vpack.c.b16 %v2345, %v2343
      %v2354 = vpack.c.b16 %v2346, %v2344
      %v2364 = vsel %vm475, %v2302, 0
      %2366 = vmatprep.subr.bf16.mxu0 0
      %2367 = vmatpush1.bf16.msra.mxu0 0
      %2368 = vmatprep.subr.bf16.mxu0 0
      %2369 = vmatpush1.bf16.msra.mxu0 0
      %2370 = vmatprep.subr.bf16.mxu0 0
      %2371 = vmatpush1.bf16.msra.mxu0 0
      %2372 = vmatprep.subr.bf16.mxu0 0
      %2373 = vmatpush1.bf16.msra.mxu0 0
      %2374 = vmatprep.subr.bf16.mxu0 %v2354
      %2375 = vmatpush1.bf16.msra.mxu0 %v2353
      %2376 = vmatprep.subr.bf16.mxu0 %v2352
      %2377 = vmatpush1.bf16.msra.mxu0 %v2351
      %2378 = vmatprep.subr.bf16.mxu0 %v2350
      %2379 = vmatpush1.bf16.msra.mxu0 %v2349
      %2380 = vmatprep.subr.bf16.mxu0 %v2348
      %2381 = vmatpush1.bf16.msra.mxu0 %v2347
      %2382 = vmatprep.subr.bf16.mxu0 0
      %2383 = vmatpush2.bf16.msra.mxu0 0
      %2384 = vmatprep.subr.bf16.mxu0 0
      %2385 = vmatpush2.bf16.msra.mxu0 0
      %2386 = vmatprep.subr.bf16.mxu0 0
      %2387 = vmatpush2.bf16.msra.mxu0 0
      %2388 = vmatprep.subr.bf16.mxu0 0
      %2389 = vmatpush2.bf16.msra.mxu0 0
      %2390 = vmatprep.subr.bf16.mxu0 0
      %2391 = vmatpush2.bf16.msra.mxu0 0
      %2392 = vmatprep.subr.bf16.mxu0 0
      %2393 = vmatpush2.bf16.msra.mxu0 0
      %2394 = vmatprep.subr.bf16.mxu0 0
      %2395 = vmatpush2.bf16.msra.mxu0 0
      %2396 = vmatprep.subr.bf16.mxu0 0
      %2397 = vmatpush2.bf16.msra.mxu0 0
      %2398 = vmatprep.mubr.bf16.mxu0 0
      %2399 = vmatmul.mubr.bf16.gmra.mxu0 %v2364
      %v2400 = vpop.f32.mrf.mxu0
      %v2401 = vadd.f32 %v2316, %v2400
      %v2402 = vpop.f32.mrf.mxu0
      %v2403 = vadd.f32 %v2320, %v2402
      %v2404 = vpop.f32.mrf.mxu0
      %v2405 = vpop.f32.mrf.mxu0
      %2406 = vdwg.mxu0
      %v2407 = vmax.f32 %v2401, 0.0
      %v2408 = vmax.f32 %v2403, 0.0
      %v2409 = vpack.c.bf16 %v2407, %v2407
      %v2410 = vpack.c.bf16 %v2408, %v2408
      %v2411 = vld [vmem:[%s8] sm:$0xf]
      %v2412 = vld [vmem:[%s8 + $0x4] sm:$0xf]
      %v2413 = vld [vmem:[%s8 + $0x8] sm:$0xf]
      %v2414 = vld [vmem:[%s8 + $0xc] sm:$0xf]
      %v2415 = vld [vmem:[%s8 + $0x10] sm:$0xf]
      %v2416 = vld [vmem:[%s8 + $0x14] sm:$0xf]
      %v2417 = vld [vmem:[%s8 + $0x18] sm:$0xf]
      %v2418 = vld [vmem:[%s8 + $0x1c] sm:$0xf]
      %v2419 = vld [vmem:[%s8 + $0x20] sm:$0xf]
      %v2420 = vld [vmem:[%s8 + $0x24] sm:$0xf]
      %v2421 = vld [vmem:[%s8 + $0x28] sm:$0xf]
      %v2422 = vld [vmem:[%s8 + $0x2c] sm:$0xf]
      %v2423 = vld [vmem:[%s8 + $0x30] sm:$0xf]
      %v2424 = vld [vmem:[%s8 + $0x34] sm:$0xf]
      %v2425 = vld [vmem:[%s8 + $0x38] sm:$0xf]
      %v2426 = vld [vmem:[%s8 + $0x3c] sm:$0xf]
      %v2427 = vld [vmem:[%s8 + $0x40] sm:$0xf]
      %v2428 = vld [vmem:[%s8 + $0x44] sm:$0xf]
      %v2429 = vld [vmem:[%s8 + $0x48] sm:$0xf]
      %v2430 = vld [vmem:[%s8 + $0x4c] sm:$0xf]
      %v2431 = vld [vmem:[%s8 + $0x50] sm:$0xf]
      %v2432 = vld [vmem:[%s8 + $0x54] sm:$0xf]
      %v2433 = vld [vmem:[%s8 + $0x58] sm:$0xf]
      %v2434 = vld [vmem:[%s8 + $0x5c] sm:$0xf]
      %v2435 = vld [vmem:[%s8 + $0x60] sm:$0xf]
      %v2436 = vld [vmem:[%s8 + $0x64] sm:$0xf]
      %v2437 = vld [vmem:[%s8 + $0x68] sm:$0xf]
      %v2438 = vld [vmem:[%s8 + $0x6c] sm:$0xf]
      %v2439 = vld [vmem:[%s8 + $0x70] sm:$0xf]
      %v2440 = vld [vmem:[%s8 + $0x74] sm:$0xf]
      %v2441 = vld [vmem:[%s8 + $0x78] sm:$0xf]
      %v2442 = vld [vmem:[%s8 + $0x7c] sm:$0xf]
      %v2443 = vld [vmem:[%s2 + $0x9] sm:$0x1]
      %v2444 = vlaneseq
      %v2445 = vshrl.u32 %v2444, 7
      %v2446 = vsub.s32 0, %v2445
      %v2447 = vrot.slane %v2443, %v2446
      %v2480 = vunpack.c.l.b16 %v2411
      %v2481 = vunpack.c.l.b16 %v2412
      %v2482 = vunpack.c.l.b16 %v2413
      %v2483 = vunpack.c.l.b16 %v2414
      %v2484 = vunpack.c.l.b16 %v2415
      %v2485 = vunpack.c.l.b16 %v2416
      %v2486 = vunpack.c.l.b16 %v2417
      %v2487 = vunpack.c.l.b16 %v2418
      %v2488 = vunpack.c.l.b16 %v2419
      %v2489 = vunpack.c.l.b16 %v2420
      %v2490 = vunpack.c.l.b16 %v2421
      %v2491 = vunpack.c.l.b16 %v2422
      %v2492 = vunpack.c.l.b16 %v2423
      %v2493 = vunpack.c.l.b16 %v2424
      %v2494 = vunpack.c.l.b16 %v2425
      %v2495 = vunpack.c.l.b16 %v2426
      %v2496 = vunpack.c.l.b16 %v2427
      %v2497 = vunpack.c.l.b16 %v2428
      %v2498 = vunpack.c.l.b16 %v2429
      %v2499 = vunpack.c.l.b16 %v2430
      %v2500 = vunpack.c.l.b16 %v2431
      %v2501 = vunpack.c.l.b16 %v2432
      %v2502 = vunpack.c.l.b16 %v2433
      %v2503 = vunpack.c.l.b16 %v2434
      %v2504 = vunpack.c.l.b16 %v2435
      %v2505 = vunpack.c.l.b16 %v2436
      %v2506 = vunpack.c.l.b16 %v2437
      %v2507 = vunpack.c.l.b16 %v2438
      %v2508 = vunpack.c.l.b16 %v2439
      %v2509 = vunpack.c.l.b16 %v2440
      %v2510 = vunpack.c.l.b16 %v2441
      %v2511 = vunpack.c.l.b16 %v2442
      %v2512 = vpack.c.b16 %v2481, %v2480
      %v2513 = vpack.c.b16 %v2483, %v2482
      %v2514 = vpack.c.b16 %v2485, %v2484
      %v2515 = vpack.c.b16 %v2487, %v2486
      %v2516 = vpack.c.b16 %v2489, %v2488
      %v2517 = vpack.c.b16 %v2491, %v2490
      %v2518 = vpack.c.b16 %v2493, %v2492
      %v2519 = vpack.c.b16 %v2495, %v2494
      %v2520 = vpack.c.b16 %v2497, %v2496
      %v2521 = vpack.c.b16 %v2499, %v2498
      %v2522 = vpack.c.b16 %v2501, %v2500
      %v2523 = vpack.c.b16 %v2503, %v2502
      %v2524 = vpack.c.b16 %v2505, %v2504
      %v2525 = vpack.c.b16 %v2507, %v2506
      %v2526 = vpack.c.b16 %v2509, %v2508
      %v2527 = vpack.c.b16 %v2511, %v2510
      %2544 = vmatprep.subr.bf16.mxu0 0
      %2545 = vmatpush1.bf16.msra.mxu0 %v2519
      %2546 = vmatprep.subr.bf16.mxu0 0
      %2547 = vmatpush1.bf16.msra.mxu0 %v2518
      %2548 = vmatprep.subr.bf16.mxu0 0
      %2549 = vmatpush1.bf16.msra.mxu0 %v2517
      %2550 = vmatprep.subr.bf16.mxu0 0
      %2551 = vmatpush1.bf16.msra.mxu0 %v2516
      %2552 = vmatprep.subr.bf16.mxu0 0
      %2553 = vmatpush1.bf16.msra.mxu0 %v2515
      %2554 = vmatprep.subr.bf16.mxu0 0
      %2555 = vmatpush1.bf16.msra.mxu0 %v2514
      %2556 = vmatprep.subr.bf16.mxu0 0
      %2557 = vmatpush1.bf16.msra.mxu0 %v2513
      %2558 = vmatprep.subr.bf16.mxu0 0
      %2559 = vmatpush1.bf16.msra.mxu0 %v2512
      %2560 = vmatprep.subr.bf16.mxu0 0
      %2561 = vmatpush2.bf16.msra.mxu0 %v2527
      %2562 = vmatprep.subr.bf16.mxu0 0
      %2563 = vmatpush2.bf16.msra.mxu0 %v2526
      %2564 = vmatprep.subr.bf16.mxu0 0
      %2565 = vmatpush2.bf16.msra.mxu0 %v2525
      %2566 = vmatprep.subr.bf16.mxu0 0
      %2567 = vmatpush2.bf16.msra.mxu0 %v2524
      %2568 = vmatprep.subr.bf16.mxu0 0
      %2569 = vmatpush2.bf16.msra.mxu0 %v2523
      %2570 = vmatprep.subr.bf16.mxu0 0
      %2571 = vmatpush2.bf16.msra.mxu0 %v2522
      %2572 = vmatprep.subr.bf16.mxu0 0
      %2573 = vmatpush2.bf16.msra.mxu0 %v2521
      %2574 = vmatprep.subr.bf16.mxu0 0
      %2575 = vmatpush2.bf16.msra.mxu0 %v2520
      %2576 = vmatprep.mubr.bf16.mxu0 %v2410
      %2577 = vmatmul.mubr.bf16.gmra.mxu0 %v2409
      %v2578 = vpop.f32.mrf.mxu0
      %v2579 = vadd.f32 %v2447, %v2578
      %v2580 = vpop.f32.mrf.mxu0
      %v2581 = vpop.f32.mrf.mxu0
      %v2582 = vpop.f32.mrf.mxu0
      %2583 = vdwg.mxu0
      %v2584 = vadd.f32 %v2301, %v2579
      %v2585 = vld [vmem:[%s2 + $0xc] sm:$0x1]
      %v2586 = vld [vmem:[%s2 + $0xd] sm:$0x1]
      %v2587 = vsel %vm475, %v2584, 0.0
      %2588 = vadd.xlane.f32.xlu0 %v2587
      %v2589 = vpop.xlane.xlu0 %2588
      %v2590 = vmul.f32 %v2589, %v2281
      %v2591 = vsub.f32 %v2584, %v2590
      %v2592 = vmul.f32 %v2591, %v2591
      %v2593 = vsel %vm475, %v2592, 0.0
      %2594 = vadd.xlane.f32.xlu0 %v2593
      %v2595 = vpop.xlane.xlu0 %2594
      %v2596 = vmul.f32 %v2595, %v2281
      %v2597 = vadd.f32 %v2596, 1e-05
      %v2598 = vrsqrt.pop %v2597
      %v2599 = vmul.f32 %v2591, %v2598
      %v2600 = vlaneseq
      %v2601 = vshrl.u32 %v2600, 7
      %v2602 = vsub.s32 0, %v2601
      %v2603 = vrot.slane %v2585, %v2602
      %v2604 = vmul.f32 %v2599, %v2603
      %v2605 = vlaneseq
      %v2606 = vshrl.u32 %v2605, 7
      %v2607 = vsub.s32 0, %v2606
      %v2608 = vrot.slane %v2586, %v2607
      %v2609 = vadd.f32 %v2604, %v2608
      %v2610 = vpack.c.bf16 %v2609, %v2609
      %s2611 = scalar_lea.vmem %s3, 384
      %v2612 = vld [vmem:[%s2611] sm:$0xf]
      %v2613 = vld [vmem:[%s2611 + $0x4] sm:$0xf]
      %v2614 = vld [vmem:[%s2611 + $0x8] sm:$0xf]
      %v2615 = vld [vmem:[%s2611 + $0xc] sm:$0xf]
      %v2616 = vld [vmem:[%s2611 + $0x10] sm:$0xf]
      %v2617 = vld [vmem:[%s2611 + $0x14] sm:$0xf]
      %v2618 = vld [vmem:[%s2611 + $0x18] sm:$0xf]
      %v2619 = vld [vmem:[%s2611 + $0x1c] sm:$0xf]
      %s2620 = scalar_lea.vmem %s4, 12
      %v2621 = vld [vmem:[%s2620] sm:$0x1]
      %v2623 = vlaneseq
      %v2624 = vshrl.u32 %v2623, 7
      %v2625 = vsub.s32 0, %v2624
      %v2626 = vrot.slane %v2621, %v2625
      %v2636 = vunpack.c.l.b16 %v2612
      %v2637 = vunpack.c.l.b16 %v2613
      %v2638 = vunpack.c.l.b16 %v2614
      %v2639 = vunpack.c.l.b16 %v2615
      %v2640 = vunpack.c.l.b16 %v2616
      %v2641 = vunpack.c.l.b16 %v2617
      %v2642 = vunpack.c.l.b16 %v2618
      %v2643 = vunpack.c.l.b16 %v2619
      %v2644 = vpack.c.b16 %v2637, %v2636
      %v2645 = vpack.c.b16 %v2639, %v2638
      %v2646 = vpack.c.b16 %v2641, %v2640
      %v2647 = vpack.c.b16 %v2643, %v2642
      %v2653 = vsel %vm475, %v2610, 0
      %2655 = vmatprep.subr.bf16.mxu0 0
      %2656 = vmatpush1.bf16.msra.mxu0 0
      %2657 = vmatprep.subr.bf16.mxu0 0
      %2658 = vmatpush1.bf16.msra.mxu0 0
      %2659 = vmatprep.subr.bf16.mxu0 0
      %2660 = vmatpush1.bf16.msra.mxu0 0
      %2661 = vmatprep.subr.bf16.mxu0 0
      %2662 = vmatpush1.bf16.msra.mxu0 0
      %2663 = vmatprep.subr.bf16.mxu0 0
      %2664 = vmatpush1.bf16.msra.mxu0 %v2647
      %2665 = vmatprep.subr.bf16.mxu0 0
      %2666 = vmatpush1.bf16.msra.mxu0 %v2646
      %2667 = vmatprep.subr.bf16.mxu0 0
      %2668 = vmatpush1.bf16.msra.mxu0 %v2645
      %2669 = vmatprep.subr.bf16.mxu0 0
      %2670 = vmatpush1.bf16.msra.mxu0 %v2644
      %2671 = vmatprep.subr.bf16.mxu0 0
      %2672 = vmatpush2.bf16.msra.mxu0 0
      %2673 = vmatprep.subr.bf16.mxu0 0
      %2674 = vmatpush2.bf16.msra.mxu0 0
      %2675 = vmatprep.subr.bf16.mxu0 0
      %2676 = vmatpush2.bf16.msra.mxu0 0
      %2677 = vmatprep.subr.bf16.mxu0 0
      %2678 = vmatpush2.bf16.msra.mxu0 0
      %2679 = vmatprep.subr.bf16.mxu0 0
      %2680 = vmatpush2.bf16.msra.mxu0 0
      %2681 = vmatprep.subr.bf16.mxu0 0
      %2682 = vmatpush2.bf16.msra.mxu0 0
      %2683 = vmatprep.subr.bf16.mxu0 0
      %2684 = vmatpush2.bf16.msra.mxu0 0
      %2685 = vmatprep.subr.bf16.mxu0 0
      %2686 = vmatpush2.bf16.msra.mxu0 0
      %2687 = vmatprep.mubr.bf16.mxu0 0
      %2688 = vmatmul.mubr.bf16.gmra.mxu0 %v2653
      %v2689 = vpop.f32.mrf.mxu0
      %v2690 = vadd.f32 %v2626, %v2689
      %v2691 = vpop.f32.mrf.mxu0
      %v2692 = vpop.f32.mrf.mxu0
      %v2693 = vpop.f32.mrf.mxu0
      %2694 = vdwg.mxu0
      %s2695 = scalar_lea.vmem %s3, 512
      %v2696 = vld [vmem:[%s2695] sm:$0xf]
      %v2697 = vld [vmem:[%s2695 + $0x4] sm:$0xf]
      %v2698 = vld [vmem:[%s2695 + $0x8] sm:$0xf]
      %v2699 = vld [vmem:[%s2695 + $0xc] sm:$0xf]
      %v2700 = vld [vmem:[%s2695 + $0x10] sm:$0xf]
      %v2701 = vld [vmem:[%s2695 + $0x14] sm:$0xf]
      %v2702 = vld [vmem:[%s2695 + $0x18] sm:$0xf]
      %v2703 = vld [vmem:[%s2695 + $0x1c] sm:$0xf]
      %s2704 = scalar_lea.vmem %s4, 16
      %v2705 = vld [vmem:[%s2704] sm:$0x1]
      %v2707 = vlaneseq
      %v2708 = vshrl.u32 %v2707, 7
      %v2709 = vsub.s32 0, %v2708
      %v2710 = vrot.slane %v2705, %v2709
      %v2720 = vunpack.c.l.b16 %v2696
      %v2721 = vunpack.c.l.b16 %v2697
      %v2722 = vunpack.c.l.b16 %v2698
      %v2723 = vunpack.c.l.b16 %v2699
      %v2724 = vunpack.c.l.b16 %v2700
      %v2725 = vunpack.c.l.b16 %v2701
      %v2726 = vunpack.c.l.b16 %v2702
      %v2727 = vunpack.c.l.b16 %v2703
      %v2728 = vpack.c.b16 %v2721, %v2720
      %v2729 = vpack.c.b16 %v2723, %v2722
      %v2730 = vpack.c.b16 %v2725, %v2724
      %v2731 = vpack.c.b16 %v2727, %v2726
      %2736 = vmatprep.subr.bf16.mxu0 0
      %2737 = vmatpush1.bf16.msra.mxu0 0
      %2738 = vmatprep.subr.bf16.mxu0 0
      %2739 = vmatpush1.bf16.msra.mxu0 0
      %2740 = vmatprep.subr.bf16.mxu0 0
      %2741 = vmatpush1.bf16.msra.mxu0 0
      %2742 = vmatprep.subr.bf16.mxu0 0
      %2743 = vmatpush1.bf16.msra.mxu0 0
      %2744 = vmatprep.subr.bf16.mxu0 0
      %2745 = vmatpush1.bf16.msra.mxu0 %v2731
      %2746 = vmatprep.subr.bf16.mxu0 0
      %2747 = vmatpush1.bf16.msra.mxu0 %v2730
      %2748 = vmatprep.subr.bf16.mxu0 0
      %2749 = vmatpush1.bf16.msra.mxu0 %v2729
      %2750 = vmatprep.subr.bf16.mxu0 0
      %2751 = vmatpush1.bf16.msra.mxu0 %v2728
      %2752 = vmatprep.subr.bf16.mxu0 0
      %2753 = vmatpush2.bf16.msra.mxu0 0
      %2754 = vmatprep.subr.bf16.mxu0 0
      %2755 = vmatpush2.bf16.msra.mxu0 0
      %2756 = vmatprep.subr.bf16.mxu0 0
      %2757 = vmatpush2.bf16.msra.mxu0 0
      %2758 = vmatprep.subr.bf16.mxu0 0
      %2759 = vmatpush2.bf16.msra.mxu0 0
      %2760 = vmatprep.subr.bf16.mxu0 0
      %2761 = vmatpush2.bf16.msra.mxu0 0
      %2762 = vmatprep.subr.bf16.mxu0 0
      %2763 = vmatpush2.bf16.msra.mxu0 0
      %2764 = vmatprep.subr.bf16.mxu0 0
      %2765 = vmatpush2.bf16.msra.mxu0 0
      %2766 = vmatprep.subr.bf16.mxu0 0
      %2767 = vmatpush2.bf16.msra.mxu0 0
      %2768 = vmatprep.mubr.bf16.mxu0 0
      %2769 = vmatmul.mubr.bf16.gmra.mxu0 %v2653
      %v2770 = vpop.f32.mrf.mxu0
      %v2771 = vadd.f32 %v2710, %v2770
      %v2772 = vpop.f32.mrf.mxu0
      %v2773 = vpop.f32.mrf.mxu0
      %v2774 = vpop.f32.mrf.mxu0
      %2775 = vdwg.mxu0
      %s2776 = scalar_lea.vmem %s3, 640
      %v2777 = vld [vmem:[%s2776] sm:$0xf]
      %v2778 = vld [vmem:[%s2776 + $0x4] sm:$0xf]
      %v2779 = vld [vmem:[%s2776 + $0x8] sm:$0xf]
      %v2780 = vld [vmem:[%s2776 + $0xc] sm:$0xf]
      %v2781 = vld [vmem:[%s2776 + $0x10] sm:$0xf]
      %v2782 = vld [vmem:[%s2776 + $0x14] sm:$0xf]
      %v2783 = vld [vmem:[%s2776 + $0x18] sm:$0xf]
      %v2784 = vld [vmem:[%s2776 + $0x1c] sm:$0xf]
      %s2785 = scalar_lea.vmem %s4, 20
      %v2786 = vld [vmem:[%s2785] sm:$0x1]
      %v2788 = vlaneseq
      %v2789 = vshrl.u32 %v2788, 7
      %v2790 = vsub.s32 0, %v2789
      %v2791 = vrot.slane %v2786, %v2790
      %v2801 = vunpack.c.l.b16 %v2777
      %v2802 = vunpack.c.l.b16 %v2778
      %v2803 = vunpack.c.l.b16 %v2779
      %v2804 = vunpack.c.l.b16 %v2780
      %v2805 = vunpack.c.l.b16 %v2781
      %v2806 = vunpack.c.l.b16 %v2782
      %v2807 = vunpack.c.l.b16 %v2783
      %v2808 = vunpack.c.l.b16 %v2784
      %v2809 = vpack.c.b16 %v2802, %v2801
      %v2810 = vpack.c.b16 %v2804, %v2803
      %v2811 = vpack.c.b16 %v2806, %v2805
      %v2812 = vpack.c.b16 %v2808, %v2807
      %2817 = vmatprep.subr.bf16.mxu0 0
      %2818 = vmatpush1.bf16.msra.mxu0 0
      %2819 = vmatprep.subr.bf16.mxu0 0
      %2820 = vmatpush1.bf16.msra.mxu0 0
      %2821 = vmatprep.subr.bf16.mxu0 0
      %2822 = vmatpush1.bf16.msra.mxu0 0
      %2823 = vmatprep.subr.bf16.mxu0 0
      %2824 = vmatpush1.bf16.msra.mxu0 0
      %2825 = vmatprep.subr.bf16.mxu0 0
      %2826 = vmatpush1.bf16.msra.mxu0 %v2812
      %2827 = vmatprep.subr.bf16.mxu0 0
      %2828 = vmatpush1.bf16.msra.mxu0 %v2811
      %2829 = vmatprep.subr.bf16.mxu0 0
      %2830 = vmatpush1.bf16.msra.mxu0 %v2810
      %2831 = vmatprep.subr.bf16.mxu0 0
      %2832 = vmatpush1.bf16.msra.mxu0 %v2809
      %2833 = vmatprep.subr.bf16.mxu0 0
      %2834 = vmatpush2.bf16.msra.mxu0 0
      %2835 = vmatprep.subr.bf16.mxu0 0
      %2836 = vmatpush2.bf16.msra.mxu0 0
      %2837 = vmatprep.subr.bf16.mxu0 0
      %2838 = vmatpush2.bf16.msra.mxu0 0
      %2839 = vmatprep.subr.bf16.mxu0 0
      %2840 = vmatpush2.bf16.msra.mxu0 0
      %2841 = vmatprep.subr.bf16.mxu0 0
      %2842 = vmatpush2.bf16.msra.mxu0 0
      %2843 = vmatprep.subr.bf16.mxu0 0
      %2844 = vmatpush2.bf16.msra.mxu0 0
      %2845 = vmatprep.subr.bf16.mxu0 0
      %2846 = vmatpush2.bf16.msra.mxu0 0
      %2847 = vmatprep.subr.bf16.mxu0 0
      %2848 = vmatpush2.bf16.msra.mxu0 0
      %2849 = vmatprep.mubr.bf16.mxu0 0
      %2850 = vmatmul.mubr.bf16.gmra.mxu0 %v2653
      %v2851 = vpop.f32.mrf.mxu0
      %v2852 = vadd.f32 %v2791, %v2851
      %v2853 = vpop.f32.mrf.mxu0
      %v2854 = vpop.f32.mrf.mxu0
      %v2855 = vpop.f32.mrf.mxu0
      %2856 = vdwg.mxu0
      %v2858 = vsel %vm681, %v2690, 0
      %v2861 = vsel %vm681, %v2771, 0
      %2863 = vmatprep.subr.mxu0 0.0
      %2864 = vmatpush1.xpose.msra.mxu0 0.0
      %2865 = vmatprep.subr.mxu0 0.0
      %2866 = vmatpush1.xpose.msra.mxu0 0.0
      %2867 = vmatprep.subr.mxu0 0.0
      %2868 = vmatpush1.xpose.msra.mxu0 0.0
      %2869 = vmatprep.subr.mxu0 0.0
      %2870 = vmatpush1.xpose.msra.mxu0 0.0
      %2871 = vmatprep.subr.mxu0 0.0
      %2872 = vmatpush1.xpose.msra.mxu0 0.0
      %2873 = vmatprep.subr.mxu0 0.0
      %2874 = vmatpush1.xpose.msra.mxu0 0.0
      %2875 = vmatprep.subr.mxu0 0.0
      %2876 = vmatpush1.xpose.msra.mxu0 0.0
      %2877 = vmatprep.subr.mxu0 0.0
      %2878 = vmatpush1.xpose.msra.mxu0 0.0
      %2879 = vmatprep.subr.mxu0 0.0
      %2880 = vmatpush1.xpose.msra.mxu0 0.0
      %2881 = vmatprep.subr.mxu0 0.0
      %2882 = vmatpush1.xpose.msra.mxu0 0.0
      %2883 = vmatprep.subr.mxu0 0.0
      %2884 = vmatpush1.xpose.msra.mxu0 0.0
      %2885 = vmatprep.subr.mxu0 0.0
      %2886 = vmatpush1.xpose.msra.mxu0 0.0
      %2887 = vmatprep.subr.mxu0 0.0
      %2888 = vmatpush1.xpose.msra.mxu0 0.0
      %2889 = vmatprep.subr.mxu0 0.0
      %2890 = vmatpush1.xpose.msra.mxu0 0.0
      %2891 = vmatprep.subr.mxu0 0.0
      %2892 = vmatpush1.xpose.msra.mxu0 0.0
      %2893 = vmatprep.subr.mxu0 0.0
      %2894 = vmatpush1.xpose.msra.mxu0 %v2861
      %2895 = vmatprep.subr.mxu0 0.0
      %2896 = vmatpush2.xpose.msra.mxu0 0.0
      %2897 = vmatprep.subr.mxu0 0.0
      %2898 = vmatpush2.xpose.msra.mxu0 0.0
      %2899 = vmatprep.subr.mxu0 0.0
      %2900 = vmatpush2.xpose.msra.mxu0 0.0
      %2901 = vmatprep.subr.mxu0 0.0
      %2902 = vmatpush2.xpose.msra.mxu0 0.0
      %2903 = vmatprep.subr.mxu0 0.0
      %2904 = vmatpush2.xpose.msra.mxu0 0.0
      %2905 = vmatprep.subr.mxu0 0.0
      %2906 = vmatpush2.xpose.msra.mxu0 0.0
      %2907 = vmatprep.subr.mxu0 0.0
      %2908 = vmatpush2.xpose.msra.mxu0 0.0
      %2909 = vmatprep.subr.mxu0 0.0
      %2910 = vmatpush2.xpose.msra.mxu0 0.0
      %2911 = vmatprep.subr.mxu0 0.0
      %2912 = vmatpush2.xpose.msra.mxu0 0.0
      %2913 = vmatprep.subr.mxu0 0.0
      %2914 = vmatpush2.xpose.msra.mxu0 0.0
      %2915 = vmatprep.subr.mxu0 0.0
      %2916 = vmatpush2.xpose.msra.mxu0 0.0
      %2917 = vmatprep.subr.mxu0 0.0
      %2918 = vmatpush2.xpose.msra.mxu0 0.0
      %2919 = vmatprep.subr.mxu0 0.0
      %2920 = vmatpush2.xpose.msra.mxu0 0.0
      %2921 = vmatprep.subr.mxu0 0.0
      %2922 = vmatpush2.xpose.msra.mxu0 0.0
      %2923 = vmatprep.subr.mxu0 0.0
      %2924 = vmatpush2.xpose.msra.mxu0 0.0
      %2925 = vmatprep.subr.mxu0 0.0
      %2926 = vmatpush2.xpose.msra.mxu0 0.0
      %2927 = vmatprep.mubr.f32.mxu0 0.0
      %2928 = vmatmul.mubr.f32.gmra.mxu0 %v2858
      %v2929 = vpop.f32.mrf.mxu0
      %v2930 = vadd.f32 0.0, %v2929
      %v2931 = vpop.f32.mrf.mxu0
      %2932 = vdwg.mxu0
      %v2933 = vmul.f32 %v2930, 0.25
      %v2934 = vsel %vm759, %v2933, -inf
      %2935 = vmax.xlane.f32.xlu0 %v2934
      %v2936 = vpop.xlane.xlu0 %2935
      %v2937 = vsub.f32 %v2933, %v2936
      %v2938 = vmul.f32 %v2937, 1.442695
      %v2939 = vpow.pop %v2938
      %v2940 = vsel %vm759, %v2939, 0.0
      %2941 = vadd.xlane.f32.xlu0 %v2940
      %v2942 = vpop.xlane.xlu0 %2941
      %v2943 = vrcp.pop %v2942
      %v2944 = vmul.f32 %v2939, %v2943
      %v2946 = vsel %vm759, %v2944, 0
      %2948 = vmatprep.subr.mxu0 0.0
      %2949 = vmatpush1.msra.mxu0 0.0
      %2950 = vmatprep.subr.mxu0 0.0
      %2951 = vmatpush1.msra.mxu0 0.0
      %2952 = vmatprep.subr.mxu0 0.0
      %2953 = vmatpush1.msra.mxu0 0.0
      %2954 = vmatprep.subr.mxu0 0.0
      %2955 = vmatpush1.msra.mxu0 0.0
      %2956 = vmatprep.subr.mxu0 0.0
      %2957 = vmatpush1.msra.mxu0 0.0
      %2958 = vmatprep.subr.mxu0 0.0
      %2959 = vmatpush1.msra.mxu0 0.0
      %2960 = vmatprep.subr.mxu0 0.0
      %2961 = vmatpush1.msra.mxu0 0.0
      %2962 = vmatprep.subr.mxu0 0.0
      %2963 = vmatpush1.msra.mxu0 0.0
      %2964 = vmatprep.subr.mxu0 0.0
      %2965 = vmatpush1.msra.mxu0 0.0
      %2966 = vmatprep.subr.mxu0 0.0
      %2967 = vmatpush1.msra.mxu0 0.0
      %2968 = vmatprep.subr.mxu0 0.0
      %2969 = vmatpush1.msra.mxu0 0.0
      %2970 = vmatprep.subr.mxu0 0.0
      %2971 = vmatpush1.msra.mxu0 0.0
      %2972 = vmatprep.subr.mxu0 0.0
      %2973 = vmatpush1.msra.mxu0 0.0
      %2974 = vmatprep.subr.mxu0 0.0
      %2975 = vmatpush1.msra.mxu0 0.0
      %2976 = vmatprep.subr.mxu0 0.0
      %2977 = vmatpush1.msra.mxu0 0.0
      %2978 = vmatprep.subr.mxu0 0.0
      %2979 = vmatpush1.msra.mxu0 %v2852
      %2980 = vmatprep.subr.mxu0 0.0
      %2981 = vmatpush2.msra.mxu0 0.0
      %2982 = vmatprep.subr.mxu0 0.0
      %2983 = vmatpush2.msra.mxu0 0.0
      %2984 = vmatprep.subr.mxu0 0.0
      %2985 = vmatpush2.msra.mxu0 0.0
      %2986 = vmatprep.subr.mxu0 0.0
      %2987 = vmatpush2.msra.mxu0 0.0
      %2988 = vmatprep.subr.mxu0 0.0
      %2989 = vmatpush2.msra.mxu0 0.0
      %2990 = vmatprep.subr.mxu0 0.0
      %2991 = vmatpush2.msra.mxu0 0.0
      %2992 = vmatprep.subr.mxu0 0.0
      %2993 = vmatpush2.msra.mxu0 0.0
      %2994 = vmatprep.subr.mxu0 0.0
      %2995 = vmatpush2.msra.mxu0 0.0
      %2996 = vmatprep.subr.mxu0 0.0
      %2997 = vmatpush2.msra.mxu0 0.0
      %2998 = vmatprep.subr.mxu0 0.0
      %2999 = vmatpush2.msra.mxu0 0.0
      %3000 = vmatprep.subr.mxu0 0.0
      %3001 = vmatpush2.msra.mxu0 0.0
      %3002 = vmatprep.subr.mxu0 0.0
      %3003 = vmatpush2.msra.mxu0 0.0
      %3004 = vmatprep.subr.mxu0 0.0
      %3005 = vmatpush2.msra.mxu0 0.0
      %3006 = vmatprep.subr.mxu0 0.0
      %3007 = vmatpush2.msra.mxu0 0.0
      %3008 = vmatprep.subr.mxu0 0.0
      %3009 = vmatpush2.msra.mxu0 0.0
      %3010 = vmatprep.subr.mxu0 0.0
      %3011 = vmatpush2.msra.mxu0 0.0
      %3012 = vmatprep.mubr.f32.mxu0 0.0
      %3013 = vmatmul.mubr.f32.gmra.mxu0 %v2946
      %v3014 = vpop.f32.mrf.mxu0
      %v3015 = vadd.f32 0.0, %v3014
      %v3016 = vpop.f32.mrf.mxu0
      %3017 = vdwg.mxu0
      %v3018 = vpack.c.bf16 %v3015, %v3015
      %s3019 = scalar_lea.vmem %s5, 32
      %v3020 = vld [vmem:[%s3019] sm:$0xf]
      %v3021 = vld [vmem:[%s3019 + $0x4] sm:$0xf]
      %s3022 = scalar_lea.vmem %s3, 416
      %v3023 = vld [vmem:[%s3022] sm:$0xf]
      %v3024 = vld [vmem:[%s3022 + $0x4] sm:$0xf]
      %v3025 = vld [vmem:[%s3022 + $0x8] sm:$0xf]
      %v3026 = vld [vmem:[%s3022 + $0xc] sm:$0xf]
      %v3027 = vld [vmem:[%s3022 + $0x10] sm:$0xf]
      %v3028 = vld [vmem:[%s3022 + $0x14] sm:$0xf]
      %v3029 = vld [vmem:[%s3022 + $0x18] sm:$0xf]
      %v3030 = vld [vmem:[%s3022 + $0x1c] sm:$0xf]
      %s3031 = scalar_lea.vmem %s4, 13
      %v3032 = vld [vmem:[%s3031] sm:$0x1]
      %v3034 = vlaneseq
      %v3035 = vshrl.u32 %v3034, 7
      %v3036 = vsub.s32 0, %v3035
      %v3037 = vrot.slane %v3032, %v3036
      %v3047 = vunpack.c.l.b16 %v3023
      %v3048 = vunpack.c.l.b16 %v3024
      %v3049 = vunpack.c.l.b16 %v3025
      %v3050 = vunpack.c.l.b16 %v3026
      %v3051 = vunpack.c.l.b16 %v3027
      %v3052 = vunpack.c.l.b16 %v3028
      %v3053 = vunpack.c.l.b16 %v3029
      %v3054 = vunpack.c.l.b16 %v3030
      %v3055 = vpack.c.b16 %v3048, %v3047
      %v3056 = vpack.c.b16 %v3050, %v3049
      %v3057 = vpack.c.b16 %v3052, %v3051
      %v3058 = vpack.c.b16 %v3054, %v3053
      %3063 = vmatprep.subr.bf16.mxu0 0
      %3064 = vmatpush1.bf16.msra.mxu0 0
      %3065 = vmatprep.subr.bf16.mxu0 0
      %3066 = vmatpush1.bf16.msra.mxu0 0
      %3067 = vmatprep.subr.bf16.mxu0 0
      %3068 = vmatpush1.bf16.msra.mxu0 0
      %3069 = vmatprep.subr.bf16.mxu0 0
      %3070 = vmatpush1.bf16.msra.mxu0 0
      %3071 = vmatprep.subr.bf16.mxu0 0
      %3072 = vmatpush1.bf16.msra.mxu0 %v3058
      %3073 = vmatprep.subr.bf16.mxu0 0
      %3074 = vmatpush1.bf16.msra.mxu0 %v3057
      %3075 = vmatprep.subr.bf16.mxu0 0
      %3076 = vmatpush1.bf16.msra.mxu0 %v3056
      %3077 = vmatprep.subr.bf16.mxu0 0
      %3078 = vmatpush1.bf16.msra.mxu0 %v3055
      %3079 = vmatprep.subr.bf16.mxu0 0
      %3080 = vmatpush2.bf16.msra.mxu0 0
      %3081 = vmatprep.subr.bf16.mxu0 0
      %3082 = vmatpush2.bf16.msra.mxu0 0
      %3083 = vmatprep.subr.bf16.mxu0 0
      %3084 = vmatpush2.bf16.msra.mxu0 0
      %3085 = vmatprep.subr.bf16.mxu0 0
      %3086 = vmatpush2.bf16.msra.mxu0 0
      %3087 = vmatprep.subr.bf16.mxu0 0
      %3088 = vmatpush2.bf16.msra.mxu0 0
      %3089 = vmatprep.subr.bf16.mxu0 0
      %3090 = vmatpush2.bf16.msra.mxu0 0
      %3091 = vmatprep.subr.bf16.mxu0 0
      %3092 = vmatpush2.bf16.msra.mxu0 0
      %3093 = vmatprep.subr.bf16.mxu0 0
      %3094 = vmatpush2.bf16.msra.mxu0 0
      %3095 = vmatprep.mubr.bf16.mxu0 0
      %3096 = vmatmul.mubr.bf16.gmra.mxu0 %v2653
      %v3097 = vpop.f32.mrf.mxu0
      %v3098 = vadd.f32 %v3037, %v3097
      %v3099 = vpop.f32.mrf.mxu0
      %v3100 = vpop.f32.mrf.mxu0
      %v3101 = vpop.f32.mrf.mxu0
      %3102 = vdwg.mxu0
      %s3103 = scalar_lea.vmem %s3, 544
      %v3104 = vld [vmem:[%s3103] sm:$0xf]
      %v3105 = vld [vmem:[%s3103 + $0x4] sm:$0xf]
      %v3106 = vld [vmem:[%s3103 + $0x8] sm:$0xf]
      %v3107 = vld [vmem:[%s3103 + $0xc] sm:$0xf]
      %v3108 = vld [vmem:[%s3103 + $0x10] sm:$0xf]
      %v3109 = vld [vmem:[%s3103 + $0x14] sm:$0xf]
      %v3110 = vld [vmem:[%s3103 + $0x18] sm:$0xf]
      %v3111 = vld [vmem:[%s3103 + $0x1c] sm:$0xf]
      %s3112 = scalar_lea.vmem %s4, 17
      %v3113 = vld [vmem:[%s3112] sm:$0x1]
      %v3115 = vlaneseq
      %v3116 = vshrl.u32 %v3115, 7
      %v3117 = vsub.s32 0, %v3116
      %v3118 = vrot.slane %v3113, %v3117
      %v3128 = vunpack.c.l.b16 %v3104
      %v3129 = vunpack.c.l.b16 %v3105
      %v3130 = vunpack.c.l.b16 %v3106
      %v3131 = vunpack.c.l.b16 %v3107
      %v3132 = vunpack.c.l.b16 %v3108
      %v3133 = vunpack.c.l.b16 %v3109
      %v3134 = vunpack.c.l.b16 %v3110
      %v3135 = vunpack.c.l.b16 %v3111
      %v3136 = vpack.c.b16 %v3129, %v3128
      %v3137 = vpack.c.b16 %v3131, %v3130
      %v3138 = vpack.c.b16 %v3133, %v3132
      %v3139 = vpack.c.b16 %v3135, %v3134
      %3144 = vmatprep.subr.bf16.mxu0 0
      %3145 = vmatpush1.bf16.msra.mxu0 0
      %3146 = vmatprep.subr.bf16.mxu0 0
      %3147 = vmatpush1.bf16.msra.mxu0 0
      %3148 = vmatprep.subr.bf16.mxu0 0
      %3149 = vmatpush1.bf16.msra.mxu0 0
      %3150 = vmatprep.subr.bf16.mxu0 0
      %3151 = vmatpush1.bf16.msra.mxu0 0
      %3152 = vmatprep.subr.bf16.mxu0 0
      %3153 = vmatpush1.bf16.msra.mxu0 %v3139
      %3154 = vmatprep.subr.bf16.mxu0 0
      %3155 = vmatpush1.bf16.msra.mxu0 %v3138
      %3156 = vmatprep.subr.bf16.mxu0 0
      %3157 = vmatpush1.bf16.msra.mxu0 %v3137
      %3158 = vmatprep.subr.bf16.mxu0 0
      %3159 = vmatpush1.bf16.msra.mxu0 %v3136
      %3160 = vmatprep.subr.bf16.mxu0 0
      %3161 = vmatpush2.bf16.msra.mxu0 0
      %3162 = vmatprep.subr.bf16.mxu0 0
      %3163 = vmatpush2.bf16.msra.mxu0 0
      %3164 = vmatprep.subr.bf16.mxu0 0
      %3165 = vmatpush2.bf16.msra.mxu0 0
      %3166 = vmatprep.subr.bf16.mxu0 0
      %3167 = vmatpush2.bf16.msra.mxu0 0
      %3168 = vmatprep.subr.bf16.mxu0 0
      %3169 = vmatpush2.bf16.msra.mxu0 0
      %3170 = vmatprep.subr.bf16.mxu0 0
      %3171 = vmatpush2.bf16.msra.mxu0 0
      %3172 = vmatprep.subr.bf16.mxu0 0
      %3173 = vmatpush2.bf16.msra.mxu0 0
      %3174 = vmatprep.subr.bf16.mxu0 0
      %3175 = vmatpush2.bf16.msra.mxu0 0
      %3176 = vmatprep.mubr.bf16.mxu0 0
      %3177 = vmatmul.mubr.bf16.gmra.mxu0 %v2653
      %v3178 = vpop.f32.mrf.mxu0
      %v3179 = vadd.f32 %v3118, %v3178
      %v3180 = vpop.f32.mrf.mxu0
      %v3181 = vpop.f32.mrf.mxu0
      %v3182 = vpop.f32.mrf.mxu0
      %3183 = vdwg.mxu0
      %s3184 = scalar_lea.vmem %s3, 672
      %v3185 = vld [vmem:[%s3184] sm:$0xf]
      %v3186 = vld [vmem:[%s3184 + $0x4] sm:$0xf]
      %v3187 = vld [vmem:[%s3184 + $0x8] sm:$0xf]
      %v3188 = vld [vmem:[%s3184 + $0xc] sm:$0xf]
      %v3189 = vld [vmem:[%s3184 + $0x10] sm:$0xf]
      %v3190 = vld [vmem:[%s3184 + $0x14] sm:$0xf]
      %v3191 = vld [vmem:[%s3184 + $0x18] sm:$0xf]
      %v3192 = vld [vmem:[%s3184 + $0x1c] sm:$0xf]
      %s3193 = scalar_lea.vmem %s4, 21
      %v3194 = vld [vmem:[%s3193] sm:$0x1]
      %v3196 = vlaneseq
      %v3197 = vshrl.u32 %v3196, 7
      %v3198 = vsub.s32 0, %v3197
      %v3199 = vrot.slane %v3194, %v3198
      %v3209 = vunpack.c.l.b16 %v3185
      %v3210 = vunpack.c.l.b16 %v3186
      %v3211 = vunpack.c.l.b16 %v3187
      %v3212 = vunpack.c.l.b16 %v3188
      %v3213 = vunpack.c.l.b16 %v3189
      %v3214 = vunpack.c.l.b16 %v3190
      %v3215 = vunpack.c.l.b16 %v3191
      %v3216 = vunpack.c.l.b16 %v3192
      %v3217 = vpack.c.b16 %v3210, %v3209
      %v3218 = vpack.c.b16 %v3212, %v3211
      %v3219 = vpack.c.b16 %v3214, %v3213
      %v3220 = vpack.c.b16 %v3216, %v3215
      %3225 = vmatprep.subr.bf16.mxu0 0
      %3226 = vmatpush1.bf16.msra.mxu0 0
      %3227 = vmatprep.subr.bf16.mxu0 0
      %3228 = vmatpush1.bf16.msra.mxu0 0
      %3229 = vmatprep.subr.bf16.mxu0 0
      %3230 = vmatpush1.bf16.msra.mxu0 0
      %3231 = vmatprep.subr.bf16.mxu0 0
      %3232 = vmatpush1.bf16.msra.mxu0 0
      %3233 = vmatprep.subr.bf16.mxu0 0
      %3234 = vmatpush1.bf16.msra.mxu0 %v3220
      %3235 = vmatprep.subr.bf16.mxu0 0
      %3236 = vmatpush1.bf16.msra.mxu0 %v3219
      %3237 = vmatprep.subr.bf16.mxu0 0
      %3238 = vmatpush1.bf16.msra.mxu0 %v3218
      %3239 = vmatprep.subr.bf16.mxu0 0
      %3240 = vmatpush1.bf16.msra.mxu0 %v3217
      %3241 = vmatprep.subr.bf16.mxu0 0
      %3242 = vmatpush2.bf16.msra.mxu0 0
      %3243 = vmatprep.subr.bf16.mxu0 0
      %3244 = vmatpush2.bf16.msra.mxu0 0
      %3245 = vmatprep.subr.bf16.mxu0 0
      %3246 = vmatpush2.bf16.msra.mxu0 0
      %3247 = vmatprep.subr.bf16.mxu0 0
      %3248 = vmatpush2.bf16.msra.mxu0 0
      %3249 = vmatprep.subr.bf16.mxu0 0
      %3250 = vmatpush2.bf16.msra.mxu0 0
      %3251 = vmatprep.subr.bf16.mxu0 0
      %3252 = vmatpush2.bf16.msra.mxu0 0
      %3253 = vmatprep.subr.bf16.mxu0 0
      %3254 = vmatpush2.bf16.msra.mxu0 0
      %3255 = vmatprep.subr.bf16.mxu0 0
      %3256 = vmatpush2.bf16.msra.mxu0 0
      %3257 = vmatprep.mubr.bf16.mxu0 0
      %3258 = vmatmul.mubr.bf16.gmra.mxu0 %v2653
      %v3259 = vpop.f32.mrf.mxu0
      %v3260 = vadd.f32 %v3199, %v3259
      %v3261 = vpop.f32.mrf.mxu0
      %v3262 = vpop.f32.mrf.mxu0
      %v3263 = vpop.f32.mrf.mxu0
      %3264 = vdwg.mxu0
      %v3266 = vsel %vm681, %v3098, 0
      %v3269 = vsel %vm681, %v3179, 0
      %3271 = vmatprep.subr.mxu0 0.0
      %3272 = vmatpush1.xpose.msra.mxu0 0.0
      %3273 = vmatprep.subr.mxu0 0.0
      %3274 = vmatpush1.xpose.msra.mxu0 0.0
      %3275 = vmatprep.subr.mxu0 0.0
      %3276 = vmatpush1.xpose.msra.mxu0 0.0
      %3277 = vmatprep.subr.mxu0 0.0
      %3278 = vmatpush1.xpose.msra.mxu0 0.0
      %3279 = vmatprep.subr.mxu0 0.0
      %3280 = vmatpush1.xpose.msra.mxu0 0.0
      %3281 = vmatprep.subr.mxu0 0.0
      %3282 = vmatpush1.xpose.msra.mxu0 0.0
      %3283 = vmatprep.subr.mxu0 0.0
      %3284 = vmatpush1.xpose.msra.mxu0 0.0
      %3285 = vmatprep.subr.mxu0 0.0
      %3286 = vmatpush1.xpose.msra.mxu0 0.0
      %3287 = vmatprep.subr.mxu0 0.0
      %3288 = vmatpush1.xpose.msra.mxu0 0.0
      %3289 = vmatprep.subr.mxu0 0.0
      %3290 = vmatpush1.xpose.msra.mxu0 0.0
      %3291 = vmatprep.subr.mxu0 0.0
      %3292 = vmatpush1.xpose.msra.mxu0 0.0
      %3293 = vmatprep.subr.mxu0 0.0
      %3294 = vmatpush1.xpose.msra.mxu0 0.0
      %3295 = vmatprep.subr.mxu0 0.0
      %3296 = vmatpush1.xpose.msra.mxu0 0.0
      %3297 = vmatprep.subr.mxu0 0.0
      %3298 = vmatpush1.xpose.msra.mxu0 0.0
      %3299 = vmatprep.subr.mxu0 0.0
      %3300 = vmatpush1.xpose.msra.mxu0 0.0
      %3301 = vmatprep.subr.mxu0 0.0
      %3302 = vmatpush1.xpose.msra.mxu0 %v3269
      %3303 = vmatprep.subr.mxu0 0.0
      %3304 = vmatpush2.xpose.msra.mxu0 0.0
      %3305 = vmatprep.subr.mxu0 0.0
      %3306 = vmatpush2.xpose.msra.mxu0 0.0
      %3307 = vmatprep.subr.mxu0 0.0
      %3308 = vmatpush2.xpose.msra.mxu0 0.0
      %3309 = vmatprep.subr.mxu0 0.0
      %3310 = vmatpush2.xpose.msra.mxu0 0.0
      %3311 = vmatprep.subr.mxu0 0.0
      %3312 = vmatpush2.xpose.msra.mxu0 0.0
      %3313 = vmatprep.subr.mxu0 0.0
      %3314 = vmatpush2.xpose.msra.mxu0 0.0
      %3315 = vmatprep.subr.mxu0 0.0
      %3316 = vmatpush2.xpose.msra.mxu0 0.0
      %3317 = vmatprep.subr.mxu0 0.0
      %3318 = vmatpush2.xpose.msra.mxu0 0.0
      %3319 = vmatprep.subr.mxu0 0.0
      %3320 = vmatpush2.xpose.msra.mxu0 0.0
      %3321 = vmatprep.subr.mxu0 0.0
      %3322 = vmatpush2.xpose.msra.mxu0 0.0
      %3323 = vmatprep.subr.mxu0 0.0
      %3324 = vmatpush2.xpose.msra.mxu0 0.0
      %3325 = vmatprep.subr.mxu0 0.0
      %3326 = vmatpush2.xpose.msra.mxu0 0.0
      %3327 = vmatprep.subr.mxu0 0.0
      %3328 = vmatpush2.xpose.msra.mxu0 0.0
      %3329 = vmatprep.subr.mxu0 0.0
      %3330 = vmatpush2.xpose.msra.mxu0 0.0
      %3331 = vmatprep.subr.mxu0 0.0
      %3332 = vmatpush2.xpose.msra.mxu0 0.0
      %3333 = vmatprep.subr.mxu0 0.0
      %3334 = vmatpush2.xpose.msra.mxu0 0.0
      %3335 = vmatprep.mubr.f32.mxu0 0.0
      %3336 = vmatmul.mubr.f32.gmra.mxu0 %v3266
      %v3337 = vpop.f32.mrf.mxu0
      %v3338 = vadd.f32 0.0, %v3337
      %v3339 = vpop.f32.mrf.mxu0
      %3340 = vdwg.mxu0
      %v3341 = vmul.f32 %v3338, 0.25
      %v3342 = vsel %vm759, %v3341, -inf
      %3343 = vmax.xlane.f32.xlu0 %v3342
      %v3344 = vpop.xlane.xlu0 %3343
      %v3345 = vsub.f32 %v3341, %v3344
      %v3346 = vmul.f32 %v3345, 1.442695
      %v3347 = vpow.pop %v3346
      %v3348 = vsel %vm759, %v3347, 0.0
      %3349 = vadd.xlane.f32.xlu0 %v3348
      %v3350 = vpop.xlane.xlu0 %3349
      %v3351 = vrcp.pop %v3350
      %v3352 = vmul.f32 %v3347, %v3351
      %v3354 = vsel %vm759, %v3352, 0
      %3356 = vmatprep.subr.mxu0 0.0
      %3357 = vmatpush1.msra.mxu0 0.0
      %3358 = vmatprep.subr.mxu0 0.0
      %3359 = vmatpush1.msra.mxu0 0.0
      %3360 = vmatprep.subr.mxu0 0.0
      %3361 = vmatpush1.msra.mxu0 0.0
      %3362 = vmatprep.subr.mxu0 0.0
      %3363 = vmatpush1.msra.mxu0 0.0
      %3364 = vmatprep.subr.mxu0 0.0
      %3365 = vmatpush1.msra.mxu0 0.0
      %3366 = vmatprep.subr.mxu0 0.0
      %3367 = vmatpush1.msra.mxu0 0.0
      %3368 = vmatprep.subr.mxu0 0.0
      %3369 = vmatpush1.msra.mxu0 0.0
      %3370 = vmatprep.subr.mxu0 0.0
      %3371 = vmatpush1.msra.mxu0 0.0
      %3372 = vmatprep.subr.mxu0 0.0
      %3373 = vmatpush1.msra.mxu0 0.0
      %3374 = vmatprep.subr.mxu0 0.0
      %3375 = vmatpush1.msra.mxu0 0.0
      %3376 = vmatprep.subr.mxu0 0.0
      %3377 = vmatpush1.msra.mxu0 0.0
      %3378 = vmatprep.subr.mxu0 0.0
      %3379 = vmatpush1.msra.mxu0 0.0
      %3380 = vmatprep.subr.mxu0 0.0
      %3381 = vmatpush1.msra.mxu0 0.0
      %3382 = vmatprep.subr.mxu0 0.0
      %3383 = vmatpush1.msra.mxu0 0.0
      %3384 = vmatprep.subr.mxu0 0.0
      %3385 = vmatpush1.msra.mxu0 0.0
      %3386 = vmatprep.subr.mxu0 0.0
      %3387 = vmatpush1.msra.mxu0 %v3260
      %3388 = vmatprep.subr.mxu0 0.0
      %3389 = vmatpush2.msra.mxu0 0.0
      %3390 = vmatprep.subr.mxu0 0.0
      %3391 = vmatpush2.msra.mxu0 0.0
      %3392 = vmatprep.subr.mxu0 0.0
      %3393 = vmatpush2.msra.mxu0 0.0
      %3394 = vmatprep.subr.mxu0 0.0
      %3395 = vmatpush2.msra.mxu0 0.0
      %3396 = vmatprep.subr.mxu0 0.0
      %3397 = vmatpush2.msra.mxu0 0.0
      %3398 = vmatprep.subr.mxu0 0.0
      %3399 = vmatpush2.msra.mxu0 0.0
      %3400 = vmatprep.subr.mxu0 0.0
      %3401 = vmatpush2.msra.mxu0 0.0
      %3402 = vmatprep.subr.mxu0 0.0
      %3403 = vmatpush2.msra.mxu0 0.0
      %3404 = vmatprep.subr.mxu0 0.0
      %3405 = vmatpush2.msra.mxu0 0.0
      %3406 = vmatprep.subr.mxu0 0.0
      %3407 = vmatpush2.msra.mxu0 0.0
      %3408 = vmatprep.subr.mxu0 0.0
      %3409 = vmatpush2.msra.mxu0 0.0
      %3410 = vmatprep.subr.mxu0 0.0
      %3411 = vmatpush2.msra.mxu0 0.0
      %3412 = vmatprep.subr.mxu0 0.0
      %3413 = vmatpush2.msra.mxu0 0.0
      %3414 = vmatprep.subr.mxu0 0.0
      %3415 = vmatpush2.msra.mxu0 0.0
      %3416 = vmatprep.subr.mxu0 0.0
      %3417 = vmatpush2.msra.mxu0 0.0
      %3418 = vmatprep.subr.mxu0 0.0
      %3419 = vmatpush2.msra.mxu0 0.0
      %3420 = vmatprep.mubr.f32.mxu0 0.0
      %3421 = vmatmul.mubr.f32.gmra.mxu0 %v3354
      %v3422 = vpop.f32.mrf.mxu0
      %v3423 = vadd.f32 0.0, %v3422
      %v3424 = vpop.f32.mrf.mxu0
      %3425 = vdwg.mxu0
      %v3426 = vpack.c.bf16 %v3423, %v3423
      %s3427 = scalar_lea.vmem %s5, 40
      %v3428 = vld [vmem:[%s3427] sm:$0xf]
      %v3429 = vld [vmem:[%s3427 + $0x4] sm:$0xf]
      %v3432 = vunpack.c.l.b16 %v3428
      %v3433 = vunpack.c.l.b16 %v3429
      %v3434 = vpack.c.b16 %v3433, %v3432
      %v3437 = vsel %vm681, %v3426, 0
      %3439 = vmatprep.subr.bf16.mxu0 0
      %3440 = vmatpush1.bf16.msra.mxu0 0
      %3441 = vmatprep.subr.bf16.mxu0 0
      %3442 = vmatpush1.bf16.msra.mxu0 0
      %3443 = vmatprep.subr.bf16.mxu0 0
      %3444 = vmatpush1.bf16.msra.mxu0 0
      %3445 = vmatprep.subr.bf16.mxu0 0
      %3446 = vmatpush1.bf16.msra.mxu0 0
      %3447 = vmatprep.subr.bf16.mxu0 0
      %3448 = vmatpush1.bf16.msra.mxu0 0
      %3449 = vmatprep.subr.bf16.mxu0 0
      %3450 = vmatpush1.bf16.msra.mxu0 0
      %3451 = vmatprep.subr.bf16.mxu0 0
      %3452 = vmatpush1.bf16.msra.mxu0 0
      %3453 = vmatprep.subr.bf16.mxu0 0
      %3454 = vmatpush1.bf16.msra.mxu0 %v3434
      %3455 = vmatprep.subr.bf16.mxu0 0
      %3456 = vmatpush2.bf16.msra.mxu0 0
      %3457 = vmatprep.subr.bf16.mxu0 0
      %3458 = vmatpush2.bf16.msra.mxu0 0
      %3459 = vmatprep.subr.bf16.mxu0 0
      %3460 = vmatpush2.bf16.msra.mxu0 0
      %3461 = vmatprep.subr.bf16.mxu0 0
      %3462 = vmatpush2.bf16.msra.mxu0 0
      %3463 = vmatprep.subr.bf16.mxu0 0
      %3464 = vmatpush2.bf16.msra.mxu0 0
      %3465 = vmatprep.subr.bf16.mxu0 0
      %3466 = vmatpush2.bf16.msra.mxu0 0
      %3467 = vmatprep.subr.bf16.mxu0 0
      %3468 = vmatpush2.bf16.msra.mxu0 0
      %3469 = vmatprep.subr.bf16.mxu0 0
      %3470 = vmatpush2.bf16.msra.mxu0 0
      %3471 = vmatprep.mubr.bf16.mxu0 0
      %3472 = vmatmul.mubr.bf16.gmra.mxu0 %v3437
      %v3473 = vpop.f32.mrf.mxu0
      %v3474 = vadd.f32 0.0, %v3473
      %v3475 = vpop.f32.mrf.mxu0
      %v3476 = vpop.f32.mrf.mxu0
      %v3477 = vpop.f32.mrf.mxu0
      %3478 = vdwg.mxu0
      %v3481 = vunpack.c.l.b16 %v3020
      %v3482 = vunpack.c.l.b16 %v3021
      %v3483 = vpack.c.b16 %v3482, %v3481
      %v3486 = vsel %vm681, %v3018, 0
      %3488 = vmatprep.subr.bf16.mxu0 0
      %3489 = vmatpush1.bf16.msra.mxu0 0
      %3490 = vmatprep.subr.bf16.mxu0 0
      %3491 = vmatpush1.bf16.msra.mxu0 0
      %3492 = vmatprep.subr.bf16.mxu0 0
      %3493 = vmatpush1.bf16.msra.mxu0 0
      %3494 = vmatprep.subr.bf16.mxu0 0
      %3495 = vmatpush1.bf16.msra.mxu0 0
      %3496 = vmatprep.subr.bf16.mxu0 0
      %3497 = vmatpush1.bf16.msra.mxu0 0
      %3498 = vmatprep.subr.bf16.mxu0 0
      %3499 = vmatpush1.bf16.msra.mxu0 0
      %3500 = vmatprep.subr.bf16.mxu0 0
      %3501 = vmatpush1.bf16.msra.mxu0 0
      %3502 = vmatprep.subr.bf16.mxu0 0
      %3503 = vmatpush1.bf16.msra.mxu0 %v3483
      %3504 = vmatprep.subr.bf16.mxu0 0
      %3505 = vmatpush2.bf16.msra.mxu0 0
      %3506 = vmatprep.subr.bf16.mxu0 0
      %3507 = vmatpush2.bf16.msra.mxu0 0
      %3508 = vmatprep.subr.bf16.mxu0 0
      %3509 = vmatpush2.bf16.msra.mxu0 0
      %3510 = vmatprep.subr.bf16.mxu0 0
      %3511 = vmatpush2.bf16.msra.mxu0 0
      %3512 = vmatprep.subr.bf16.mxu0 0
      %3513 = vmatpush2.bf16.msra.mxu0 0
      %3514 = vmatprep.subr.bf16.mxu0 0
      %3515 = vmatpush2.bf16.msra.mxu0 0
      %3516 = vmatprep.subr.bf16.mxu0 0
      %3517 = vmatpush2.bf16.msra.mxu0 0
      %3518 = vmatprep.subr.bf16.mxu0 0
      %3519 = vmatpush2.bf16.msra.mxu0 0
      %3520 = vmatprep.mubr.bf16.mxu0 0
      %3521 = vmatmul.mubr.bf16.gmra.mxu0 %v3486
      %v3522 = vpop.f32.mrf.mxu0
      %v3523 = vadd.f32 %v3474, %v3522
      %v3524 = vpop.f32.mrf.mxu0
      %v3525 = vpop.f32.mrf.mxu0
      %v3526 = vpop.f32.mrf.mxu0
      %3527 = vdwg.mxu0
      %s3528 = scalar_lea.vmem %s3, 448
      %v3529 = vld [vmem:[%s3528] sm:$0xf]
      %v3530 = vld [vmem:[%s3528 + $0x4] sm:$0xf]
      %v3531 = vld [vmem:[%s3528 + $0x8] sm:$0xf]
      %v3532 = vld [vmem:[%s3528 + $0xc] sm:$0xf]
      %v3533 = vld [vmem:[%s3528 + $0x10] sm:$0xf]
      %v3534 = vld [vmem:[%s3528 + $0x14] sm:$0xf]
      %v3535 = vld [vmem:[%s3528 + $0x18] sm:$0xf]
      %v3536 = vld [vmem:[%s3528 + $0x1c] sm:$0xf]
      %s3537 = scalar_lea.vmem %s4, 14
      %v3538 = vld [vmem:[%s3537] sm:$0x1]
      %v3540 = vlaneseq
      %v3541 = vshrl.u32 %v3540, 7
      %v3542 = vsub.s32 0, %v3541
      %v3543 = vrot.slane %v3538, %v3542
      %v3553 = vunpack.c.l.b16 %v3529
      %v3554 = vunpack.c.l.b16 %v3530
      %v3555 = vunpack.c.l.b16 %v3531
      %v3556 = vunpack.c.l.b16 %v3532
      %v3557 = vunpack.c.l.b16 %v3533
      %v3558 = vunpack.c.l.b16 %v3534
      %v3559 = vunpack.c.l.b16 %v3535
      %v3560 = vunpack.c.l.b16 %v3536
      %v3561 = vpack.c.b16 %v3554, %v3553
      %v3562 = vpack.c.b16 %v3556, %v3555
      %v3563 = vpack.c.b16 %v3558, %v3557
      %v3564 = vpack.c.b16 %v3560, %v3559
      %3569 = vmatprep.subr.bf16.mxu0 0
      %3570 = vmatpush1.bf16.msra.mxu0 0
      %3571 = vmatprep.subr.bf16.mxu0 0
      %3572 = vmatpush1.bf16.msra.mxu0 0
      %3573 = vmatprep.subr.bf16.mxu0 0
      %3574 = vmatpush1.bf16.msra.mxu0 0
      %3575 = vmatprep.subr.bf16.mxu0 0
      %3576 = vmatpush1.bf16.msra.mxu0 0
      %3577 = vmatprep.subr.bf16.mxu0 0
      %3578 = vmatpush1.bf16.msra.mxu0 %v3564
      %3579 = vmatprep.subr.bf16.mxu0 0
      %3580 = vmatpush1.bf16.msra.mxu0 %v3563
      %3581 = vmatprep.subr.bf16.mxu0 0
      %3582 = vmatpush1.bf16.msra.mxu0 %v3562
      %3583 = vmatprep.subr.bf16.mxu0 0
      %3584 = vmatpush1.bf16.msra.mxu0 %v3561
      %3585 = vmatprep.subr.bf16.mxu0 0
      %3586 = vmatpush2.bf16.msra.mxu0 0
      %3587 = vmatprep.subr.bf16.mxu0 0
      %3588 = vmatpush2.bf16.msra.mxu0 0
      %3589 = vmatprep.subr.bf16.mxu0 0
      %3590 = vmatpush2.bf16.msra.mxu0 0
      %3591 = vmatprep.subr.bf16.mxu0 0
      %3592 = vmatpush2.bf16.msra.mxu0 0
      %3593 = vmatprep.subr.bf16.mxu0 0
      %3594 = vmatpush2.bf16.msra.mxu0 0
      %3595 = vmatprep.subr.bf16.mxu0 0
      %3596 = vmatpush2.bf16.msra.mxu0 0
      %3597 = vmatprep.subr.bf16.mxu0 0
      %3598 = vmatpush2.bf16.msra.mxu0 0
      %3599 = vmatprep.subr.bf16.mxu0 0
      %3600 = vmatpush2.bf16.msra.mxu0 0
      %3601 = vmatprep.mubr.bf16.mxu0 0
      %3602 = vmatmul.mubr.bf16.gmra.mxu0 %v2653
      %v3603 = vpop.f32.mrf.mxu0
      %v3604 = vadd.f32 %v3543, %v3603
      %v3605 = vpop.f32.mrf.mxu0
      %v3606 = vpop.f32.mrf.mxu0
      %v3607 = vpop.f32.mrf.mxu0
      %3608 = vdwg.mxu0
      %s3609 = scalar_lea.vmem %s3, 576
      %v3610 = vld [vmem:[%s3609] sm:$0xf]
      %v3611 = vld [vmem:[%s3609 + $0x4] sm:$0xf]
      %v3612 = vld [vmem:[%s3609 + $0x8] sm:$0xf]
      %v3613 = vld [vmem:[%s3609 + $0xc] sm:$0xf]
      %v3614 = vld [vmem:[%s3609 + $0x10] sm:$0xf]
      %v3615 = vld [vmem:[%s3609 + $0x14] sm:$0xf]
      %v3616 = vld [vmem:[%s3609 + $0x18] sm:$0xf]
      %v3617 = vld [vmem:[%s3609 + $0x1c] sm:$0xf]
      %s3618 = scalar_lea.vmem %s4, 18
      %v3619 = vld [vmem:[%s3618] sm:$0x1]
      %v3621 = vlaneseq
      %v3622 = vshrl.u32 %v3621, 7
      %v3623 = vsub.s32 0, %v3622
      %v3624 = vrot.slane %v3619, %v3623
      %v3634 = vunpack.c.l.b16 %v3610
      %v3635 = vunpack.c.l.b16 %v3611
      %v3636 = vunpack.c.l.b16 %v3612
      %v3637 = vunpack.c.l.b16 %v3613
      %v3638 = vunpack.c.l.b16 %v3614
      %v3639 = vunpack.c.l.b16 %v3615
      %v3640 = vunpack.c.l.b16 %v3616
      %v3641 = vunpack.c.l.b16 %v3617
      %v3642 = vpack.c.b16 %v3635, %v3634
      %v3643 = vpack.c.b16 %v3637, %v3636
      %v3644 = vpack.c.b16 %v3639, %v3638
      %v3645 = vpack.c.b16 %v3641, %v3640
      %3650 = vmatprep.subr.bf16.mxu0 0
      %3651 = vmatpush1.bf16.msra.mxu0 0
      %3652 = vmatprep.subr.bf16.mxu0 0
      %3653 = vmatpush1.bf16.msra.mxu0 0
      %3654 = vmatprep.subr.bf16.mxu0 0
      %3655 = vmatpush1.bf16.msra.mxu0 0
      %3656 = vmatprep.subr.bf16.mxu0 0
      %3657 = vmatpush1.bf16.msra.mxu0 0
      %3658 = vmatprep.subr.bf16.mxu0 0
      %3659 = vmatpush1.bf16.msra.mxu0 %v3645
      %3660 = vmatprep.subr.bf16.mxu0 0
      %3661 = vmatpush1.bf16.msra.mxu0 %v3644
      %3662 = vmatprep.subr.bf16.mxu0 0
      %3663 = vmatpush1.bf16.msra.mxu0 %v3643
      %3664 = vmatprep.subr.bf16.mxu0 0
      %3665 = vmatpush1.bf16.msra.mxu0 %v3642
      %3666 = vmatprep.subr.bf16.mxu0 0
      %3667 = vmatpush2.bf16.msra.mxu0 0
      %3668 = vmatprep.subr.bf16.mxu0 0
      %3669 = vmatpush2.bf16.msra.mxu0 0
      %3670 = vmatprep.subr.bf16.mxu0 0
      %3671 = vmatpush2.bf16.msra.mxu0 0
      %3672 = vmatprep.subr.bf16.mxu0 0
      %3673 = vmatpush2.bf16.msra.mxu0 0
      %3674 = vmatprep.subr.bf16.mxu0 0
      %3675 = vmatpush2.bf16.msra.mxu0 0
      %3676 = vmatprep.subr.bf16.mxu0 0
      %3677 = vmatpush2.bf16.msra.mxu0 0
      %3678 = vmatprep.subr.bf16.mxu0 0
      %3679 = vmatpush2.bf16.msra.mxu0 0
      %3680 = vmatprep.subr.bf16.mxu0 0
      %3681 = vmatpush2.bf16.msra.mxu0 0
      %3682 = vmatprep.mubr.bf16.mxu0 0
      %3683 = vmatmul.mubr.bf16.gmra.mxu0 %v2653
      %v3684 = vpop.f32.mrf.mxu0
      %v3685 = vadd.f32 %v3624, %v3684
      %v3686 = vpop.f32.mrf.mxu0
      %v3687 = vpop.f32.mrf.mxu0
      %v3688 = vpop.f32.mrf.mxu0
      %3689 = vdwg.mxu0
      %s3690 = scalar_lea.vmem %s3, 704
      %v3691 = vld [vmem:[%s3690] sm:$0xf]
      %v3692 = vld [vmem:[%s3690 + $0x4] sm:$0xf]
      %v3693 = vld [vmem:[%s3690 + $0x8] sm:$0xf]
      %v3694 = vld [vmem:[%s3690 + $0xc] sm:$0xf]
      %v3695 = vld [vmem:[%s3690 + $0x10] sm:$0xf]
      %v3696 = vld [vmem:[%s3690 + $0x14] sm:$0xf]
      %v3697 = vld [vmem:[%s3690 + $0x18] sm:$0xf]
      %v3698 = vld [vmem:[%s3690 + $0x1c] sm:$0xf]
      %s3699 = scalar_lea.vmem %s4, 22
      %v3700 = vld [vmem:[%s3699] sm:$0x1]
      %v3702 = vlaneseq
      %v3703 = vshrl.u32 %v3702, 7
      %v3704 = vsub.s32 0, %v3703
      %v3705 = vrot.slane %v3700, %v3704
      %v3715 = vunpack.c.l.b16 %v3691
      %v3716 = vunpack.c.l.b16 %v3692
      %v3717 = vunpack.c.l.b16 %v3693
      %v3718 = vunpack.c.l.b16 %v3694
      %v3719 = vunpack.c.l.b16 %v3695
      %v3720 = vunpack.c.l.b16 %v3696
      %v3721 = vunpack.c.l.b16 %v3697
      %v3722 = vunpack.c.l.b16 %v3698
      %v3723 = vpack.c.b16 %v3716, %v3715
      %v3724 = vpack.c.b16 %v3718, %v3717
      %v3725 = vpack.c.b16 %v3720, %v3719
      %v3726 = vpack.c.b16 %v3722, %v3721
      %3731 = vmatprep.subr.bf16.mxu0 0
      %3732 = vmatpush1.bf16.msra.mxu0 0
      %3733 = vmatprep.subr.bf16.mxu0 0
      %3734 = vmatpush1.bf16.msra.mxu0 0
      %3735 = vmatprep.subr.bf16.mxu0 0
      %3736 = vmatpush1.bf16.msra.mxu0 0
      %3737 = vmatprep.subr.bf16.mxu0 0
      %3738 = vmatpush1.bf16.msra.mxu0 0
      %3739 = vmatprep.subr.bf16.mxu0 0
      %3740 = vmatpush1.bf16.msra.mxu0 %v3726
      %3741 = vmatprep.subr.bf16.mxu0 0
      %3742 = vmatpush1.bf16.msra.mxu0 %v3725
      %3743 = vmatprep.subr.bf16.mxu0 0
      %3744 = vmatpush1.bf16.msra.mxu0 %v3724
      %3745 = vmatprep.subr.bf16.mxu0 0
      %3746 = vmatpush1.bf16.msra.mxu0 %v3723
      %3747 = vmatprep.subr.bf16.mxu0 0
      %3748 = vmatpush2.bf16.msra.mxu0 0
      %3749 = vmatprep.subr.bf16.mxu0 0
      %3750 = vmatpush2.bf16.msra.mxu0 0
      %3751 = vmatprep.subr.bf16.mxu0 0
      %3752 = vmatpush2.bf16.msra.mxu0 0
      %3753 = vmatprep.subr.bf16.mxu0 0
      %3754 = vmatpush2.bf16.msra.mxu0 0
      %3755 = vmatprep.subr.bf16.mxu0 0
      %3756 = vmatpush2.bf16.msra.mxu0 0
      %3757 = vmatprep.subr.bf16.mxu0 0
      %3758 = vmatpush2.bf16.msra.mxu0 0
      %3759 = vmatprep.subr.bf16.mxu0 0
      %3760 = vmatpush2.bf16.msra.mxu0 0
      %3761 = vmatprep.subr.bf16.mxu0 0
      %3762 = vmatpush2.bf16.msra.mxu0 0
      %3763 = vmatprep.mubr.bf16.mxu0 0
      %3764 = vmatmul.mubr.bf16.gmra.mxu0 %v2653
      %v3765 = vpop.f32.mrf.mxu0
      %v3766 = vadd.f32 %v3705, %v3765
      %v3767 = vpop.f32.mrf.mxu0
      %v3768 = vpop.f32.mrf.mxu0
      %v3769 = vpop.f32.mrf.mxu0
      %3770 = vdwg.mxu0
      %v3772 = vsel %vm681, %v3604, 0
      %v3775 = vsel %vm681, %v3685, 0
      %3777 = vmatprep.subr.mxu0 0.0
      %3778 = vmatpush1.xpose.msra.mxu0 0.0
      %3779 = vmatprep.subr.mxu0 0.0
      %3780 = vmatpush1.xpose.msra.mxu0 0.0
      %3781 = vmatprep.subr.mxu0 0.0
      %3782 = vmatpush1.xpose.msra.mxu0 0.0
      %3783 = vmatprep.subr.mxu0 0.0
      %3784 = vmatpush1.xpose.msra.mxu0 0.0
      %3785 = vmatprep.subr.mxu0 0.0
      %3786 = vmatpush1.xpose.msra.mxu0 0.0
      %3787 = vmatprep.subr.mxu0 0.0
      %3788 = vmatpush1.xpose.msra.mxu0 0.0
      %3789 = vmatprep.subr.mxu0 0.0
      %3790 = vmatpush1.xpose.msra.mxu0 0.0
      %3791 = vmatprep.subr.mxu0 0.0
      %3792 = vmatpush1.xpose.msra.mxu0 0.0
      %3793 = vmatprep.subr.mxu0 0.0
      %3794 = vmatpush1.xpose.msra.mxu0 0.0
      %3795 = vmatprep.subr.mxu0 0.0
      %3796 = vmatpush1.xpose.msra.mxu0 0.0
      %3797 = vmatprep.subr.mxu0 0.0
      %3798 = vmatpush1.xpose.msra.mxu0 0.0
      %3799 = vmatprep.subr.mxu0 0.0
      %3800 = vmatpush1.xpose.msra.mxu0 0.0
      %3801 = vmatprep.subr.mxu0 0.0
      %3802 = vmatpush1.xpose.msra.mxu0 0.0
      %3803 = vmatprep.subr.mxu0 0.0
      %3804 = vmatpush1.xpose.msra.mxu0 0.0
      %3805 = vmatprep.subr.mxu0 0.0
      %3806 = vmatpush1.xpose.msra.mxu0 0.0
      %3807 = vmatprep.subr.mxu0 0.0
      %3808 = vmatpush1.xpose.msra.mxu0 %v3775
      %3809 = vmatprep.subr.mxu0 0.0
      %3810 = vmatpush2.xpose.msra.mxu0 0.0
      %3811 = vmatprep.subr.mxu0 0.0
      %3812 = vmatpush2.xpose.msra.mxu0 0.0
      %3813 = vmatprep.subr.mxu0 0.0
      %3814 = vmatpush2.xpose.msra.mxu0 0.0
      %3815 = vmatprep.subr.mxu0 0.0
      %3816 = vmatpush2.xpose.msra.mxu0 0.0
      %3817 = vmatprep.subr.mxu0 0.0
      %3818 = vmatpush2.xpose.msra.mxu0 0.0
      %3819 = vmatprep.subr.mxu0 0.0
      %3820 = vmatpush2.xpose.msra.mxu0 0.0
      %3821 = vmatprep.subr.mxu0 0.0
      %3822 = vmatpush2.xpose.msra.mxu0 0.0
      %3823 = vmatprep.subr.mxu0 0.0
      %3824 = vmatpush2.xpose.msra.mxu0 0.0
      %3825 = vmatprep.subr.mxu0 0.0
      %3826 = vmatpush2.xpose.msra.mxu0 0.0
      %3827 = vmatprep.subr.mxu0 0.0
      %3828 = vmatpush2.xpose.msra.mxu0 0.0
      %3829 = vmatprep.subr.mxu0 0.0
      %3830 = vmatpush2.xpose.msra.mxu0 0.0
      %3831 = vmatprep.subr.mxu0 0.0
      %3832 = vmatpush2.xpose.msra.mxu0 0.0
      %3833 = vmatprep.subr.mxu0 0.0
      %3834 = vmatpush2.xpose.msra.mxu0 0.0
      %3835 = vmatprep.subr.mxu0 0.0
      %3836 = vmatpush2.xpose.msra.mxu0 0.0
      %3837 = vmatprep.subr.mxu0 0.0
      %3838 = vmatpush2.xpose.msra.mxu0 0.0
      %3839 = vmatprep.subr.mxu0 0.0
      %3840 = vmatpush2.xpose.msra.mxu0 0.0
      %3841 = vmatprep.mubr.f32.mxu0 0.0
      %3842 = vmatmul.mubr.f32.gmra.mxu0 %v3772
      %v3843 = vpop.f32.mrf.mxu0
      %v3844 = vadd.f32 0.0, %v3843
      %v3845 = vpop.f32.mrf.mxu0
      %3846 = vdwg.mxu0
      %v3847 = vmul.f32 %v3844, 0.25
      %v3848 = vsel %vm759, %v3847, -inf
      %3849 = vmax.xlane.f32.xlu0 %v3848
      %v3850 = vpop.xlane.xlu0 %3849
      %v3851 = vsub.f32 %v3847, %v3850
      %v3852 = vmul.f32 %v3851, 1.442695
      %v3853 = vpow.pop %v3852
      %v3854 = vsel %vm759, %v3853, 0.0
      %3855 = vadd.xlane.f32.xlu0 %v3854
      %v3856 = vpop.xlane.xlu0 %3855
      %v3857 = vrcp.pop %v3856
      %v3858 = vmul.f32 %v3853, %v3857
      %v3860 = vsel %vm759, %v3858, 0
      %3862 = vmatprep.subr.mxu0 0.0
      %3863 = vmatpush1.msra.mxu0 0.0
      %3864 = vmatprep.subr.mxu0 0.0
      %3865 = vmatpush1.msra.mxu0 0.0
      %3866 = vmatprep.subr.mxu0 0.0
      %3867 = vmatpush1.msra.mxu0 0.0
      %3868 = vmatprep.subr.mxu0 0.0
      %3869 = vmatpush1.msra.mxu0 0.0
      %3870 = vmatprep.subr.mxu0 0.0
      %3871 = vmatpush1.msra.mxu0 0.0
      %3872 = vmatprep.subr.mxu0 0.0
      %3873 = vmatpush1.msra.mxu0 0.0
      %3874 = vmatprep.subr.mxu0 0.0
      %3875 = vmatpush1.msra.mxu0 0.0
      %3876 = vmatprep.subr.mxu0 0.0
      %3877 = vmatpush1.msra.mxu0 0.0
      %3878 = vmatprep.subr.mxu0 0.0
      %3879 = vmatpush1.msra.mxu0 0.0
      %3880 = vmatprep.subr.mxu0 0.0
      %3881 = vmatpush1.msra.mxu0 0.0
      %3882 = vmatprep.subr.mxu0 0.0
      %3883 = vmatpush1.msra.mxu0 0.0
      %3884 = vmatprep.subr.mxu0 0.0
      %3885 = vmatpush1.msra.mxu0 0.0
      %3886 = vmatprep.subr.mxu0 0.0
      %3887 = vmatpush1.msra.mxu0 0.0
      %3888 = vmatprep.subr.mxu0 0.0
      %3889 = vmatpush1.msra.mxu0 0.0
      %3890 = vmatprep.subr.mxu0 0.0
      %3891 = vmatpush1.msra.mxu0 0.0
      %3892 = vmatprep.subr.mxu0 0.0
      %3893 = vmatpush1.msra.mxu0 %v3766
      %3894 = vmatprep.subr.mxu0 0.0
      %3895 = vmatpush2.msra.mxu0 0.0
      %3896 = vmatprep.subr.mxu0 0.0
      %3897 = vmatpush2.msra.mxu0 0.0
      %3898 = vmatprep.subr.mxu0 0.0
      %3899 = vmatpush2.msra.mxu0 0.0
      %3900 = vmatprep.subr.mxu0 0.0
      %3901 = vmatpush2.msra.mxu0 0.0
      %3902 = vmatprep.subr.mxu0 0.0
      %3903 = vmatpush2.msra.mxu0 0.0
      %3904 = vmatprep.subr.mxu0 0.0
      %3905 = vmatpush2.msra.mxu0 0.0
      %3906 = vmatprep.subr.mxu0 0.0
      %3907 = vmatpush2.msra.mxu0 0.0
      %3908 = vmatprep.subr.mxu0 0.0
      %3909 = vmatpush2.msra.mxu0 0.0
      %3910 = vmatprep.subr.mxu0 0.0
      %3911 = vmatpush2.msra.mxu0 0.0
      %3912 = vmatprep.subr.mxu0 0.0
      %3913 = vmatpush2.msra.mxu0 0.0
      %3914 = vmatprep.subr.mxu0 0.0
      %3915 = vmatpush2.msra.mxu0 0.0
      %3916 = vmatprep.subr.mxu0 0.0
      %3917 = vmatpush2.msra.mxu0 0.0
      %3918 = vmatprep.subr.mxu0 0.0
      %3919 = vmatpush2.msra.mxu0 0.0
      %3920 = vmatprep.subr.mxu0 0.0
      %3921 = vmatpush2.msra.mxu0 0.0
      %3922 = vmatprep.subr.mxu0 0.0
      %3923 = vmatpush2.msra.mxu0 0.0
      %3924 = vmatprep.subr.mxu0 0.0
      %3925 = vmatpush2.msra.mxu0 0.0
      %3926 = vmatprep.mubr.f32.mxu0 0.0
      %3927 = vmatmul.mubr.f32.gmra.mxu0 %v3860
      %v3928 = vpop.f32.mrf.mxu0
      %v3929 = vadd.f32 0.0, %v3928
      %v3930 = vpop.f32.mrf.mxu0
      %3931 = vdwg.mxu0
      %v3932 = vpack.c.bf16 %v3929, %v3929
      %s3933 = scalar_lea.vmem %s5, 48
      %v3934 = vld [vmem:[%s3933] sm:$0xf]
      %v3935 = vld [vmem:[%s3933 + $0x4] sm:$0xf]
      %v3938 = vunpack.c.l.b16 %v3934
      %v3939 = vunpack.c.l.b16 %v3935
      %v3940 = vpack.c.b16 %v3939, %v3938
      %v3943 = vsel %vm681, %v3932, 0
      %3945 = vmatprep.subr.bf16.mxu0 0
      %3946 = vmatpush1.bf16.msra.mxu0 0
      %3947 = vmatprep.subr.bf16.mxu0 0
      %3948 = vmatpush1.bf16.msra.mxu0 0
      %3949 = vmatprep.subr.bf16.mxu0 0
      %3950 = vmatpush1.bf16.msra.mxu0 0
      %3951 = vmatprep.subr.bf16.mxu0 0
      %3952 = vmatpush1.bf16.msra.mxu0 0
      %3953 = vmatprep.subr.bf16.mxu0 0
      %3954 = vmatpush1.bf16.msra.mxu0 0
      %3955 = vmatprep.subr.bf16.mxu0 0
      %3956 = vmatpush1.bf16.msra.mxu0 0
      %3957 = vmatprep.subr.bf16.mxu0 0
      %3958 = vmatpush1.bf16.msra.mxu0 0
      %3959 = vmatprep.subr.bf16.mxu0 0
      %3960 = vmatpush1.bf16.msra.mxu0 %v3940
      %3961 = vmatprep.subr.bf16.mxu0 0
      %3962 = vmatpush2.bf16.msra.mxu0 0
      %3963 = vmatprep.subr.bf16.mxu0 0
      %3964 = vmatpush2.bf16.msra.mxu0 0
      %3965 = vmatprep.subr.bf16.mxu0 0
      %3966 = vmatpush2.bf16.msra.mxu0 0
      %3967 = vmatprep.subr.bf16.mxu0 0
      %3968 = vmatpush2.bf16.msra.mxu0 0
      %3969 = vmatprep.subr.bf16.mxu0 0
      %3970 = vmatpush2.bf16.msra.mxu0 0
      %3971 = vmatprep.subr.bf16.mxu0 0
      %3972 = vmatpush2.bf16.msra.mxu0 0
      %3973 = vmatprep.subr.bf16.mxu0 0
      %3974 = vmatpush2.bf16.msra.mxu0 0
      %3975 = vmatprep.subr.bf16.mxu0 0
      %3976 = vmatpush2.bf16.msra.mxu0 0
      %3977 = vmatprep.mubr.bf16.mxu0 0
      %3978 = vmatmul.mubr.bf16.gmra.mxu0 %v3943
      %v3979 = vpop.f32.mrf.mxu0
      %v3980 = vadd.f32 0.0, %v3979
      %v3981 = vpop.f32.mrf.mxu0
      %v3982 = vpop.f32.mrf.mxu0
      %v3983 = vpop.f32.mrf.mxu0
      %3984 = vdwg.mxu0
      %v3985 = vadd.f32 %v3523, %v3980
      %s3986 = scalar_lea.vmem %s3, 480
      %v3987 = vld [vmem:[%s3986] sm:$0xf]
      %v3988 = vld [vmem:[%s3986 + $0x4] sm:$0xf]
      %v3989 = vld [vmem:[%s3986 + $0x8] sm:$0xf]
      %v3990 = vld [vmem:[%s3986 + $0xc] sm:$0xf]
      %v3991 = vld [vmem:[%s3986 + $0x10] sm:$0xf]
      %v3992 = vld [vmem:[%s3986 + $0x14] sm:$0xf]
      %v3993 = vld [vmem:[%s3986 + $0x18] sm:$0xf]
      %v3994 = vld [vmem:[%s3986 + $0x1c] sm:$0xf]
      %s3995 = scalar_lea.vmem %s4, 15
      %v3996 = vld [vmem:[%s3995] sm:$0x1]
      %v3998 = vlaneseq
      %v3999 = vshrl.u32 %v3998, 7
      %v4000 = vsub.s32 0, %v3999
      %v4001 = vrot.slane %v3996, %v4000
      %v4011 = vunpack.c.l.b16 %v3987
      %v4012 = vunpack.c.l.b16 %v3988
      %v4013 = vunpack.c.l.b16 %v3989
      %v4014 = vunpack.c.l.b16 %v3990
      %v4015 = vunpack.c.l.b16 %v3991
      %v4016 = vunpack.c.l.b16 %v3992
      %v4017 = vunpack.c.l.b16 %v3993
      %v4018 = vunpack.c.l.b16 %v3994
      %v4019 = vpack.c.b16 %v4012, %v4011
      %v4020 = vpack.c.b16 %v4014, %v4013
      %v4021 = vpack.c.b16 %v4016, %v4015
      %v4022 = vpack.c.b16 %v4018, %v4017
      %4027 = vmatprep.subr.bf16.mxu0 0
      %4028 = vmatpush1.bf16.msra.mxu0 0
      %4029 = vmatprep.subr.bf16.mxu0 0
      %4030 = vmatpush1.bf16.msra.mxu0 0
      %4031 = vmatprep.subr.bf16.mxu0 0
      %4032 = vmatpush1.bf16.msra.mxu0 0
      %4033 = vmatprep.subr.bf16.mxu0 0
      %4034 = vmatpush1.bf16.msra.mxu0 0
      %4035 = vmatprep.subr.bf16.mxu0 0
      %4036 = vmatpush1.bf16.msra.mxu0 %v4022
      %4037 = vmatprep.subr.bf16.mxu0 0
      %4038 = vmatpush1.bf16.msra.mxu0 %v4021
      %4039 = vmatprep.subr.bf16.mxu0 0
      %4040 = vmatpush1.bf16.msra.mxu0 %v4020
      %4041 = vmatprep.subr.bf16.mxu0 0
      %4042 = vmatpush1.bf16.msra.mxu0 %v4019
      %4043 = vmatprep.subr.bf16.mxu0 0
      %4044 = vmatpush2.bf16.msra.mxu0 0
      %4045 = vmatprep.subr.bf16.mxu0 0
      %4046 = vmatpush2.bf16.msra.mxu0 0
      %4047 = vmatprep.subr.bf16.mxu0 0
      %4048 = vmatpush2.bf16.msra.mxu0 0
      %4049 = vmatprep.subr.bf16.mxu0 0
      %4050 = vmatpush2.bf16.msra.mxu0 0
      %4051 = vmatprep.subr.bf16.mxu0 0
      %4052 = vmatpush2.bf16.msra.mxu0 0
      %4053 = vmatprep.subr.bf16.mxu0 0
      %4054 = vmatpush2.bf16.msra.mxu0 0
      %4055 = vmatprep.subr.bf16.mxu0 0
      %4056 = vmatpush2.bf16.msra.mxu0 0
      %4057 = vmatprep.subr.bf16.mxu0 0
      %4058 = vmatpush2.bf16.msra.mxu0 0
      %4059 = vmatprep.mubr.bf16.mxu0 0
      %4060 = vmatmul.mubr.bf16.gmra.mxu0 %v2653
      %v4061 = vpop.f32.mrf.mxu0
      %v4062 = vadd.f32 %v4001, %v4061
      %v4063 = vpop.f32.mrf.mxu0
      %v4064 = vpop.f32.mrf.mxu0
      %v4065 = vpop.f32.mrf.mxu0
      %4066 = vdwg.mxu0
      %s4067 = scalar_lea.vmem %s3, 608
      %v4068 = vld [vmem:[%s4067] sm:$0xf]
      %v4069 = vld [vmem:[%s4067 + $0x4] sm:$0xf]
      %v4070 = vld [vmem:[%s4067 + $0x8] sm:$0xf]
      %v4071 = vld [vmem:[%s4067 + $0xc] sm:$0xf]
      %v4072 = vld [vmem:[%s4067 + $0x10] sm:$0xf]
      %v4073 = vld [vmem:[%s4067 + $0x14] sm:$0xf]
      %v4074 = vld [vmem:[%s4067 + $0x18] sm:$0xf]
      %v4075 = vld [vmem:[%s4067 + $0x1c] sm:$0xf]
      %s4076 = scalar_lea.vmem %s4, 19
      %v4077 = vld [vmem:[%s4076] sm:$0x1]
      %v4079 = vlaneseq
      %v4080 = vshrl.u32 %v4079, 7
      %v4081 = vsub.s32 0, %v4080
      %v4082 = vrot.slane %v4077, %v4081
      %v4092 = vunpack.c.l.b16 %v4068
      %v4093 = vunpack.c.l.b16 %v4069
      %v4094 = vunpack.c.l.b16 %v4070
      %v4095 = vunpack.c.l.b16 %v4071
      %v4096 = vunpack.c.l.b16 %v4072
      %v4097 = vunpack.c.l.b16 %v4073
      %v4098 = vunpack.c.l.b16 %v4074
      %v4099 = vunpack.c.l.b16 %v4075
      %v4100 = vpack.c.b16 %v4093, %v4092
      %v4101 = vpack.c.b16 %v4095, %v4094
      %v4102 = vpack.c.b16 %v4097, %v4096
      %v4103 = vpack.c.b16 %v4099, %v4098
      %4108 = vmatprep.subr.bf16.mxu0 0
      %4109 = vmatpush1.bf16.msra.mxu0 0
      %4110 = vmatprep.subr.bf16.mxu0 0
      %4111 = vmatpush1.bf16.msra.mxu0 0
      %4112 = vmatprep.subr.bf16.mxu0 0
      %4113 = vmatpush1.bf16.msra.mxu0 0
      %4114 = vmatprep.subr.bf16.mxu0 0
      %4115 = vmatpush1.bf16.msra.mxu0 0
      %4116 = vmatprep.subr.bf16.mxu0 0
      %4117 = vmatpush1.bf16.msra.mxu0 %v4103
      %4118 = vmatprep.subr.bf16.mxu0 0
      %4119 = vmatpush1.bf16.msra.mxu0 %v4102
      %4120 = vmatprep.subr.bf16.mxu0 0
      %4121 = vmatpush1.bf16.msra.mxu0 %v4101
      %4122 = vmatprep.subr.bf16.mxu0 0
      %4123 = vmatpush1.bf16.msra.mxu0 %v4100
      %4124 = vmatprep.subr.bf16.mxu0 0
      %4125 = vmatpush2.bf16.msra.mxu0 0
      %4126 = vmatprep.subr.bf16.mxu0 0
      %4127 = vmatpush2.bf16.msra.mxu0 0
      %4128 = vmatprep.subr.bf16.mxu0 0
      %4129 = vmatpush2.bf16.msra.mxu0 0
      %4130 = vmatprep.subr.bf16.mxu0 0
      %4131 = vmatpush2.bf16.msra.mxu0 0
      %4132 = vmatprep.subr.bf16.mxu0 0
      %4133 = vmatpush2.bf16.msra.mxu0 0
      %4134 = vmatprep.subr.bf16.mxu0 0
      %4135 = vmatpush2.bf16.msra.mxu0 0
      %4136 = vmatprep.subr.bf16.mxu0 0
      %4137 = vmatpush2.bf16.msra.mxu0 0
      %4138 = vmatprep.subr.bf16.mxu0 0
      %4139 = vmatpush2.bf16.msra.mxu0 0
      %4140 = vmatprep.mubr.bf16.mxu0 0
      %4141 = vmatmul.mubr.bf16.gmra.mxu0 %v2653
      %v4142 = vpop.f32.mrf.mxu0
      %v4143 = vadd.f32 %v4082, %v4142
      %v4144 = vpop.f32.mrf.mxu0
      %v4145 = vpop.f32.mrf.mxu0
      %v4146 = vpop.f32.mrf.mxu0
      %4147 = vdwg.mxu0
      %s4148 = scalar_lea.vmem %s3, 736
      %v4149 = vld [vmem:[%s4148] sm:$0xf]
      %v4150 = vld [vmem:[%s4148 + $0x4] sm:$0xf]
      %v4151 = vld [vmem:[%s4148 + $0x8] sm:$0xf]
      %v4152 = vld [vmem:[%s4148 + $0xc] sm:$0xf]
      %v4153 = vld [vmem:[%s4148 + $0x10] sm:$0xf]
      %v4154 = vld [vmem:[%s4148 + $0x14] sm:$0xf]
      %v4155 = vld [vmem:[%s4148 + $0x18] sm:$0xf]
      %v4156 = vld [vmem:[%s4148 + $0x1c] sm:$0xf]
      %s4157 = scalar_lea.vmem %s4, 23
      %v4158 = vld [vmem:[%s4157] sm:$0x1]
      %v4160 = vlaneseq
      %v4161 = vshrl.u32 %v4160, 7
      %v4162 = vsub.s32 0, %v4161
      %v4163 = vrot.slane %v4158, %v4162
      %v4173 = vunpack.c.l.b16 %v4149
      %v4174 = vunpack.c.l.b16 %v4150
      %v4175 = vunpack.c.l.b16 %v4151
      %v4176 = vunpack.c.l.b16 %v4152
      %v4177 = vunpack.c.l.b16 %v4153
      %v4178 = vunpack.c.l.b16 %v4154
      %v4179 = vunpack.c.l.b16 %v4155
      %v4180 = vunpack.c.l.b16 %v4156
      %v4181 = vpack.c.b16 %v4174, %v4173
      %v4182 = vpack.c.b16 %v4176, %v4175
      %v4183 = vpack.c.b16 %v4178, %v4177
      %v4184 = vpack.c.b16 %v4180, %v4179
      %4189 = vmatprep.subr.bf16.mxu0 0
      %4190 = vmatpush1.bf16.msra.mxu0 0
      %4191 = vmatprep.subr.bf16.mxu0 0
      %4192 = vmatpush1.bf16.msra.mxu0 0
      %4193 = vmatprep.subr.bf16.mxu0 0
      %4194 = vmatpush1.bf16.msra.mxu0 0
      %4195 = vmatprep.subr.bf16.mxu0 0
      %4196 = vmatpush1.bf16.msra.mxu0 0
      %4197 = vmatprep.subr.bf16.mxu0 0
      %4198 = vmatpush1.bf16.msra.mxu0 %v4184
      %4199 = vmatprep.subr.bf16.mxu0 0
      %4200 = vmatpush1.bf16.msra.mxu0 %v4183
      %4201 = vmatprep.subr.bf16.mxu0 0
      %4202 = vmatpush1.bf16.msra.mxu0 %v4182
      %4203 = vmatprep.subr.bf16.mxu0 0
      %4204 = vmatpush1.bf16.msra.mxu0 %v4181
      %4205 = vmatprep.subr.bf16.mxu0 0
      %4206 = vmatpush2.bf16.msra.mxu0 0
      %4207 = vmatprep.subr.bf16.mxu0 0
      %4208 = vmatpush2.bf16.msra.mxu0 0
      %4209 = vmatprep.subr.bf16.mxu0 0
      %4210 = vmatpush2.bf16.msra.mxu0 0
      %4211 = vmatprep.subr.bf16.mxu0 0
      %4212 = vmatpush2.bf16.msra.mxu0 0
      %4213 = vmatprep.subr.bf16.mxu0 0
      %4214 = vmatpush2.bf16.msra.mxu0 0
      %4215 = vmatprep.subr.bf16.mxu0 0
      %4216 = vmatpush2.bf16.msra.mxu0 0
      %4217 = vmatprep.subr.bf16.mxu0 0
      %4218 = vmatpush2.bf16.msra.mxu0 0
      %4219 = vmatprep.subr.bf16.mxu0 0
      %4220 = vmatpush2.bf16.msra.mxu0 0
      %4221 = vmatprep.mubr.bf16.mxu0 0
      %4222 = vmatmul.mubr.bf16.gmra.mxu0 %v2653
      %v4223 = vpop.f32.mrf.mxu0
      %v4224 = vadd.f32 %v4163, %v4223
      %v4225 = vpop.f32.mrf.mxu0
      %v4226 = vpop.f32.mrf.mxu0
      %v4227 = vpop.f32.mrf.mxu0
      %4228 = vdwg.mxu0
      %v4230 = vsel %vm681, %v4062, 0
      %v4233 = vsel %vm681, %v4143, 0
      %4235 = vmatprep.subr.mxu0 0.0
      %4236 = vmatpush1.xpose.msra.mxu0 0.0
      %4237 = vmatprep.subr.mxu0 0.0
      %4238 = vmatpush1.xpose.msra.mxu0 0.0
      %4239 = vmatprep.subr.mxu0 0.0
      %4240 = vmatpush1.xpose.msra.mxu0 0.0
      %4241 = vmatprep.subr.mxu0 0.0
      %4242 = vmatpush1.xpose.msra.mxu0 0.0
      %4243 = vmatprep.subr.mxu0 0.0
      %4244 = vmatpush1.xpose.msra.mxu0 0.0
      %4245 = vmatprep.subr.mxu0 0.0
      %4246 = vmatpush1.xpose.msra.mxu0 0.0
      %4247 = vmatprep.subr.mxu0 0.0
      %4248 = vmatpush1.xpose.msra.mxu0 0.0
      %4249 = vmatprep.subr.mxu0 0.0
      %4250 = vmatpush1.xpose.msra.mxu0 0.0
      %4251 = vmatprep.subr.mxu0 0.0
      %4252 = vmatpush1.xpose.msra.mxu0 0.0
      %4253 = vmatprep.subr.mxu0 0.0
      %4254 = vmatpush1.xpose.msra.mxu0 0.0
      %4255 = vmatprep.subr.mxu0 0.0
      %4256 = vmatpush1.xpose.msra.mxu0 0.0
      %4257 = vmatprep.subr.mxu0 0.0
      %4258 = vmatpush1.xpose.msra.mxu0 0.0
      %4259 = vmatprep.subr.mxu0 0.0
      %4260 = vmatpush1.xpose.msra.mxu0 0.0
      %4261 = vmatprep.subr.mxu0 0.0
      %4262 = vmatpush1.xpose.msra.mxu0 0.0
      %4263 = vmatprep.subr.mxu0 0.0
      %4264 = vmatpush1.xpose.msra.mxu0 0.0
      %4265 = vmatprep.subr.mxu0 0.0
      %4266 = vmatpush1.xpose.msra.mxu0 %v4233
      %4267 = vmatprep.subr.mxu0 0.0
      %4268 = vmatpush2.xpose.msra.mxu0 0.0
      %4269 = vmatprep.subr.mxu0 0.0
      %4270 = vmatpush2.xpose.msra.mxu0 0.0
      %4271 = vmatprep.subr.mxu0 0.0
      %4272 = vmatpush2.xpose.msra.mxu0 0.0
      %4273 = vmatprep.subr.mxu0 0.0
      %4274 = vmatpush2.xpose.msra.mxu0 0.0
      %4275 = vmatprep.subr.mxu0 0.0
      %4276 = vmatpush2.xpose.msra.mxu0 0.0
      %4277 = vmatprep.subr.mxu0 0.0
      %4278 = vmatpush2.xpose.msra.mxu0 0.0
      %4279 = vmatprep.subr.mxu0 0.0
      %4280 = vmatpush2.xpose.msra.mxu0 0.0
      %4281 = vmatprep.subr.mxu0 0.0
      %4282 = vmatpush2.xpose.msra.mxu0 0.0
      %4283 = vmatprep.subr.mxu0 0.0
      %4284 = vmatpush2.xpose.msra.mxu0 0.0
      %4285 = vmatprep.subr.mxu0 0.0
      %4286 = vmatpush2.xpose.msra.mxu0 0.0
      %4287 = vmatprep.subr.mxu0 0.0
      %4288 = vmatpush2.xpose.msra.mxu0 0.0
      %4289 = vmatprep.subr.mxu0 0.0
      %4290 = vmatpush2.xpose.msra.mxu0 0.0
      %4291 = vmatprep.subr.mxu0 0.0
      %4292 = vmatpush2.xpose.msra.mxu0 0.0
      %4293 = vmatprep.subr.mxu0 0.0
      %4294 = vmatpush2.xpose.msra.mxu0 0.0
      %4295 = vmatprep.subr.mxu0 0.0
      %4296 = vmatpush2.xpose.msra.mxu0 0.0
      %4297 = vmatprep.subr.mxu0 0.0
      %4298 = vmatpush2.xpose.msra.mxu0 0.0
      %4299 = vmatprep.mubr.f32.mxu0 0.0
      %4300 = vmatmul.mubr.f32.gmra.mxu0 %v4230
      %v4301 = vpop.f32.mrf.mxu0
      %v4302 = vadd.f32 0.0, %v4301
      %v4303 = vpop.f32.mrf.mxu0
      %4304 = vdwg.mxu0
      %v4305 = vmul.f32 %v4302, 0.25
      %v4306 = vsel %vm759, %v4305, -inf
      %4307 = vmax.xlane.f32.xlu0 %v4306
      %v4308 = vpop.xlane.xlu0 %4307
      %v4309 = vsub.f32 %v4305, %v4308
      %v4310 = vmul.f32 %v4309, 1.442695
      %v4311 = vpow.pop %v4310
      %v4312 = vsel %vm759, %v4311, 0.0
      %4313 = vadd.xlane.f32.xlu0 %v4312
      %v4314 = vpop.xlane.xlu0 %4313
      %v4315 = vrcp.pop %v4314
      %v4316 = vmul.f32 %v4311, %v4315
      %v4318 = vsel %vm759, %v4316, 0
      %4320 = vmatprep.subr.mxu0 0.0
      %4321 = vmatpush1.msra.mxu0 0.0
      %4322 = vmatprep.subr.mxu0 0.0
      %4323 = vmatpush1.msra.mxu0 0.0
      %4324 = vmatprep.subr.mxu0 0.0
      %4325 = vmatpush1.msra.mxu0 0.0
      %4326 = vmatprep.subr.mxu0 0.0
      %4327 = vmatpush1.msra.mxu0 0.0
      %4328 = vmatprep.subr.mxu0 0.0
      %4329 = vmatpush1.msra.mxu0 0.0
      %4330 = vmatprep.subr.mxu0 0.0
      %4331 = vmatpush1.msra.mxu0 0.0
      %4332 = vmatprep.subr.mxu0 0.0
      %4333 = vmatpush1.msra.mxu0 0.0
      %4334 = vmatprep.subr.mxu0 0.0
      %4335 = vmatpush1.msra.mxu0 0.0
      %4336 = vmatprep.subr.mxu0 0.0
      %4337 = vmatpush1.msra.mxu0 0.0
      %4338 = vmatprep.subr.mxu0 0.0
      %4339 = vmatpush1.msra.mxu0 0.0
      %4340 = vmatprep.subr.mxu0 0.0
      %4341 = vmatpush1.msra.mxu0 0.0
      %4342 = vmatprep.subr.mxu0 0.0
      %4343 = vmatpush1.msra.mxu0 0.0
      %4344 = vmatprep.subr.mxu0 0.0
      %4345 = vmatpush1.msra.mxu0 0.0
      %4346 = vmatprep.subr.mxu0 0.0
      %4347 = vmatpush1.msra.mxu0 0.0
      %4348 = vmatprep.subr.mxu0 0.0
      %4349 = vmatpush1.msra.mxu0 0.0
      %4350 = vmatprep.subr.mxu0 0.0
      %4351 = vmatpush1.msra.mxu0 %v4224
      %4352 = vmatprep.subr.mxu0 0.0
      %4353 = vmatpush2.msra.mxu0 0.0
      %4354 = vmatprep.subr.mxu0 0.0
      %4355 = vmatpush2.msra.mxu0 0.0
      %4356 = vmatprep.subr.mxu0 0.0
      %4357 = vmatpush2.msra.mxu0 0.0
      %4358 = vmatprep.subr.mxu0 0.0
      %4359 = vmatpush2.msra.mxu0 0.0
      %4360 = vmatprep.subr.mxu0 0.0
      %4361 = vmatpush2.msra.mxu0 0.0
      %4362 = vmatprep.subr.mxu0 0.0
      %4363 = vmatpush2.msra.mxu0 0.0
      %4364 = vmatprep.subr.mxu0 0.0
      %4365 = vmatpush2.msra.mxu0 0.0
      %4366 = vmatprep.subr.mxu0 0.0
      %4367 = vmatpush2.msra.mxu0 0.0
      %4368 = vmatprep.subr.mxu0 0.0
      %4369 = vmatpush2.msra.mxu0 0.0
      %4370 = vmatprep.subr.mxu0 0.0
      %4371 = vmatpush2.msra.mxu0 0.0
      %4372 = vmatprep.subr.mxu0 0.0
      %4373 = vmatpush2.msra.mxu0 0.0
      %4374 = vmatprep.subr.mxu0 0.0
      %4375 = vmatpush2.msra.mxu0 0.0
      %4376 = vmatprep.subr.mxu0 0.0
      %4377 = vmatpush2.msra.mxu0 0.0
      %4378 = vmatprep.subr.mxu0 0.0
      %4379 = vmatpush2.msra.mxu0 0.0
      %4380 = vmatprep.subr.mxu0 0.0
      %4381 = vmatpush2.msra.mxu0 0.0
      %4382 = vmatprep.subr.mxu0 0.0
      %4383 = vmatpush2.msra.mxu0 0.0
      %4384 = vmatprep.mubr.f32.mxu0 0.0
      %4385 = vmatmul.mubr.f32.gmra.mxu0 %v4318
      %v4386 = vpop.f32.mrf.mxu0
      %v4387 = vadd.f32 0.0, %v4386
      %v4388 = vpop.f32.mrf.mxu0
      %4389 = vdwg.mxu0
      %v4390 = vpack.c.bf16 %v4387, %v4387
      %s4391 = scalar_lea.vmem %s5, 56
      %v4392 = vld [vmem:[%s4391] sm:$0xf]
      %v4393 = vld [vmem:[%s4391 + $0x4] sm:$0xf]
      %v4396 = vunpack.c.l.b16 %v4392
      %v4397 = vunpack.c.l.b16 %v4393
      %v4398 = vpack.c.b16 %v4397, %v4396
      %v4401 = vsel %vm681, %v4390, 0
      %4403 = vmatprep.subr.bf16.mxu0 0
      %4404 = vmatpush1.bf16.msra.mxu0 0
      %4405 = vmatprep.subr.bf16.mxu0 0
      %4406 = vmatpush1.bf16.msra.mxu0 0
      %4407 = vmatprep.subr.bf16.mxu0 0
      %4408 = vmatpush1.bf16.msra.mxu0 0
      %4409 = vmatprep.subr.bf16.mxu0 0
      %4410 = vmatpush1.bf16.msra.mxu0 0
      %4411 = vmatprep.subr.bf16.mxu0 0
      %4412 = vmatpush1.bf16.msra.mxu0 0
      %4413 = vmatprep.subr.bf16.mxu0 0
      %4414 = vmatpush1.bf16.msra.mxu0 0
      %4415 = vmatprep.subr.bf16.mxu0 0
      %4416 = vmatpush1.bf16.msra.mxu0 0
      %4417 = vmatprep.subr.bf16.mxu0 0
      %4418 = vmatpush1.bf16.msra.mxu0 %v4398
      %4419 = vmatprep.subr.bf16.mxu0 0
      %4420 = vmatpush2.bf16.msra.mxu0 0
      %4421 = vmatprep.subr.bf16.mxu0 0
      %4422 = vmatpush2.bf16.msra.mxu0 0
      %4423 = vmatprep.subr.bf16.mxu0 0
      %4424 = vmatpush2.bf16.msra.mxu0 0
      %4425 = vmatprep.subr.bf16.mxu0 0
      %4426 = vmatpush2.bf16.msra.mxu0 0
      %4427 = vmatprep.subr.bf16.mxu0 0
      %4428 = vmatpush2.bf16.msra.mxu0 0
      %4429 = vmatprep.subr.bf16.mxu0 0
      %4430 = vmatpush2.bf16.msra.mxu0 0
      %4431 = vmatprep.subr.bf16.mxu0 0
      %4432 = vmatpush2.bf16.msra.mxu0 0
      %4433 = vmatprep.subr.bf16.mxu0 0
      %4434 = vmatpush2.bf16.msra.mxu0 0
      %4435 = vmatprep.mubr.bf16.mxu0 0
      %4436 = vmatmul.mubr.bf16.gmra.mxu0 %v4401
      %v4437 = vpop.f32.mrf.mxu0
      %v4438 = vadd.f32 0.0, %v4437
      %v4439 = vpop.f32.mrf.mxu0
      %v4440 = vpop.f32.mrf.mxu0
      %v4441 = vpop.f32.mrf.mxu0
      %4442 = vdwg.mxu0
      %v4443 = vadd.f32 %v3985, %v4438
      %v4444 = vld [vmem:[%s2 + $0xe] sm:$0x1]
      %v4445 = vlaneseq
      %v4446 = vshrl.u32 %v4445, 7
      %v4447 = vsub.s32 0, %v4446
      %v4448 = vrot.slane %v4444, %v4447
      %v4449 = vadd.f32 %v4443, %v4448
      %v4450 = vadd.f32 %v2609, %v4449
      %v4451 = vld [vmem:[%s2 + $0x10] sm:$0x1]
      %v4452 = vld [vmem:[%s2 + $0x11] sm:$0x1]
      %v4453 = vsel %vm475, %v4450, 0.0
      %4454 = vadd.xlane.f32.xlu0 %v4453
      %v4455 = vpop.xlane.xlu0 %4454
      %v4456 = vmul.f32 %v4455, %v2281
      %v4457 = vsub.f32 %v4450, %v4456
      %v4458 = vmul.f32 %v4457, %v4457
      %v4459 = vsel %vm475, %v4458, 0.0
      %4460 = vadd.xlane.f32.xlu0 %v4459
      %v4461 = vpop.xlane.xlu0 %4460
      %v4462 = vmul.f32 %v4461, %v2281
      %v4463 = vadd.f32 %v4462, 1e-05
      %v4464 = vrsqrt.pop %v4463
      %v4465 = vmul.f32 %v4457, %v4464
      %v4466 = vlaneseq
      %v4467 = vshrl.u32 %v4466, 7
      %v4468 = vsub.s32 0, %v4467
      %v4469 = vrot.slane %v4451, %v4468
      %v4470 = vmul.f32 %v4465, %v4469
      %v4471 = vlaneseq
      %v4472 = vshrl.u32 %v4471, 7
      %v4473 = vsub.s32 0, %v4472
      %v4474 = vrot.slane %v4452, %v4473
      %v4475 = vadd.f32 %v4470, %v4474
      %v4476 = vpack.c.bf16 %v4475, %v4475
      %s4477 = scalar_lea.vmem %s6, 64
      %v4478 = vld [vmem:[%s4477] sm:$0xff]
      %v4479 = vld [vmem:[%s4477 + $0x8] sm:$0xff]
      %v4480 = vld [vmem:[%s4477 + $0x10] sm:$0xff]
      %v4481 = vld [vmem:[%s4477 + $0x18] sm:$0xff]
      %v4482 = vld [vmem:[%s4477 + $0x20] sm:$0xff]
      %v4483 = vld [vmem:[%s4477 + $0x28] sm:$0xff]
      %v4484 = vld [vmem:[%s4477 + $0x30] sm:$0xff]
      %v4485 = vld [vmem:[%s4477 + $0x38] sm:$0xff]
      %s4486 = scalar_lea.vmem %s7, 2
      %v4487 = vld [vmem:[%s4486] sm:$0x3]
      %v4489 = vlaneseq
      %v4490 = vshrl.u32 %v4489, 7
      %v4491 = vsub.s32 0, %v4490
      %v4492 = vrot.slane %v4487, %v4491
      %v4493 = vlaneseq
      %v4494 = vshrl.u32 %v4493, 7
      %v4495 = vsub.s32 1, %v4494
      %v4496 = vrot.slane %v4487, %v4495
      %v4507 = vunpack.c.l.b16 %v4478
      %v4508 = vunpack.c.h.b16 %v4478
      %v4509 = vunpack.c.l.b16 %v4479
      %v4510 = vunpack.c.h.b16 %v4479
      %v4511 = vunpack.c.l.b16 %v4480
      %v4512 = vunpack.c.h.b16 %v4480
      %v4513 = vunpack.c.l.b16 %v4481
      %v4514 = vunpack.c.h.b16 %v4481
      %v4515 = vunpack.c.l.b16 %v4482
      %v4516 = vunpack.c.h.b16 %v4482
      %v4517 = vunpack.c.l.b16 %v4483
      %v4518 = vunpack.c.h.b16 %v4483
      %v4519 = vunpack.c.l.b16 %v4484
      %v4520 = vunpack.c.h.b16 %v4484
      %v4521 = vunpack.c.l.b16 %v4485
      %v4522 = vunpack.c.h.b16 %v4485
      %v4523 = vpack.c.b16 %v4509, %v4507
      %v4524 = vpack.c.b16 %v4510, %v4508
      %v4525 = vpack.c.b16 %v4513, %v4511
      %v4526 = vpack.c.b16 %v4514, %v4512
      %v4527 = vpack.c.b16 %v4517, %v4515
      %v4528 = vpack.c.b16 %v4518, %v4516
      %v4529 = vpack.c.b16 %v4521, %v4519
      %v4530 = vpack.c.b16 %v4522, %v4520
      %v4540 = vsel %vm475, %v4476, 0
      %4542 = vmatprep.subr.bf16.mxu0 0
      %4543 = vmatpush1.bf16.msra.mxu0 0
      %4544 = vmatprep.subr.bf16.mxu0 0
      %4545 = vmatpush1.bf16.msra.mxu0 0
      %4546 = vmatprep.subr.bf16.mxu0 0
      %4547 = vmatpush1.bf16.msra.mxu0 0
      %4548 = vmatprep.subr.bf16.mxu0 0
      %4549 = vmatpush1.bf16.msra.mxu0 0
      %4550 = vmatprep.subr.bf16.mxu0 %v4530
      %4551 = vmatpush1.bf16.msra.mxu0 %v4529
      %4552 = vmatprep.subr.bf16.mxu0 %v4528
      %4553 = vmatpush1.bf16.msra.mxu0 %v4527
      %4554 = vmatprep.subr.bf16.mxu0 %v4526
      %4555 = vmatpush1.bf16.msra.mxu0 %v4525
      %4556 = vmatprep.subr.bf16.mxu0 %v4524
      %4557 = vmatpush1.bf16.msra.mxu0 %v4523
      %4558 = vmatprep.subr.bf16.mxu0 0
      %4559 = vmatpush2.bf16.msra.mxu0 0
      %4560 = vmatprep.subr.bf16.mxu0 0
      %4561 = vmatpush2.bf16.msra.mxu0 0
      %4562 = vmatprep.subr.bf16.mxu0 0
      %4563 = vmatpush2.bf16.msra.mxu0 0
      %4564 = vmatprep.subr.bf16.mxu0 0
      %4565 = vmatpush2.bf16.msra.mxu0 0
      %4566 = vmatprep.subr.bf16.mxu0 0
      %4567 = vmatpush2.bf16.msra.mxu0 0
      %4568 = vmatprep.subr.bf16.mxu0 0
      %4569 = vmatpush2.bf16.msra.mxu0 0
      %4570 = vmatprep.subr.bf16.mxu0 0
      %4571 = vmatpush2.bf16.msra.mxu0 0
      %4572 = vmatprep.subr.bf16.mxu0 0
      %4573 = vmatpush2.bf16.msra.mxu0 0
      %4574 = vmatprep.mubr.bf16.mxu0 0
      %4575 = vmatmul.mubr.bf16.gmra.mxu0 %v4540
      %v4576 = vpop.f32.mrf.mxu0
      %v4577 = vadd.f32 %v4492, %v4576
      %v4578 = vpop.f32.mrf.mxu0
      %v4579 = vadd.f32 %v4496, %v4578
      %v4580 = vpop.f32.mrf.mxu0
      %v4581 = vpop.f32.mrf.mxu0
      %4582 = vdwg.mxu0
      %v4583 = vmax.f32 %v4577, 0.0
      %v4584 = vmax.f32 %v4579, 0.0
      %v4585 = vpack.c.bf16 %v4583, %v4583
      %v4586 = vpack.c.bf16 %v4584, %v4584
      %s4587 = scalar_lea.vmem %s8, 128
      %v4588 = vld [vmem:[%s4587] sm:$0xf]
      %v4589 = vld [vmem:[%s4587 + $0x4] sm:$0xf]
      %v4590 = vld [vmem:[%s4587 + $0x8] sm:$0xf]
      %v4591 = vld [vmem:[%s4587 + $0xc] sm:$0xf]
      %v4592 = vld [vmem:[%s4587 + $0x10] sm:$0xf]
      %v4593 = vld [vmem:[%s4587 + $0x14] sm:$0xf]
      %v4594 = vld [vmem:[%s4587 + $0x18] sm:$0xf]
      %v4595 = vld [vmem:[%s4587 + $0x1c] sm:$0xf]
      %v4596 = vld [vmem:[%s4587 + $0x20] sm:$0xf]
      %v4597 = vld [vmem:[%s4587 + $0x24] sm:$0xf]
      %v4598 = vld [vmem:[%s4587 + $0x28] sm:$0xf]
      %v4599 = vld [vmem:[%s4587 + $0x2c] sm:$0xf]
      %v4600 = vld [vmem:[%s4587 + $0x30] sm:$0xf]
      %v4601 = vld [vmem:[%s4587 + $0x34] sm:$0xf]
      %v4602 = vld [vmem:[%s4587 + $0x38] sm:$0xf]
      %v4603 = vld [vmem:[%s4587 + $0x3c] sm:$0xf]
      %v4604 = vld [vmem:[%s4587 + $0x40] sm:$0xf]
      %v4605 = vld [vmem:[%s4587 + $0x44] sm:$0xf]
      %v4606 = vld [vmem:[%s4587 + $0x48] sm:$0xf]
      %v4607 = vld [vmem:[%s4587 + $0x4c] sm:$0xf]
      %v4608 = vld [vmem:[%s4587 + $0x50] sm:$0xf]
      %v4609 = vld [vmem:[%s4587 + $0x54] sm:$0xf]
      %v4610 = vld [vmem:[%s4587 + $0x58] sm:$0xf]
      %v4611 = vld [vmem:[%s4587 + $0x5c] sm:$0xf]
      %v4612 = vld [vmem:[%s4587 + $0x60] sm:$0xf]
      %v4613 = vld [vmem:[%s4587 + $0x64] sm:$0xf]
      %v4614 = vld [vmem:[%s4587 + $0x68] sm:$0xf]
      %v4615 = vld [vmem:[%s4587 + $0x6c] sm:$0xf]
      %v4616 = vld [vmem:[%s4587 + $0x70] sm:$0xf]
      %v4617 = vld [vmem:[%s4587 + $0x74] sm:$0xf]
      %v4618 = vld [vmem:[%s4587 + $0x78] sm:$0xf]
      %v4619 = vld [vmem:[%s4587 + $0x7c] sm:$0xf]
      %v4620 = vld [vmem:[%s2 + $0xf] sm:$0x1]
      %v4621 = vlaneseq
      %v4622 = vshrl.u32 %v4621, 7
      %v4623 = vsub.s32 0, %v4622
      %v4624 = vrot.slane %v4620, %v4623
      %v4657 = vunpack.c.l.b16 %v4588
      %v4658 = vunpack.c.l.b16 %v4589
      %v4659 = vunpack.c.l.b16 %v4590
      %v4660 = vunpack.c.l.b16 %v4591
      %v4661 = vunpack.c.l.b16 %v4592
      %v4662 = vunpack.c.l.b16 %v4593
      %v4663 = vunpack.c.l.b16 %v4594
      %v4664 = vunpack.c.l.b16 %v4595
      %v4665 = vunpack.c.l.b16 %v4596
      %v4666 = vunpack.c.l.b16 %v4597
      %v4667 = vunpack.c.l.b16 %v4598
      %v4668 = vunpack.c.l.b16 %v4599
      %v4669 = vunpack.c.l.b16 %v4600
      %v4670 = vunpack.c.l.b16 %v4601
      %v4671 = vunpack.c.l.b16 %v4602
      %v4672 = vunpack.c.l.b16 %v4603
      %v4673 = vunpack.c.l.b16 %v4604
      %v4674 = vunpack.c.l.b16 %v4605
      %v4675 = vunpack.c.l.b16 %v4606
      %v4676 = vunpack.c.l.b16 %v4607
      %v4677 = vunpack.c.l.b16 %v4608
      %v4678 = vunpack.c.l.b16 %v4609
      %v4679 = vunpack.c.l.b16 %v4610
      %v4680 = vunpack.c.l.b16 %v4611
      %v4681 = vunpack.c.l.b16 %v4612
      %v4682 = vunpack.c.l.b16 %v4613
      %v4683 = vunpack.c.l.b16 %v4614
      %v4684 = vunpack.c.l.b16 %v4615
      %v4685 = vunpack.c.l.b16 %v4616
      %v4686 = vunpack.c.l.b16 %v4617
      %v4687 = vunpack.c.l.b16 %v4618
      %v4688 = vunpack.c.l.b16 %v4619
      %v4689 = vpack.c.b16 %v4658, %v4657
      %v4690 = vpack.c.b16 %v4660, %v4659
      %v4691 = vpack.c.b16 %v4662, %v4661
      %v4692 = vpack.c.b16 %v4664, %v4663
      %v4693 = vpack.c.b16 %v4666, %v4665
      %v4694 = vpack.c.b16 %v4668, %v4667
      %v4695 = vpack.c.b16 %v4670, %v4669
      %v4696 = vpack.c.b16 %v4672, %v4671
      %v4697 = vpack.c.b16 %v4674, %v4673
      %v4698 = vpack.c.b16 %v4676, %v4675
      %v4699 = vpack.c.b16 %v4678, %v4677
      %v4700 = vpack.c.b16 %v4680, %v4679
      %v4701 = vpack.c.b16 %v4682, %v4681
      %v4702 = vpack.c.b16 %v4684, %v4683
      %v4703 = vpack.c.b16 %v4686, %v4685
      %v4704 = vpack.c.b16 %v4688, %v4687
      %4721 = vmatprep.subr.bf16.mxu0 0
      %4722 = vmatpush1.bf16.msra.mxu0 %v4696
      %4723 = vmatprep.subr.bf16.mxu0 0
      %4724 = vmatpush1.bf16.msra.mxu0 %v4695
      %4725 = vmatprep.subr.bf16.mxu0 0
      %4726 = vmatpush1.bf16.msra.mxu0 %v4694
      %4727 = vmatprep.subr.bf16.mxu0 0
      %4728 = vmatpush1.bf16.msra.mxu0 %v4693
      %4729 = vmatprep.subr.bf16.mxu0 0
      %4730 = vmatpush1.bf16.msra.mxu0 %v4692
      %4731 = vmatprep.subr.bf16.mxu0 0
      %4732 = vmatpush1.bf16.msra.mxu0 %v4691
      %4733 = vmatprep.subr.bf16.mxu0 0
      %4734 = vmatpush1.bf16.msra.mxu0 %v4690
      %4735 = vmatprep.subr.bf16.mxu0 0
      %4736 = vmatpush1.bf16.msra.mxu0 %v4689
      %4737 = vmatprep.subr.bf16.mxu0 0
      %4738 = vmatpush2.bf16.msra.mxu0 %v4704
      %4739 = vmatprep.subr.bf16.mxu0 0
      %4740 = vmatpush2.bf16.msra.mxu0 %v4703
      %4741 = vmatprep.subr.bf16.mxu0 0
      %4742 = vmatpush2.bf16.msra.mxu0 %v4702
      %4743 = vmatprep.subr.bf16.mxu0 0
      %4744 = vmatpush2.bf16.msra.mxu0 %v4701
      %4745 = vmatprep.subr.bf16.mxu0 0
      %4746 = vmatpush2.bf16.msra.mxu0 %v4700
      %4747 = vmatprep.subr.bf16.mxu0 0
      %4748 = vmatpush2.bf16.msra.mxu0 %v4699
      %4749 = vmatprep.subr.bf16.mxu0 0
      %4750 = vmatpush2.bf16.msra.mxu0 %v4698
      %4751 = vmatprep.subr.bf16.mxu0 0
      %4752 = vmatpush2.bf16.msra.mxu0 %v4697
      %4753 = vmatprep.mubr.bf16.mxu0 %v4586
      %4754 = vmatmul.mubr.bf16.gmra.mxu0 %v4585
      %v4755 = vpop.f32.mrf.mxu0
      %v4756 = vadd.f32 %v4624, %v4755
      %v4757 = vpop.f32.mrf.mxu0
      %v4758 = vpop.f32.mrf.mxu0
      %v4759 = vpop.f32.mrf.mxu0
      %4760 = vdwg.mxu0
      %v4761 = vadd.f32 %v4475, %v4756
      %v4762 = vld [vmem:[%s2 + $0x12] sm:$0x1]
      %v4763 = vld [vmem:[%s2 + $0x13] sm:$0x1]
      %v4764 = vsel %vm475, %v4761, 0.0
      %4765 = vadd.xlane.f32.xlu0 %v4764
      %v4766 = vpop.xlane.xlu0 %4765
      %v4767 = vmul.f32 %v4766, %v2281
      %v4768 = vsub.f32 %v4761, %v4767
      %v4769 = vmul.f32 %v4768, %v4768
      %v4770 = vsel %vm475, %v4769, 0.0
      %4771 = vadd.xlane.f32.xlu0 %v4770
      %v4772 = vpop.xlane.xlu0 %4771
      %v4773 = vmul.f32 %v4772, %v2281
      %v4774 = vadd.f32 %v4773, 1e-05
      %v4775 = vrsqrt.pop %v4774
      %v4776 = vmul.f32 %v4768, %v4775
      %v4777 = vlaneseq
      %v4778 = vshrl.u32 %v4777, 7
      %v4779 = vsub.s32 0, %v4778
      %v4780 = vrot.slane %v4762, %v4779
      %v4781 = vmul.f32 %v4776, %v4780
      %v4782 = vlaneseq
      %v4783 = vshrl.u32 %v4782, 7
      %v4784 = vsub.s32 0, %v4783
      %v4785 = vrot.slane %v4763, %v4784
      %v4786 = vadd.f32 %v4781, %v4785
      %v4787 = vld [vmem:[%s9] sm:$0xff]
      %v4788 = vld [vmem:[%s9 + $0x8] sm:$0xff]
      %v4789 = vld [vmem:[%s9 + $0x10] sm:$0xff]
      %v4790 = vld [vmem:[%s9 + $0x18] sm:$0xff]
      %v4791 = vld [vmem:[%s9 + $0x20] sm:$0xff]
      %v4792 = vld [vmem:[%s9 + $0x28] sm:$0xff]
      %v4793 = vld [vmem:[%s9 + $0x30] sm:$0xff]
      %v4794 = vld [vmem:[%s9 + $0x38] sm:$0xff]
      %v4795 = vld [vmem:[%s2 + $0x14] sm:$0x1]
      %v4797 = vrot.slane %v4786, 7
      %v4798 = vsel %vm475, %v4797, 0
      %4800 = vmatprep.subr.mxu0 0.0
      %4801 = vmatpush1.msra.mxu0 0.0
      %4802 = vmatprep.subr.mxu0 0.0
      %4803 = vmatpush1.msra.mxu0 0.0
      %4804 = vmatprep.subr.mxu0 0.0
      %4805 = vmatpush1.msra.mxu0 0.0
      %4806 = vmatprep.subr.mxu0 0.0
      %4807 = vmatpush1.msra.mxu0 0.0
      %4808 = vmatprep.subr.mxu0 0.0
      %4809 = vmatpush1.msra.mxu0 0.0
      %4810 = vmatprep.subr.mxu0 0.0
      %4811 = vmatpush1.msra.mxu0 0.0
      %4812 = vmatprep.subr.mxu0 0.0
      %4813 = vmatpush1.msra.mxu0 0.0
      %4814 = vmatprep.subr.mxu0 0.0
      %4815 = vmatpush1.msra.mxu0 0.0
      %4816 = vmatprep.subr.mxu0 0.0
      %4817 = vmatpush1.msra.mxu0 %v4794
      %4818 = vmatprep.subr.mxu0 0.0
      %4819 = vmatpush1.msra.mxu0 %v4793
      %4820 = vmatprep.subr.mxu0 0.0
      %4821 = vmatpush1.msra.mxu0 %v4792
      %4822 = vmatprep.subr.mxu0 0.0
      %4823 = vmatpush1.msra.mxu0 %v4791
      %4824 = vmatprep.subr.mxu0 0.0
      %4825 = vmatpush1.msra.mxu0 %v4790
      %4826 = vmatprep.subr.mxu0 0.0
      %4827 = vmatpush1.msra.mxu0 %v4789
      %4828 = vmatprep.subr.mxu0 0.0
      %4829 = vmatpush1.msra.mxu0 %v4788
      %4830 = vmatprep.subr.mxu0 0.0
      %4831 = vmatpush1.msra.mxu0 %v4787
      %4832 = vmatprep.subr.mxu0 0.0
      %4833 = vmatpush2.msra.mxu0 0.0
      %4834 = vmatprep.subr.mxu0 0.0
      %4835 = vmatpush2.msra.mxu0 0.0
      %4836 = vmatprep.subr.mxu0 0.0
      %4837 = vmatpush2.msra.mxu0 0.0
      %4838 = vmatprep.subr.mxu0 0.0
      %4839 = vmatpush2.msra.mxu0 0.0
      %4840 = vmatprep.subr.mxu0 0.0
      %4841 = vmatpush2.msra.mxu0 0.0
      %4842 = vmatprep.subr.mxu0 0.0
      %4843 = vmatpush2.msra.mxu0 0.0
      %4844 = vmatprep.subr.mxu0 0.0
      %4845 = vmatpush2.msra.mxu0 0.0
      %4846 = vmatprep.subr.mxu0 0.0
      %4847 = vmatpush2.msra.mxu0 0.0
      %4848 = vmatprep.subr.mxu0 0.0
      %4849 = vmatpush2.msra.mxu0 0.0
      %4850 = vmatprep.subr.mxu0 0.0
      %4851 = vmatpush2.msra.mxu0 0.0
      %4852 = vmatprep.subr.mxu0 0.0
      %4853 = vmatpush2.msra.mxu0 0.0
      %4854 = vmatprep.subr.mxu0 0.0
      %4855 = vmatpush2.msra.mxu0 0.0
      %4856 = vmatprep.subr.mxu0 0.0
      %4857 = vmatpush2.msra.mxu0 0.0
      %4858 = vmatprep.subr.mxu0 0.0
      %4859 = vmatpush2.msra.mxu0 0.0
      %4860 = vmatprep.subr.mxu0 0.0
      %4861 = vmatpush2.msra.mxu0 0.0
      %4862 = vmatprep.subr.mxu0 0.0
      %4863 = vmatpush2.msra.mxu0 0.0
      %4864 = vmatprep.mubr.f32.mxu0 0.0
      %4865 = vmatmul.mubr.f32.gmra.mxu0 %v4798
      %v4866 = vpop.f32.mrf.mxu0
      %v4867 = vadd.f32 %v4795, %v4866
      %v4868 = vpop.f32.mrf.mxu0
      %4869 = vdwg.mxu0
      %v4870 = vmax.f32 %v4867, 0.0
      %v4871 = vld [vmem:[%s2 + $0x15] sm:$0x1]
      %v4872 = vmul.f32 %v4870, %v4871
      %vm4873 = vcmask 516096
      %v4874 = vsel %vm4873, %v4872, 0.0
      %4875 = vadd.xlane.f32.xlu0 %v4874
      %v4876 = vpop.xlane.xlu0 %4875
      %vm4877 = vcmask 0
      %4878 = vst.msk [vmem:[%s352] sm:$0x1] %vm4877, %v4876
      %p4879 = scmp.lt.s32.totalorder %s21, 1
      %s4880 = scalar_select %p4879, %s21, 1
      %s4881 = scalar_lea.vmem %s10, %s4880
      // Predicated region
      $region61: #{time_series_transformer.1} parent=59 // pred_check
        %p4882 = pneg %p254
      $region62: #{time_series_transformer.1} parent=59 // pred_check_branch
        %4884 = sbr.rel (%p4882) target = $region64
      $region63: #{time_series_transformer.1} parent=59 // pred_region
        _
      $region64: #{time_series_transformer.1} parent=59 // pred_fallthru
        _
    $region60: #{time_series_transformer.1} parent=5 // pred_fallthru
      _
    %p4885 = scmp.le.s32.totalorder 2, %s16
    // Predicated region
    $region65: #{time_series_transformer.1} parent=5 // pred_check
      %p4886 = pneg %p4885
    $region66: #{time_series_transformer.1} parent=5 // pred_check_branch
      %4888 = sbr.rel (%p4886) target = $region68
    $region67: #{time_series_transformer.1} parent=5 // pred_region
      %s4889 = ssub.s32 %s16, 2
      // Predicated region
      $region69: #{time_series_transformer.1} parent=67 // pred_check
        %p4890 = pneg %p260
      $region70: #{time_series_transformer.1} parent=67 // pred_check_branch
        %4892 = sbr.rel (%p4890) target = $region72
      $region71: #{time_series_transformer.1} parent=67 // pred_region
        %p4893 = scmp.lt.s32.totalorder %s22, 1
        %s4894 = scalar_select %p4893, %s22, 1
        %s4895 = scalar_lea.vmem %s10, %s4894
      $region72: #{time_series_transformer.1} parent=67 // pred_fallthru
        _
    $region68: #{time_series_transformer.1} parent=5 // pred_fallthru
      _
  $region6: #{time_series_transformer.1} parent=0 // loop_footer
    %s20 = sadd.s32 1, %s16
  $region7: #{time_series_transformer.1} parent=0 // loop_footer_branch
    %15 = sbr.rel target = $region3
  $region8: #{time_series_transformer.1} parent=0 // loop_exit
    _

</llo_original>
